<compile_context>
chip_gen: v6e
topology: v6e:2x2x1
jax: 0.10.0
libtpu: 0.0.40
codegen_flags: <defaults>
</compile_context>

<pallas_src>
import functools

import jax
import jax.numpy as jnp
from jax.experimental import pallas as pl
from jax.experimental.pallas import tpu as pltpu


# ------------------------------ fused kernel --------------------------------

def _up_fused_kernel(
    x1_ref, x2_ref,
    wup_e_ref, wup_o_ref, bup_ref, p0_ref, p1_ref,
    b1x2_ref, b1x1_ref, bias1_ref,
    b2_ref, bias2_ref,
    g_ref, s_ref,
    gamma1_ref, beta1_ref, gamma2_ref, beta2_ref,
    out_ref,
    x2p_ref, x1p_ref, a1p_ref,
    *, n, h1, w1, c1, h2, w2, c2, out_ch, py0, eps,
):
    f32 = jnp.float32
    wN = w2 * out_ch

    # ---- zero the padded row buffers (scratch memory is uninitialized) -----
    x2p_ref[...] = jnp.zeros((n, h2 + 2, w2 * c2), f32)
    x1p_ref[...] = jnp.zeros((n, h2 + 2, 2 * w1 * c1), f32)
    a1p_ref[...] = jnp.zeros((n, h2 + 2, wN), f32)

    # ---- stage x2 into its vertically padded buffer -------------------------
    for b in range(n):
        x2p_ref[b, 1:1 + h2, :] = x2_ref[b]

    # ---- ConvTranspose2d(c1, c1, 2, stride=2) -------------------------------
    # Row-wise matmuls produce even/odd output rows; P0/P1 interleave them.
    wup_e = wup_e_ref[...]
    wup_o = wup_o_ref[...]
    p0 = p0_ref[...]
    p1 = p1_ref[...]
    bup = bup_ref[...]
    for b in range(n):
        xb = x1_ref[b]                                           # (h1, w1*c1)
        ye = jnp.dot(xb, wup_e, preferred_element_type=f32)      # rows 2i
        yo = jnp.dot(xb, wup_o, preferred_element_type=f32)      # rows 2i+1
        up = (jnp.dot(p0, ye, preferred_element_type=f32)
              + jnp.dot(p1, yo, preferred_element_type=f32) + bup)
        # F.pad vertical offset (py0) + 1-row conv halo.
        x1p_ref[b, 1 + py0:1 + py0 + 2 * h1, :] = up

    # ---- Conv1 (3x3, pad=1) on the implicit concat [x2, x1_up] --------------
    bias1 = bias1_ref[...]
    z1 = []
    for b in range(n):
        acc = jnp.zeros((h2, wN), f32)
        for ky in range(3):
            acc = acc + jnp.dot(x2p_ref[b, ky:ky + h2, :], b1x2_ref[ky],
                                preferred_element_type=f32)
            acc = acc + jnp.dot(x1p_ref[b, ky:ky + h2, :], b1x1_ref[ky],
                                preferred_element_type=f32)
        z1.append(acc + bias1)

    # ---- BatchNorm1 (training-mode batch stats, two-pass var) + ReLU --------
    g = g_ref[...]          # (w2*out_ch, out_ch): sums lanes sharing a channel
    s = s_ref[...]          # (out_ch, w2*out_ch): broadcast channel -> lanes
    m_count = float(n * h2 * w2)

    col_sum = jnp.zeros((1, wN), f32)
    for b in range(n):
        col_sum = col_sum + jnp.sum(z1[b], axis=0, keepdims=True)
    mean1 = jnp.dot(col_sum, g, preferred_element_type=f32) * (1.0 / m_count)
    mean1_l = jnp.dot(mean1, s, preferred_element_type=f32)
    var_col = jnp.zeros((1, wN), f32)
    for b in range(n):
        var_col = var_col + jnp.sum(jnp.square(z1[b] - mean1_l), axis=0,
                                    keepdims=True)
    var1 = jnp.dot(var_col, g, preferred_element_type=f32) * (1.0 / m_count)
    scale1 = gamma1_ref[...] * jax.lax.rsqrt(var1 + eps)
    shift1 = beta1_ref[...] - mean1 * scale1
    scale1_l = jnp.dot(scale1, s, preferred_element_type=f32)
    shift1_l = jnp.dot(shift1, s, preferred_element_type=f32)
    for b in range(n):
        a1 = jnp.maximum(z1[b] * scale1_l + shift1_l, 0.0)
        a1p_ref[b, 1:1 + h2, :] = a1

    # ---- Conv2 (3x3, pad=1) --------------------------------------------------
    bias2 = bias2_ref[...]
    z2 = []
    for b in range(n):
        acc = jnp.zeros((h2, wN), f32)
        for ky in range(3):
            acc = acc + jnp.dot(a1p_ref[b, ky:ky + h2, :], b2_ref[ky],
                                preferred_element_type=f32)
        z2.append(acc + bias2)

    # ---- BatchNorm2 (no ReLU) -> output --------------------------------------
    col_sum2 = jnp.zeros((1, wN), f32)
    for b in range(n):
        col_sum2 = col_sum2 + jnp.sum(z2[b], axis=0, keepdims=True)
    mean2 = jnp.dot(col_sum2, g, preferred_element_type=f32) * (1.0 / m_count)
    mean2_l = jnp.dot(mean2, s, preferred_element_type=f32)
    var_col2 = jnp.zeros((1, wN), f32)
    for b in range(n):
        var_col2 = var_col2 + jnp.sum(jnp.square(z2[b] - mean2_l), axis=0,
                                      keepdims=True)
    var2 = jnp.dot(var_col2, g, preferred_element_type=f32) * (1.0 / m_count)
    scale2 = gamma2_ref[...] * jax.lax.rsqrt(var2 + eps)
    shift2 = beta2_ref[...] - mean2 * scale2
    scale2_l = jnp.dot(scale2, s, preferred_element_type=f32)
    shift2_l = jnp.dot(shift2, s, preferred_element_type=f32)
    for b in range(n):
        out_ref[b * h2:(b + 1) * h2, :] = z2[b] * scale2_l + shift2_l


# -------------------------- wrapper / weight prep ----------------------------

def _conv_band(w_oikk, ky, w_in, w_out, off):
    """Band matrix (w_in*Cin, w_out*Cout) for vertical tap `ky` of a 3x3 conv.

    Input lane (p, ci) sits at horizontal position p+off of the zero-padded
    conv frame; output lane (j, co) reads frame positions j+kx-1, kx=0..2.
    """
    cout, cin = w_oikk.shape[0], w_oikk.shape[1]
    e = jnp.stack([jnp.eye(w_in, w_out, k=off - kx + 1, dtype=jnp.float32)
                   for kx in range(3)])                       # (3, w_in, w_out)
    t = jnp.einsum('xpj,oix->pijo', e, w_oikk[:, :, ky, :].astype(jnp.float32))
    return t.reshape(w_in * cin, w_out * cout)


def _deconv_row_mat(w_up, di, w1, c1):
    """(w1*c1, 2*w1*c1) matrix producing upsampled rows of parity `di`."""
    jj = jnp.arange(w1)
    big_j = jnp.arange(2 * w1)
    dd = jnp.arange(2)
    d_sel = (big_j[None, None, :] == 2 * jj[None, :, None] + dd[:, None, None]
             ).astype(jnp.float32)                            # (2, w1, 2*w1)
    t = jnp.einsum('djJ,icd->jiJc', d_sel, w_up[:, :, di, :].astype(jnp.float32))
    return t.reshape(w1 * c1, 2 * w1 * c1)


def _parity_perm(h1, parity):
    r = jnp.arange(2 * h1)
    i = jnp.arange(h1)
    return (r[:, None] == 2 * i[None, :] + parity).astype(jnp.float32)


def up_forward(params, x1_nchw, x2_nchw, eps=1e-5):
    n, c1, h1, w1 = x1_nchw.shape
    n2, c2, h2, w2 = x2_nchw.shape
    assert n == n2
    out_ch, in_ch = params["conv1_w"].shape[:2]
    assert in_ch == c1 + c2

    diff_y = h2 - 2 * h1
    diff_x = w2 - 2 * w1
    py0 = diff_y // 2
    px0 = diff_x // 2

    # Boundary-only layout prep (tiny tensors, one pass each).
    x1_rows = jnp.transpose(x1_nchw, (0, 2, 3, 1)).reshape(n, h1, w1 * c1)
    x2_rows = jnp.transpose(x2_nchw, (0, 2, 3, 1)).reshape(n, h2, w2 * c2)

    # Weight-derived matmul operands (small, built once per call).
    wup_e = _deconv_row_mat(params["up_w"], 0, w1, c1)
    wup_o = _deconv_row_mat(params["up_w"], 1, w1, c1)
    bup = jnp.tile(params["up_b"], 2 * w1)[None, :]
    p0 = _parity_perm(h1, 0)
    p1 = _parity_perm(h1, 1)

    w1c = params["conv1_w"].astype(jnp.float32)
    b1x2 = jnp.stack([_conv_band(w1c[:, :c2], ky, w2, w2, 0) for ky in range(3)])
    b1x1 = jnp.stack([_conv_band(w1c[:, c2:], ky, 2 * w1, w2, px0)
                      for ky in range(3)])
    bias1 = jnp.tile(params["conv1_b"], w2)[None, :]

    w2c = params["conv2_w"].astype(jnp.float32)
    b2 = jnp.stack([_conv_band(w2c, ky, w2, w2, 0) for ky in range(3)])
    bias2 = jnp.tile(params["conv2_b"], w2)[None, :]

    g = jnp.tile(jnp.eye(out_ch, dtype=jnp.float32), (w2, 1))   # (w2*oc, oc)
    s = jnp.transpose(g)                                        # (oc, w2*oc)

    gamma1 = params["bn1_gamma"][None, :]
    beta1 = params["bn1_beta"][None, :]
    gamma2 = params["bn2_gamma"][None, :]
    beta2 = params["bn2_beta"][None, :]

    kernel = functools.partial(
        _up_fused_kernel, n=n, h1=h1, w1=w1, c1=c1, h2=h2, w2=w2, c2=c2,
        out_ch=out_ch, py0=py0, eps=eps)

    out_rows = pl.pallas_call(
        kernel,
        out_shape=jax.ShapeDtypeStruct((n * h2, w2 * out_ch), jnp.float32),
        scratch_shapes=[
            pltpu.VMEM((n, h2 + 2, w2 * c2), jnp.float32),       # padded x2
            pltpu.VMEM((n, h2 + 2, 2 * w1 * c1), jnp.float32),   # padded x1_up
            pltpu.VMEM((n, h2 + 2, w2 * out_ch), jnp.float32),   # padded a1
        ],
    )(x1_rows, x2_rows, wup_e, wup_o, bup, p0, p1,
      b1x2, b1x1, bias1, b2, bias2, g, s, gamma1, beta1, gamma2, beta2)

    out = out_rows.reshape(n, h2, w2, out_ch)
    return jnp.transpose(out, (0, 3, 1, 2))                     # back to NCHW


# ------------------------------ params / reference ---------------------------

def init_params(key, in_ch, out_ch):
    c_half = in_ch // 2
    ks = jax.random.split(key, 6)
    p = {}
    # ConvTranspose2d(in_ch//2, in_ch//2, 2, stride=2): weight (Cin, Cout, 2, 2)
    p["up_w"] = 0.1 * jax.random.normal(ks[0], (c_half, c_half, 2, 2), jnp.float32)
    p["up_b"] = 0.05 * jax.random.normal(ks[1], (c_half,), jnp.float32)
    # Conv2d(in_ch, out_ch, 3, padding=1)
    p["conv1_w"] = 0.1 * jax.random.normal(ks[2], (out_ch, in_ch, 3, 3), jnp.float32)
    p["conv1_b"] = 0.05 * jax.random.normal(ks[3], (out_ch,), jnp.float32)
    # Conv2d(out_ch, out_ch, 3, padding=1)
    p["conv2_w"] = 0.1 * jax.random.normal(ks[4], (out_ch, out_ch, 3, 3), jnp.float32)
    p["conv2_b"] = 0.05 * jax.random.normal(ks[5], (out_ch,), jnp.float32)
    # BatchNorm affine params (PyTorch init: gamma=1, beta=0)
    p["bn1_gamma"] = jnp.ones((out_ch,), jnp.float32)
    p["bn1_beta"] = jnp.zeros((out_ch,), jnp.float32)
    p["bn2_gamma"] = jnp.ones((out_ch,), jnp.float32)
    p["bn2_beta"] = jnp.zeros((out_ch,), jnp.float32)
    return p


def _up_reference(params, x1_nchw, x2_nchw, eps=1e-5):
    """Plain-JAX reference mirroring the PyTorch module (training-mode BN)."""
    n, c1, h1, w1 = x1_nchw.shape
    _, c2, h2, w2 = x2_nchw.shape
    x1 = jnp.transpose(x1_nchw, (0, 2, 3, 1))
    x2 = jnp.transpose(x2_nchw, (0, 2, 3, 1))
    t = jnp.einsum('bijc,cokl->bikjlo', x1, params["up_w"])
    up = t.reshape(n, 2 * h1, 2 * w1, c1) + params["up_b"]
    dy, dx = h2 - 2 * h1, w2 - 2 * w1
    up = jnp.pad(up, ((0, 0), (dy // 2, dy - dy // 2),
                      (dx // 2, dx - dx // 2), (0, 0)))
    cat = jnp.concatenate([x2, up], axis=-1)

    def conv3(x, w, b):
        nn_, hh, ww, _ = x.shape
        xp = jnp.pad(x, ((0, 0), (1, 1), (1, 1), (0, 0)))
        out = jnp.zeros((nn_, hh, ww, w.shape[0]), jnp.float32)
        for ky in range(3):
            for kx in range(3):
                out = out + jnp.einsum('nhwc,oc->nhwo',
                                       xp[:, ky:ky + hh, kx:kx + ww, :],
                                       w[:, :, ky, kx])
        return out + b

    def bn(x, gamma, beta, relu):
        m = jnp.mean(x, axis=(0, 1, 2))
        v = jnp.var(x, axis=(0, 1, 2))
        y = (x - m) * (gamma / jnp.sqrt(v + eps)) + beta
        return jnp.maximum(y, 0.0) if relu else y

    a1 = bn(conv3(cat, params["conv1_w"], params["conv1_b"]),
            params["bn1_gamma"], params["bn1_beta"], True)
    a2 = bn(conv3(a1, params["conv2_w"], params["conv2_b"]),
            params["bn2_gamma"], params["bn2_beta"], False)
    return jnp.transpose(a2, (0, 3, 1, 2))


if __name__ == "__main__":
    in_ch, out_ch = 8, 8                 # ConvTranspose operates on in_ch//2 = 4
    key = jax.random.PRNGKey(0)
    kp, k1, k2 = jax.random.split(key, 3)
    params = init_params(kp, in_ch, out_ch)

    # x1: coarse decoder feature (NCHW), x2: skip connection at 2x resolution.
    x1 = jax.random.normal(k1, (2, in_ch // 2, 8, 8), jnp.float32)
    x2 = jax.random.normal(k2, (2, in_ch // 2, 16, 16), jnp.float32)

    fwd = jax.jit(functools.partial(up_forward, params))
    out = fwd(x1, x2)
    jax.block_until_ready(out)

    assert out.shape == (2, out_ch, 16, 16), out.shape
    assert out.dtype == jnp.float32

    ref = _up_reference(params, x1, x2)
    err = float(jnp.max(jnp.abs(out - ref)))
    assert err < 2e-3, f"max abs err vs reference: {err}"

    print("KERNEL_OK")
</pallas_src>

<mosaic_0001>
module attributes {stable_mosaic.version = 11 : i64} {
  func.func @_up_fused_kernel(%arg0: memref<2x8x32xf32, #tpu.memory_space<vmem>>, %arg1: memref<2x16x64xf32, #tpu.memory_space<vmem>>, %arg2: memref<32x64xf32, #tpu.memory_space<vmem>>, %arg3: memref<32x64xf32, #tpu.memory_space<vmem>>, %arg4: memref<1x64xf32, #tpu.memory_space<vmem>>, %arg5: memref<16x8xf32, #tpu.memory_space<vmem>>, %arg6: memref<16x8xf32, #tpu.memory_space<vmem>>, %arg7: memref<3x64x128xf32, #tpu.memory_space<vmem>>, %arg8: memref<3x64x128xf32, #tpu.memory_space<vmem>>, %arg9: memref<1x128xf32, #tpu.memory_space<vmem>>, %arg10: memref<3x128x128xf32, #tpu.memory_space<vmem>>, %arg11: memref<1x128xf32, #tpu.memory_space<vmem>>, %arg12: memref<128x8xf32, #tpu.memory_space<vmem>>, %arg13: memref<8x128xf32, #tpu.memory_space<vmem>>, %arg14: memref<1x8xf32, #tpu.memory_space<vmem>>, %arg15: memref<1x8xf32, #tpu.memory_space<vmem>>, %arg16: memref<1x8xf32, #tpu.memory_space<vmem>>, %arg17: memref<1x8xf32, #tpu.memory_space<vmem>>, %arg18: memref<32x128xf32, #tpu.memory_space<vmem>>, %arg19: memref<2x18x64xf32, #tpu.memory_space<vmem>>, %arg20: memref<2x18x64xf32, #tpu.memory_space<vmem>>, %arg21: memref<2x18x128xf32, #tpu.memory_space<vmem>>) attributes {dimension_semantics = [], scalar_prefetch = 0 : i64, scratch_operands = 3 : i64, tpu.core_type = #tpu.core_type<tc>} {
    %cst = arith.constant 0.000000e+00 : f32
    %0 = vector.broadcast %cst : f32 to vector<2x18x64xf32>
    %c0 = arith.constant 0 : index
    %c0_0 = arith.constant 0 : index
    %c0_1 = arith.constant 0 : index
    %1 = vector.load %arg19[%c0, %c0_0, %c0_1] : memref<2x18x64xf32, #tpu.memory_space<vmem>>, vector<2x18x64xf32>
    tpu.vector_store %arg19[%c0, %c0_0, %c0_1], %0 {strides = array<i32>} : memref<2x18x64xf32, #tpu.memory_space<vmem>>, vector<2x18x64xf32>,
    %cst_2 = arith.constant 0.000000e+00 : f32
    %2 = vector.broadcast %cst_2 : f32 to vector<2x18x64xf32>
    %c0_3 = arith.constant 0 : index
    %c0_4 = arith.constant 0 : index
    %c0_5 = arith.constant 0 : index
    %3 = vector.load %arg20[%c0_3, %c0_4, %c0_5] : memref<2x18x64xf32, #tpu.memory_space<vmem>>, vector<2x18x64xf32>
    tpu.vector_store %arg20[%c0_3, %c0_4, %c0_5], %2 {strides = array<i32>} : memref<2x18x64xf32, #tpu.memory_space<vmem>>, vector<2x18x64xf32>,
    %cst_6 = arith.constant 0.000000e+00 : f32
    %4 = vector.broadcast %cst_6 : f32 to vector<2x18x128xf32>
    %c0_7 = arith.constant 0 : index
    %c0_8 = arith.constant 0 : index
    %c0_9 = arith.constant 0 : index
    %5 = vector.load %arg21[%c0_7, %c0_8, %c0_9] : memref<2x18x128xf32, #tpu.memory_space<vmem>>, vector<2x18x128xf32>
    tpu.vector_store %arg21[%c0_7, %c0_8, %c0_9], %4 {strides = array<i32>} : memref<2x18x128xf32, #tpu.memory_space<vmem>>, vector<2x18x128xf32>,
    %c0_10 = arith.constant 0 : index
    %c0_11 = arith.constant 0 : index
    %c0_12 = arith.constant 0 : index
    %6 = vector.load %arg1[%c0_10, %c0_11, %c0_12] : memref<2x16x64xf32, #tpu.memory_space<vmem>>, vector<1x16x64xf32>
    %7 = vector.shape_cast %6 : vector<1x16x64xf32> to vector<16x64xf32>
    %c0_13 = arith.constant 0 : index
    %c1 = arith.constant 1 : index
    %c0_14 = arith.constant 0 : index
    %8 = vector.load %arg19[%c0_13, %c1, %c0_14] : memref<2x18x64xf32, #tpu.memory_space<vmem>>, vector<1x16x64xf32>
    %9 = vector.shape_cast %8 : vector<1x16x64xf32> to vector<16x64xf32>
    %10 = vector.shape_cast %7 : vector<16x64xf32> to vector<1x16x64xf32>
    tpu.vector_store %arg19[%c0_13, %c1, %c0_14], %10 {strides = array<i32>} : memref<2x18x64xf32, #tpu.memory_space<vmem>>, vector<1x16x64xf32>,
    %c1_15 = arith.constant 1 : index
    %c0_16 = arith.constant 0 : index
    %c0_17 = arith.constant 0 : index
    %11 = vector.load %arg1[%c1_15, %c0_16, %c0_17] : memref<2x16x64xf32, #tpu.memory_space<vmem>>, vector<1x16x64xf32>
    %12 = vector.shape_cast %11 : vector<1x16x64xf32> to vector<16x64xf32>
    %c1_18 = arith.constant 1 : index
    %c1_19 = arith.constant 1 : index
    %c0_20 = arith.constant 0 : index
    %13 = vector.load %arg19[%c1_18, %c1_19, %c0_20] : memref<2x18x64xf32, #tpu.memory_space<vmem>>, vector<1x16x64xf32>
    %14 = vector.shape_cast %13 : vector<1x16x64xf32> to vector<16x64xf32>
    %15 = vector.shape_cast %12 : vector<16x64xf32> to vector<1x16x64xf32>
    tpu.vector_store %arg19[%c1_18, %c1_19, %c0_20], %15 {strides = array<i32>} : memref<2x18x64xf32, #tpu.memory_space<vmem>>, vector<1x16x64xf32>,
    %c0_21 = arith.constant 0 : index
    %c0_22 = arith.constant 0 : index
    %16 = vector.load %arg2[%c0_21, %c0_22] : memref<32x64xf32, #tpu.memory_space<vmem>>, vector<32x64xf32>
    %c0_23 = arith.constant 0 : index
    %c0_24 = arith.constant 0 : index
    %17 = vector.load %arg3[%c0_23, %c0_24] : memref<32x64xf32, #tpu.memory_space<vmem>>, vector<32x64xf32>
    %c0_25 = arith.constant 0 : index
    %c0_26 = arith.constant 0 : index
    %18 = vector.load %arg5[%c0_25, %c0_26] : memref<16x8xf32, #tpu.memory_space<vmem>>, vector<16x8xf32>
    %c0_27 = arith.constant 0 : index
    %c0_28 = arith.constant 0 : index
    %19 = vector.load %arg6[%c0_27, %c0_28] : memref<16x8xf32, #tpu.memory_space<vmem>>, vector<16x8xf32>
    %c0_29 = arith.constant 0 : index
    %c0_30 = arith.constant 0 : index
    %20 = vector.load %arg4[%c0_29, %c0_30] : memref<1x64xf32, #tpu.memory_space<vmem>>, vector<1x64xf32>
    %c0_31 = arith.constant 0 : index
    %c0_32 = arith.constant 0 : index
    %c0_33 = arith.constant 0 : index
    %21 = vector.load %arg0[%c0_31, %c0_32, %c0_33] : memref<2x8x32xf32, #tpu.memory_space<vmem>>, vector<1x8x32xf32>
    %22 = vector.shape_cast %21 : vector<1x8x32xf32> to vector<8x32xf32>
    %cst_34 = arith.constant dense<0.000000e+00> : vector<8x64xf32>
    %23 = tpu.matmul %22, %16, %cst_34 {dimension_numbers = #tpu.dot_dimension_numbers<[1], [0], [0], [1], [0, 0, 1, 1], [], []>} : vector<8x32xf32>, vector<32x64xf32>, vector<8x64xf32> -> vector<8x64xf32>
    %cst_35 = arith.constant dense<0.000000e+00> : vector<8x64xf32>
    %24 = tpu.matmul %22, %17, %cst_35 {dimension_numbers = #tpu.dot_dimension_numbers<[1], [0], [0], [1], [0, 0, 1, 1], [], []>} : vector<8x32xf32>, vector<32x64xf32>, vector<8x64xf32> -> vector<8x64xf32>
    %cst_36 = arith.constant dense<0.000000e+00> : vector<16x64xf32>
    %25 = tpu.matmul %18, %23, %cst_36 {dimension_numbers = #tpu.dot_dimension_numbers<[1], [0], [0], [1], [0, 0, 1, 1], [], []>} : vector<16x8xf32>, vector<8x64xf32>, vector<16x64xf32> -> vector<16x64xf32>
    %cst_37 = arith.constant dense<0.000000e+00> : vector<16x64xf32>
    %26 = tpu.matmul %19, %24, %cst_37 {dimension_numbers = #tpu.dot_dimension_numbers<[1], [0], [0], [1], [0, 0, 1, 1], [], []>} : vector<16x8xf32>, vector<8x64xf32>, vector<16x64xf32> -> vector<16x64xf32>
    %27 = arith.addf %25, %26 : vector<16x64xf32>
    %28 = vector.broadcast %20 : vector<1x64xf32> to vector<16x64xf32>
    %29 = arith.addf %27, %28 : vector<16x64xf32>
    %c0_38 = arith.constant 0 : index
    %c1_39 = arith.constant 1 : index
    %c0_40 = arith.constant 0 : index
    %30 = vector.load %arg20[%c0_38, %c1_39, %c0_40] : memref<2x18x64xf32, #tpu.memory_space<vmem>>, vector<1x16x64xf32>
    %31 = vector.shape_cast %30 : vector<1x16x64xf32> to vector<16x64xf32>
    %32 = vector.shape_cast %29 : vector<16x64xf32> to vector<1x16x64xf32>
    tpu.vector_store %arg20[%c0_38, %c1_39, %c0_40], %32 {strides = array<i32>} : memref<2x18x64xf32, #tpu.memory_space<vmem>>, vector<1x16x64xf32>,
    %c1_41 = arith.constant 1 : index
    %c0_42 = arith.constant 0 : index
    %c0_43 = arith.constant 0 : index
    %33 = vector.load %arg0[%c1_41, %c0_42, %c0_43] : memref<2x8x32xf32, #tpu.memory_space<vmem>>, vector<1x8x32xf32>
    %34 = vector.shape_cast %33 : vector<1x8x32xf32> to vector<8x32xf32>
    %cst_44 = arith.constant dense<0.000000e+00> : vector<8x64xf32>
    %35 = tpu.matmul %34, %16, %cst_44 {dimension_numbers = #tpu.dot_dimension_numbers<[1], [0], [0], [1], [0, 0, 1, 1], [], []>} : vector<8x32xf32>, vector<32x64xf32>, vector<8x64xf32> -> vector<8x64xf32>
    %cst_45 = arith.constant dense<0.000000e+00> : vector<8x64xf32>
    %36 = tpu.matmul %34, %17, %cst_45 {dimension_numbers = #tpu.dot_dimension_numbers<[1], [0], [0], [1], [0, 0, 1, 1], [], []>} : vector<8x32xf32>, vector<32x64xf32>, vector<8x64xf32> -> vector<8x64xf32>
    %cst_46 = arith.constant dense<0.000000e+00> : vector<16x64xf32>
    %37 = tpu.matmul %18, %35, %cst_46 {dimension_numbers = #tpu.dot_dimension_numbers<[1], [0], [0], [1], [0, 0, 1, 1], [], []>} : vector<16x8xf32>, vector<8x64xf32>, vector<16x64xf32> -> vector<16x64xf32>
    %cst_47 = arith.constant dense<0.000000e+00> : vector<16x64xf32>
    %38 = tpu.matmul %19, %36, %cst_47 {dimension_numbers = #tpu.dot_dimension_numbers<[1], [0], [0], [1], [0, 0, 1, 1], [], []>} : vector<16x8xf32>, vector<8x64xf32>, vector<16x64xf32> -> vector<16x64xf32>
    %39 = arith.addf %37, %38 : vector<16x64xf32>
    %40 = vector.broadcast %20 : vector<1x64xf32> to vector<16x64xf32>
    %41 = arith.addf %39, %40 : vector<16x64xf32>
    %c1_48 = arith.constant 1 : index
    %c1_49 = arith.constant 1 : index
    %c0_50 = arith.constant 0 : index
    %42 = vector.load %arg20[%c1_48, %c1_49, %c0_50] : memref<2x18x64xf32, #tpu.memory_space<vmem>>, vector<1x16x64xf32>
    %43 = vector.shape_cast %42 : vector<1x16x64xf32> to vector<16x64xf32>
    %44 = vector.shape_cast %41 : vector<16x64xf32> to vector<1x16x64xf32>
    tpu.vector_store %arg20[%c1_48, %c1_49, %c0_50], %44 {strides = array<i32>} : memref<2x18x64xf32, #tpu.memory_space<vmem>>, vector<1x16x64xf32>,
    %c0_51 = arith.constant 0 : index
    %c0_52 = arith.constant 0 : index
    %45 = vector.load %arg9[%c0_51, %c0_52] : memref<1x128xf32, #tpu.memory_space<vmem>>, vector<1x128xf32>
    %cst_53 = arith.constant 0.000000e+00 : f32
    %46 = vector.broadcast %cst_53 : f32 to vector<16x128xf32>
    %c0_54 = arith.constant 0 : index
    %c0_55 = arith.constant 0 : index
    %c0_56 = arith.constant 0 : index
    %47 = vector.load %arg19[%c0_54, %c0_55, %c0_56] : memref<2x18x64xf32, #tpu.memory_space<vmem>>, vector<1x16x64xf32>
    %48 = vector.shape_cast %47 : vector<1x16x64xf32> to vector<16x64xf32>
    %c0_57 = arith.constant 0 : index
    %c0_58 = arith.constant 0 : index
    %c0_59 = arith.constant 0 : index
    %49 = vector.load %arg7[%c0_57, %c0_58, %c0_59] : memref<3x64x128xf32, #tpu.memory_space<vmem>>, vector<1x64x128xf32>
    %50 = vector.shape_cast %49 : vector<1x64x128xf32> to vector<64x128xf32>
    %cst_60 = arith.constant dense<0.000000e+00> : vector<16x128xf32>
    %51 = tpu.matmul %48, %50, %cst_60 {dimension_numbers = #tpu.dot_dimension_numbers<[1], [0], [0], [1], [0, 0, 1, 1], [], []>} : vector<16x64xf32>, vector<64x128xf32>, vector<16x128xf32> -> vector<16x128xf32>
    %52 = arith.addf %46, %51 : vector<16x128xf32>
    %c0_61 = arith.constant 0 : index
    %c0_62 = arith.constant 0 : index
    %c0_63 = arith.constant 0 : index
    %53 = vector.load %arg20[%c0_61, %c0_62, %c0_63] : memref<2x18x64xf32, #tpu.memory_space<vmem>>, vector<1x16x64xf32>
    %54 = vector.shape_cast %53 : vector<1x16x64xf32> to vector<16x64xf32>
    %c0_64 = arith.constant 0 : index
    %c0_65 = arith.constant 0 : index
    %c0_66 = arith.constant 0 : index
    %55 = vector.load %arg8[%c0_64, %c0_65, %c0_66] : memref<3x64x128xf32, #tpu.memory_space<vmem>>, vector<1x64x128xf32>
    %56 = vector.shape_cast %55 : vector<1x64x128xf32> to vector<64x128xf32>
    %cst_67 = arith.constant dense<0.000000e+00> : vector<16x128xf32>
    %57 = tpu.matmul %54, %56, %cst_67 {dimension_numbers = #tpu.dot_dimension_numbers<[1], [0], [0], [1], [0, 0, 1, 1], [], []>} : vector<16x64xf32>, vector<64x128xf32>, vector<16x128xf32> -> vector<16x128xf32>
    %58 = arith.addf %52, %57 : vector<16x128xf32>
    %c0_68 = arith.constant 0 : index
    %c1_69 = arith.constant 1 : index
    %c0_70 = arith.constant 0 : index
    %59 = vector.load %arg19[%c0_68, %c1_69, %c0_70] : memref<2x18x64xf32, #tpu.memory_space<vmem>>, vector<1x16x64xf32>
    %60 = vector.shape_cast %59 : vector<1x16x64xf32> to vector<16x64xf32>
    %c1_71 = arith.constant 1 : index
    %c0_72 = arith.constant 0 : index
    %c0_73 = arith.constant 0 : index
    %61 = vector.load %arg7[%c1_71, %c0_72, %c0_73] : memref<3x64x128xf32, #tpu.memory_space<vmem>>, vector<1x64x128xf32>
    %62 = vector.shape_cast %61 : vector<1x64x128xf32> to vector<64x128xf32>
    %cst_74 = arith.constant dense<0.000000e+00> : vector<16x128xf32>
    %63 = tpu.matmul %60, %62, %cst_74 {dimension_numbers = #tpu.dot_dimension_numbers<[1], [0], [0], [1], [0, 0, 1, 1], [], []>} : vector<16x64xf32>, vector<64x128xf32>, vector<16x128xf32> -> vector<16x128xf32>
    %64 = arith.addf %58, %63 : vector<16x128xf32>
    %c0_75 = arith.constant 0 : index
    %c1_76 = arith.constant 1 : index
    %c0_77 = arith.constant 0 : index
    %65 = vector.load %arg20[%c0_75, %c1_76, %c0_77] : memref<2x18x64xf32, #tpu.memory_space<vmem>>, vector<1x16x64xf32>
    %66 = vector.shape_cast %65 : vector<1x16x64xf32> to vector<16x64xf32>
    %c1_78 = arith.constant 1 : index
    %c0_79 = arith.constant 0 : index
    %c0_80 = arith.constant 0 : index
    %67 = vector.load %arg8[%c1_78, %c0_79, %c0_80] : memref<3x64x128xf32, #tpu.memory_space<vmem>>, vector<1x64x128xf32>
    %68 = vector.shape_cast %67 : vector<1x64x128xf32> to vector<64x128xf32>
    %cst_81 = arith.constant dense<0.000000e+00> : vector<16x128xf32>
    %69 = tpu.matmul %66, %68, %cst_81 {dimension_numbers = #tpu.dot_dimension_numbers<[1], [0], [0], [1], [0, 0, 1, 1], [], []>} : vector<16x64xf32>, vector<64x128xf32>, vector<16x128xf32> -> vector<16x128xf32>
    %70 = arith.addf %64, %69 : vector<16x128xf32>
    %c0_82 = arith.constant 0 : index
    %c2 = arith.constant 2 : index
    %c0_83 = arith.constant 0 : index
    %71 = vector.load %arg19[%c0_82, %c2, %c0_83] : memref<2x18x64xf32, #tpu.memory_space<vmem>>, vector<1x16x64xf32>
    %72 = vector.shape_cast %71 : vector<1x16x64xf32> to vector<16x64xf32>
    %c2_84 = arith.constant 2 : index
    %c0_85 = arith.constant 0 : index
    %c0_86 = arith.constant 0 : index
    %73 = vector.load %arg7[%c2_84, %c0_85, %c0_86] : memref<3x64x128xf32, #tpu.memory_space<vmem>>, vector<1x64x128xf32>
    %74 = vector.shape_cast %73 : vector<1x64x128xf32> to vector<64x128xf32>
    %cst_87 = arith.constant dense<0.000000e+00> : vector<16x128xf32>
    %75 = tpu.matmul %72, %74, %cst_87 {dimension_numbers = #tpu.dot_dimension_numbers<[1], [0], [0], [1], [0, 0, 1, 1], [], []>} : vector<16x64xf32>, vector<64x128xf32>, vector<16x128xf32> -> vector<16x128xf32>
    %76 = arith.addf %70, %75 : vector<16x128xf32>
    %c0_88 = arith.constant 0 : index
    %c2_89 = arith.constant 2 : index
    %c0_90 = arith.constant 0 : index
    %77 = vector.load %arg20[%c0_88, %c2_89, %c0_90] : memref<2x18x64xf32, #tpu.memory_space<vmem>>, vector<1x16x64xf32>
    %78 = vector.shape_cast %77 : vector<1x16x64xf32> to vector<16x64xf32>
    %c2_91 = arith.constant 2 : index
    %c0_92 = arith.constant 0 : index
    %c0_93 = arith.constant 0 : index
    %79 = vector.load %arg8[%c2_91, %c0_92, %c0_93] : memref<3x64x128xf32, #tpu.memory_space<vmem>>, vector<1x64x128xf32>
    %80 = vector.shape_cast %79 : vector<1x64x128xf32> to vector<64x128xf32>
    %cst_94 = arith.constant dense<0.000000e+00> : vector<16x128xf32>
    %81 = tpu.matmul %78, %80, %cst_94 {dimension_numbers = #tpu.dot_dimension_numbers<[1], [0], [0], [1], [0, 0, 1, 1], [], []>} : vector<16x64xf32>, vector<64x128xf32>, vector<16x128xf32> -> vector<16x128xf32>
    %82 = arith.addf %76, %81 : vector<16x128xf32>
    %83 = vector.broadcast %45 : vector<1x128xf32> to vector<16x128xf32>
    %84 = arith.addf %82, %83 : vector<16x128xf32>
    %cst_95 = arith.constant 0.000000e+00 : f32
    %85 = vector.broadcast %cst_95 : f32 to vector<16x128xf32>
    %c1_96 = arith.constant 1 : index
    %c0_97 = arith.constant 0 : index
    %c0_98 = arith.constant 0 : index
    %86 = vector.load %arg19[%c1_96, %c0_97, %c0_98] : memref<2x18x64xf32, #tpu.memory_space<vmem>>, vector<1x16x64xf32>
    %87 = vector.shape_cast %86 : vector<1x16x64xf32> to vector<16x64xf32>
    %c0_99 = arith.constant 0 : index
    %c0_100 = arith.constant 0 : index
    %c0_101 = arith.constant 0 : index
    %88 = vector.load %arg7[%c0_99, %c0_100, %c0_101] : memref<3x64x128xf32, #tpu.memory_space<vmem>>, vector<1x64x128xf32>
    %89 = vector.shape_cast %88 : vector<1x64x128xf32> to vector<64x128xf32>
    %cst_102 = arith.constant dense<0.000000e+00> : vector<16x128xf32>
    %90 = tpu.matmul %87, %89, %cst_102 {dimension_numbers = #tpu.dot_dimension_numbers<[1], [0], [0], [1], [0, 0, 1, 1], [], []>} : vector<16x64xf32>, vector<64x128xf32>, vector<16x128xf32> -> vector<16x128xf32>
    %91 = arith.addf %85, %90 : vector<16x128xf32>
    %c1_103 = arith.constant 1 : index
    %c0_104 = arith.constant 0 : index
    %c0_105 = arith.constant 0 : index
    %92 = vector.load %arg20[%c1_103, %c0_104, %c0_105] : memref<2x18x64xf32, #tpu.memory_space<vmem>>, vector<1x16x64xf32>
    %93 = vector.shape_cast %92 : vector<1x16x64xf32> to vector<16x64xf32>
    %c0_106 = arith.constant 0 : index
    %c0_107 = arith.constant 0 : index
    %c0_108 = arith.constant 0 : index
    %94 = vector.load %arg8[%c0_106, %c0_107, %c0_108] : memref<3x64x128xf32, #tpu.memory_space<vmem>>, vector<1x64x128xf32>
    %95 = vector.shape_cast %94 : vector<1x64x128xf32> to vector<64x128xf32>
    %cst_109 = arith.constant dense<0.000000e+00> : vector<16x128xf32>
    %96 = tpu.matmul %93, %95, %cst_109 {dimension_numbers = #tpu.dot_dimension_numbers<[1], [0], [0], [1], [0, 0, 1, 1], [], []>} : vector<16x64xf32>, vector<64x128xf32>, vector<16x128xf32> -> vector<16x128xf32>
    %97 = arith.addf %91, %96 : vector<16x128xf32>
    %c1_110 = arith.constant 1 : index
    %c1_111 = arith.constant 1 : index
    %c0_112 = arith.constant 0 : index
    %98 = vector.load %arg19[%c1_110, %c1_111, %c0_112] : memref<2x18x64xf32, #tpu.memory_space<vmem>>, vector<1x16x64xf32>
    %99 = vector.shape_cast %98 : vector<1x16x64xf32> to vector<16x64xf32>
    %c1_113 = arith.constant 1 : index
    %c0_114 = arith.constant 0 : index
    %c0_115 = arith.constant 0 : index
    %100 = vector.load %arg7[%c1_113, %c0_114, %c0_115] : memref<3x64x128xf32, #tpu.memory_space<vmem>>, vector<1x64x128xf32>
    %101 = vector.shape_cast %100 : vector<1x64x128xf32> to vector<64x128xf32>
    %cst_116 = arith.constant dense<0.000000e+00> : vector<16x128xf32>
    %102 = tpu.matmul %99, %101, %cst_116 {dimension_numbers = #tpu.dot_dimension_numbers<[1], [0], [0], [1], [0, 0, 1, 1], [], []>} : vector<16x64xf32>, vector<64x128xf32>, vector<16x128xf32> -> vector<16x128xf32>
    %103 = arith.addf %97, %102 : vector<16x128xf32>
    %c1_117 = arith.constant 1 : index
    %c1_118 = arith.constant 1 : index
    %c0_119 = arith.constant 0 : index
    %104 = vector.load %arg20[%c1_117, %c1_118, %c0_119] : memref<2x18x64xf32, #tpu.memory_space<vmem>>, vector<1x16x64xf32>
    %105 = vector.shape_cast %104 : vector<1x16x64xf32> to vector<16x64xf32>
    %c1_120 = arith.constant 1 : index
    %c0_121 = arith.constant 0 : index
    %c0_122 = arith.constant 0 : index
    %106 = vector.load %arg8[%c1_120, %c0_121, %c0_122] : memref<3x64x128xf32, #tpu.memory_space<vmem>>, vector<1x64x128xf32>
    %107 = vector.shape_cast %106 : vector<1x64x128xf32> to vector<64x128xf32>
    %cst_123 = arith.constant dense<0.000000e+00> : vector<16x128xf32>
    %108 = tpu.matmul %105, %107, %cst_123 {dimension_numbers = #tpu.dot_dimension_numbers<[1], [0], [0], [1], [0, 0, 1, 1], [], []>} : vector<16x64xf32>, vector<64x128xf32>, vector<16x128xf32> -> vector<16x128xf32>
    %109 = arith.addf %103, %108 : vector<16x128xf32>
    %c1_124 = arith.constant 1 : index
    %c2_125 = arith.constant 2 : index
    %c0_126 = arith.constant 0 : index
    %110 = vector.load %arg19[%c1_124, %c2_125, %c0_126] : memref<2x18x64xf32, #tpu.memory_space<vmem>>, vector<1x16x64xf32>
    %111 = vector.shape_cast %110 : vector<1x16x64xf32> to vector<16x64xf32>
    %c2_127 = arith.constant 2 : index
    %c0_128 = arith.constant 0 : index
    %c0_129 = arith.constant 0 : index
    %112 = vector.load %arg7[%c2_127, %c0_128, %c0_129] : memref<3x64x128xf32, #tpu.memory_space<vmem>>, vector<1x64x128xf32>
    %113 = vector.shape_cast %112 : vector<1x64x128xf32> to vector<64x128xf32>
    %cst_130 = arith.constant dense<0.000000e+00> : vector<16x128xf32>
    %114 = tpu.matmul %111, %113, %cst_130 {dimension_numbers = #tpu.dot_dimension_numbers<[1], [0], [0], [1], [0, 0, 1, 1], [], []>} : vector<16x64xf32>, vector<64x128xf32>, vector<16x128xf32> -> vector<16x128xf32>
    %115 = arith.addf %109, %114 : vector<16x128xf32>
    %c1_131 = arith.constant 1 : index
    %c2_132 = arith.constant 2 : index
    %c0_133 = arith.constant 0 : index
    %116 = vector.load %arg20[%c1_131, %c2_132, %c0_133] : memref<2x18x64xf32, #tpu.memory_space<vmem>>, vector<1x16x64xf32>
    %117 = vector.shape_cast %116 : vector<1x16x64xf32> to vector<16x64xf32>
    %c2_134 = arith.constant 2 : index
    %c0_135 = arith.constant 0 : index
    %c0_136 = arith.constant 0 : index
    %118 = vector.load %arg8[%c2_134, %c0_135, %c0_136] : memref<3x64x128xf32, #tpu.memory_space<vmem>>, vector<1x64x128xf32>
    %119 = vector.shape_cast %118 : vector<1x64x128xf32> to vector<64x128xf32>
    %cst_137 = arith.constant dense<0.000000e+00> : vector<16x128xf32>
    %120 = tpu.matmul %117, %119, %cst_137 {dimension_numbers = #tpu.dot_dimension_numbers<[1], [0], [0], [1], [0, 0, 1, 1], [], []>} : vector<16x64xf32>, vector<64x128xf32>, vector<16x128xf32> -> vector<16x128xf32>
    %121 = arith.addf %115, %120 : vector<16x128xf32>
    %122 = vector.broadcast %45 : vector<1x128xf32> to vector<16x128xf32>
    %123 = arith.addf %121, %122 : vector<16x128xf32>
    %c0_138 = arith.constant 0 : index
    %c0_139 = arith.constant 0 : index
    %124 = vector.load %arg12[%c0_138, %c0_139] : memref<128x8xf32, #tpu.memory_space<vmem>>, vector<128x8xf32>
    %c0_140 = arith.constant 0 : index
    %c0_141 = arith.constant 0 : index
    %125 = vector.load %arg13[%c0_140, %c0_141] : memref<8x128xf32, #tpu.memory_space<vmem>>, vector<8x128xf32>
    %cst_142 = arith.constant 0.000000e+00 : f32
    %126 = vector.broadcast %cst_142 : f32 to vector<1x128xf32>
    %cst_143 = arith.constant dense<0.000000e+00> : vector<128xf32>
    %127 = vector.multi_reduction <add>, %84, %cst_143 [0] : vector<16x128xf32> to vector<128xf32>
    %128 = vector.shape_cast %127 : vector<128xf32> to vector<1x128xf32>
    %129 = arith.addf %126, %128 : vector<1x128xf32>
    %cst_144 = arith.constant dense<0.000000e+00> : vector<128xf32>
    %130 = vector.multi_reduction <add>, %123, %cst_144 [0] : vector<16x128xf32> to vector<128xf32>
    %131 = vector.shape_cast %130 : vector<128xf32> to vector<1x128xf32>
    %132 = arith.addf %129, %131 : vector<1x128xf32>
    %cst_145 = arith.constant dense<0.000000e+00> : vector<1x8xf32>
    %133 = tpu.matmul %132, %124, %cst_145 {dimension_numbers = #tpu.dot_dimension_numbers<[1], [0], [0], [1], [0, 0, 1, 1], [], []>} : vector<1x128xf32>, vector<128x8xf32>, vector<1x8xf32> -> vector<1x8xf32>
    %cst_146 = arith.constant 0.001953125 : f32
    %134 = vector.broadcast %cst_146 : f32 to vector<1x8xf32>
    %135 = arith.mulf %133, %134 : vector<1x8xf32>
    %cst_147 = arith.constant dense<0.000000e+00> : vector<1x128xf32>
    %136 = tpu.matmul %135, %125, %cst_147 {dimension_numbers = #tpu.dot_dimension_numbers<[1], [0], [0], [1], [0, 0, 1, 1], [], []>} : vector<1x8xf32>, vector<8x128xf32>, vector<1x128xf32> -> vector<1x128xf32>
    %cst_148 = arith.constant 0.000000e+00 : f32
    %137 = vector.broadcast %cst_148 : f32 to vector<1x128xf32>
    %138 = vector.broadcast %136 : vector<1x128xf32> to vector<16x128xf32>
    %139 = arith.subf %84, %138 : vector<16x128xf32>
    %140 = arith.mulf %139, %139 : vector<16x128xf32>
    %cst_149 = arith.constant dense<0.000000e+00> : vector<128xf32>
    %141 = vector.multi_reduction <add>, %140, %cst_149 [0] : vector<16x128xf32> to vector<128xf32>
    %142 = vector.shape_cast %141 : vector<128xf32> to vector<1x128xf32>
    %143 = arith.addf %137, %142 : vector<1x128xf32>
    %144 = vector.broadcast %136 : vector<1x128xf32> to vector<16x128xf32>
    %145 = arith.subf %123, %144 : vector<16x128xf32>
    %146 = arith.mulf %145, %145 : vector<16x128xf32>
    %cst_150 = arith.constant dense<0.000000e+00> : vector<128xf32>
    %147 = vector.multi_reduction <add>, %146, %cst_150 [0] : vector<16x128xf32> to vector<128xf32>
    %148 = vector.shape_cast %147 : vector<128xf32> to vector<1x128xf32>
    %149 = arith.addf %143, %148 : vector<1x128xf32>
    %cst_151 = arith.constant dense<0.000000e+00> : vector<1x8xf32>
    %150 = tpu.matmul %149, %124, %cst_151 {dimension_numbers = #tpu.dot_dimension_numbers<[1], [0], [0], [1], [0, 0, 1, 1], [], []>} : vector<1x128xf32>, vector<128x8xf32>, vector<1x8xf32> -> vector<1x8xf32>
    %cst_152 = arith.constant 0.001953125 : f32
    %151 = vector.broadcast %cst_152 : f32 to vector<1x8xf32>
    %152 = arith.mulf %150, %151 : vector<1x8xf32>
    %c0_153 = arith.constant 0 : index
    %c0_154 = arith.constant 0 : index
    %153 = vector.load %arg14[%c0_153, %c0_154] : memref<1x8xf32, #tpu.memory_space<vmem>>, vector<1x8xf32>
    %cst_155 = arith.constant 9.99999974E-6 : f32
    %154 = vector.broadcast %cst_155 : f32 to vector<1x8xf32>
    %155 = arith.addf %152, %154 : vector<1x8xf32>
    %156 = math.rsqrt %155 : vector<1x8xf32>
    %157 = arith.mulf %153, %156 : vector<1x8xf32>
    %c0_156 = arith.constant 0 : index
    %c0_157 = arith.constant 0 : index
    %158 = vector.load %arg15[%c0_156, %c0_157] : memref<1x8xf32, #tpu.memory_space<vmem>>, vector<1x8xf32>
    %159 = arith.mulf %135, %157 : vector<1x8xf32>
    %160 = arith.subf %158, %159 : vector<1x8xf32>
    %cst_158 = arith.constant dense<0.000000e+00> : vector<1x128xf32>
    %161 = tpu.matmul %157, %125, %cst_158 {dimension_numbers = #tpu.dot_dimension_numbers<[1], [0], [0], [1], [0, 0, 1, 1], [], []>} : vector<1x8xf32>, vector<8x128xf32>, vector<1x128xf32> -> vector<1x128xf32>
    %cst_159 = arith.constant dense<0.000000e+00> : vector<1x128xf32>
    %162 = tpu.matmul %160, %125, %cst_159 {dimension_numbers = #tpu.dot_dimension_numbers<[1], [0], [0], [1], [0, 0, 1, 1], [], []>} : vector<1x8xf32>, vector<8x128xf32>, vector<1x128xf32> -> vector<1x128xf32>
    %163 = vector.broadcast %161 : vector<1x128xf32> to vector<16x128xf32>
    %164 = arith.mulf %84, %163 : vector<16x128xf32>
    %165 = vector.broadcast %162 : vector<1x128xf32> to vector<16x128xf32>
    %166 = arith.addf %164, %165 : vector<16x128xf32>
    %cst_160 = arith.constant 0.000000e+00 : f32
    %167 = vector.broadcast %cst_160 : f32 to vector<16x128xf32>
    %168 = arith.maximumf %166, %167 : vector<16x128xf32>
    %c0_161 = arith.constant 0 : index
    %c1_162 = arith.constant 1 : index
    %c0_163 = arith.constant 0 : index
    %169 = vector.load %arg21[%c0_161, %c1_162, %c0_163] : memref<2x18x128xf32, #tpu.memory_space<vmem>>, vector<1x16x128xf32>
    %170 = vector.shape_cast %169 : vector<1x16x128xf32> to vector<16x128xf32>
    %171 = vector.shape_cast %168 : vector<16x128xf32> to vector<1x16x128xf32>
    tpu.vector_store %arg21[%c0_161, %c1_162, %c0_163], %171 {strides = array<i32>} : memref<2x18x128xf32, #tpu.memory_space<vmem>>, vector<1x16x128xf32>,
    %172 = vector.broadcast %161 : vector<1x128xf32> to vector<16x128xf32>
    %173 = arith.mulf %123, %172 : vector<16x128xf32>
    %174 = vector.broadcast %162 : vector<1x128xf32> to vector<16x128xf32>
    %175 = arith.addf %173, %174 : vector<16x128xf32>
    %cst_164 = arith.constant 0.000000e+00 : f32
    %176 = vector.broadcast %cst_164 : f32 to vector<16x128xf32>
    %177 = arith.maximumf %175, %176 : vector<16x128xf32>
    %c1_165 = arith.constant 1 : index
    %c1_166 = arith.constant 1 : index
    %c0_167 = arith.constant 0 : index
    %178 = vector.load %arg21[%c1_165, %c1_166, %c0_167] : memref<2x18x128xf32, #tpu.memory_space<vmem>>, vector<1x16x128xf32>
    %179 = vector.shape_cast %178 : vector<1x16x128xf32> to vector<16x128xf32>
    %180 = vector.shape_cast %177 : vector<16x128xf32> to vector<1x16x128xf32>
    tpu.vector_store %arg21[%c1_165, %c1_166, %c0_167], %180 {strides = array<i32>} : memref<2x18x128xf32, #tpu.memory_space<vmem>>, vector<1x16x128xf32>,
    %c0_168 = arith.constant 0 : index
    %c0_169 = arith.constant 0 : index
    %181 = vector.load %arg11[%c0_168, %c0_169] : memref<1x128xf32, #tpu.memory_space<vmem>>, vector<1x128xf32>
    %cst_170 = arith.constant 0.000000e+00 : f32
    %182 = vector.broadcast %cst_170 : f32 to vector<16x128xf32>
    %c0_171 = arith.constant 0 : index
    %c0_172 = arith.constant 0 : index
    %c0_173 = arith.constant 0 : index
    %183 = vector.load %arg21[%c0_171, %c0_172, %c0_173] : memref<2x18x128xf32, #tpu.memory_space<vmem>>, vector<1x16x128xf32>
    %184 = vector.shape_cast %183 : vector<1x16x128xf32> to vector<16x128xf32>
    %c0_174 = arith.constant 0 : index
    %c0_175 = arith.constant 0 : index
    %c0_176 = arith.constant 0 : index
    %185 = vector.load %arg10[%c0_174, %c0_175, %c0_176] : memref<3x128x128xf32, #tpu.memory_space<vmem>>, vector<1x128x128xf32>
    %186 = vector.shape_cast %185 : vector<1x128x128xf32> to vector<128x128xf32>
    %cst_177 = arith.constant dense<0.000000e+00> : vector<16x128xf32>
    %187 = tpu.matmul %184, %186, %cst_177 {dimension_numbers = #tpu.dot_dimension_numbers<[1], [0], [0], [1], [0, 0, 1, 1], [], []>} : vector<16x128xf32>, vector<128x128xf32>, vector<16x128xf32> -> vector<16x128xf32>
    %188 = arith.addf %182, %187 : vector<16x128xf32>
    %c0_178 = arith.constant 0 : index
    %c1_179 = arith.constant 1 : index
    %c0_180 = arith.constant 0 : index
    %189 = vector.load %arg21[%c0_178, %c1_179, %c0_180] : memref<2x18x128xf32, #tpu.memory_space<vmem>>, vector<1x16x128xf32>
    %190 = vector.shape_cast %189 : vector<1x16x128xf32> to vector<16x128xf32>
    %c1_181 = arith.constant 1 : index
    %c0_182 = arith.constant 0 : index
    %c0_183 = arith.constant 0 : index
    %191 = vector.load %arg10[%c1_181, %c0_182, %c0_183] : memref<3x128x128xf32, #tpu.memory_space<vmem>>, vector<1x128x128xf32>
    %192 = vector.shape_cast %191 : vector<1x128x128xf32> to vector<128x128xf32>
    %cst_184 = arith.constant dense<0.000000e+00> : vector<16x128xf32>
    %193 = tpu.matmul %190, %192, %cst_184 {dimension_numbers = #tpu.dot_dimension_numbers<[1], [0], [0], [1], [0, 0, 1, 1], [], []>} : vector<16x128xf32>, vector<128x128xf32>, vector<16x128xf32> -> vector<16x128xf32>
    %194 = arith.addf %188, %193 : vector<16x128xf32>
    %c0_185 = arith.constant 0 : index
    %c2_186 = arith.constant 2 : index
    %c0_187 = arith.constant 0 : index
    %195 = vector.load %arg21[%c0_185, %c2_186, %c0_187] : memref<2x18x128xf32, #tpu.memory_space<vmem>>, vector<1x16x128xf32>
    %196 = vector.shape_cast %195 : vector<1x16x128xf32> to vector<16x128xf32>
    %c2_188 = arith.constant 2 : index
    %c0_189 = arith.constant 0 : index
    %c0_190 = arith.constant 0 : index
    %197 = vector.load %arg10[%c2_188, %c0_189, %c0_190] : memref<3x128x128xf32, #tpu.memory_space<vmem>>, vector<1x128x128xf32>
    %198 = vector.shape_cast %197 : vector<1x128x128xf32> to vector<128x128xf32>
    %cst_191 = arith.constant dense<0.000000e+00> : vector<16x128xf32>
    %199 = tpu.matmul %196, %198, %cst_191 {dimension_numbers = #tpu.dot_dimension_numbers<[1], [0], [0], [1], [0, 0, 1, 1], [], []>} : vector<16x128xf32>, vector<128x128xf32>, vector<16x128xf32> -> vector<16x128xf32>
    %200 = arith.addf %194, %199 : vector<16x128xf32>
    %201 = vector.broadcast %181 : vector<1x128xf32> to vector<16x128xf32>
    %202 = arith.addf %200, %201 : vector<16x128xf32>
    %cst_192 = arith.constant 0.000000e+00 : f32
    %203 = vector.broadcast %cst_192 : f32 to vector<16x128xf32>
    %c1_193 = arith.constant 1 : index
    %c0_194 = arith.constant 0 : index
    %c0_195 = arith.constant 0 : index
    %204 = vector.load %arg21[%c1_193, %c0_194, %c0_195] : memref<2x18x128xf32, #tpu.memory_space<vmem>>, vector<1x16x128xf32>
    %205 = vector.shape_cast %204 : vector<1x16x128xf32> to vector<16x128xf32>
    %c0_196 = arith.constant 0 : index
    %c0_197 = arith.constant 0 : index
    %c0_198 = arith.constant 0 : index
    %206 = vector.load %arg10[%c0_196, %c0_197, %c0_198] : memref<3x128x128xf32, #tpu.memory_space<vmem>>, vector<1x128x128xf32>
    %207 = vector.shape_cast %206 : vector<1x128x128xf32> to vector<128x128xf32>
    %cst_199 = arith.constant dense<0.000000e+00> : vector<16x128xf32>
    %208 = tpu.matmul %205, %207, %cst_199 {dimension_numbers = #tpu.dot_dimension_numbers<[1], [0], [0], [1], [0, 0, 1, 1], [], []>} : vector<16x128xf32>, vector<128x128xf32>, vector<16x128xf32> -> vector<16x128xf32>
    %209 = arith.addf %203, %208 : vector<16x128xf32>
    %c1_200 = arith.constant 1 : index
    %c1_201 = arith.constant 1 : index
    %c0_202 = arith.constant 0 : index
    %210 = vector.load %arg21[%c1_200, %c1_201, %c0_202] : memref<2x18x128xf32, #tpu.memory_space<vmem>>, vector<1x16x128xf32>
    %211 = vector.shape_cast %210 : vector<1x16x128xf32> to vector<16x128xf32>
    %c1_203 = arith.constant 1 : index
    %c0_204 = arith.constant 0 : index
    %c0_205 = arith.constant 0 : index
    %212 = vector.load %arg10[%c1_203, %c0_204, %c0_205] : memref<3x128x128xf32, #tpu.memory_space<vmem>>, vector<1x128x128xf32>
    %213 = vector.shape_cast %212 : vector<1x128x128xf32> to vector<128x128xf32>
    %cst_206 = arith.constant dense<0.000000e+00> : vector<16x128xf32>
    %214 = tpu.matmul %211, %213, %cst_206 {dimension_numbers = #tpu.dot_dimension_numbers<[1], [0], [0], [1], [0, 0, 1, 1], [], []>} : vector<16x128xf32>, vector<128x128xf32>, vector<16x128xf32> -> vector<16x128xf32>
    %215 = arith.addf %209, %214 : vector<16x128xf32>
    %c1_207 = arith.constant 1 : index
    %c2_208 = arith.constant 2 : index
    %c0_209 = arith.constant 0 : index
    %216 = vector.load %arg21[%c1_207, %c2_208, %c0_209] : memref<2x18x128xf32, #tpu.memory_space<vmem>>, vector<1x16x128xf32>
    %217 = vector.shape_cast %216 : vector<1x16x128xf32> to vector<16x128xf32>
    %c2_210 = arith.constant 2 : index
    %c0_211 = arith.constant 0 : index
    %c0_212 = arith.constant 0 : index
    %218 = vector.load %arg10[%c2_210, %c0_211, %c0_212] : memref<3x128x128xf32, #tpu.memory_space<vmem>>, vector<1x128x128xf32>
    %219 = vector.shape_cast %218 : vector<1x128x128xf32> to vector<128x128xf32>
    %cst_213 = arith.constant dense<0.000000e+00> : vector<16x128xf32>
    %220 = tpu.matmul %217, %219, %cst_213 {dimension_numbers = #tpu.dot_dimension_numbers<[1], [0], [0], [1], [0, 0, 1, 1], [], []>} : vector<16x128xf32>, vector<128x128xf32>, vector<16x128xf32> -> vector<16x128xf32>
    %221 = arith.addf %215, %220 : vector<16x128xf32>
    %222 = vector.broadcast %181 : vector<1x128xf32> to vector<16x128xf32>
    %223 = arith.addf %221, %222 : vector<16x128xf32>
    %cst_214 = arith.constant 0.000000e+00 : f32
    %224 = vector.broadcast %cst_214 : f32 to vector<1x128xf32>
    %cst_215 = arith.constant dense<0.000000e+00> : vector<128xf32>
    %225 = vector.multi_reduction <add>, %202, %cst_215 [0] : vector<16x128xf32> to vector<128xf32>
    %226 = vector.shape_cast %225 : vector<128xf32> to vector<1x128xf32>
    %227 = arith.addf %224, %226 : vector<1x128xf32>
    %cst_216 = arith.constant dense<0.000000e+00> : vector<128xf32>
    %228 = vector.multi_reduction <add>, %223, %cst_216 [0] : vector<16x128xf32> to vector<128xf32>
    %229 = vector.shape_cast %228 : vector<128xf32> to vector<1x128xf32>
    %230 = arith.addf %227, %229 : vector<1x128xf32>
    %cst_217 = arith.constant dense<0.000000e+00> : vector<1x8xf32>
    %231 = tpu.matmul %230, %124, %cst_217 {dimension_numbers = #tpu.dot_dimension_numbers<[1], [0], [0], [1], [0, 0, 1, 1], [], []>} : vector<1x128xf32>, vector<128x8xf32>, vector<1x8xf32> -> vector<1x8xf32>
    %cst_218 = arith.constant 0.001953125 : f32
    %232 = vector.broadcast %cst_218 : f32 to vector<1x8xf32>
    %233 = arith.mulf %231, %232 : vector<1x8xf32>
    %cst_219 = arith.constant dense<0.000000e+00> : vector<1x128xf32>
    %234 = tpu.matmul %233, %125, %cst_219 {dimension_numbers = #tpu.dot_dimension_numbers<[1], [0], [0], [1], [0, 0, 1, 1], [], []>} : vector<1x8xf32>, vector<8x128xf32>, vector<1x128xf32> -> vector<1x128xf32>
    %cst_220 = arith.constant 0.000000e+00 : f32
    %235 = vector.broadcast %cst_220 : f32 to vector<1x128xf32>
    %236 = vector.broadcast %234 : vector<1x128xf32> to vector<16x128xf32>
    %237 = arith.subf %202, %236 : vector<16x128xf32>
    %238 = arith.mulf %237, %237 : vector<16x128xf32>
    %cst_221 = arith.constant dense<0.000000e+00> : vector<128xf32>
    %239 = vector.multi_reduction <add>, %238, %cst_221 [0] : vector<16x128xf32> to vector<128xf32>
    %240 = vector.shape_cast %239 : vector<128xf32> to vector<1x128xf32>
    %241 = arith.addf %235, %240 : vector<1x128xf32>
    %242 = vector.broadcast %234 : vector<1x128xf32> to vector<16x128xf32>
    %243 = arith.subf %223, %242 : vector<16x128xf32>
    %244 = arith.mulf %243, %243 : vector<16x128xf32>
    %cst_222 = arith.constant dense<0.000000e+00> : vector<128xf32>
    %245 = vector.multi_reduction <add>, %244, %cst_222 [0] : vector<16x128xf32> to vector<128xf32>
    %246 = vector.shape_cast %245 : vector<128xf32> to vector<1x128xf32>
    %247 = arith.addf %241, %246 : vector<1x128xf32>
    %cst_223 = arith.constant dense<0.000000e+00> : vector<1x8xf32>
    %248 = tpu.matmul %247, %124, %cst_223 {dimension_numbers = #tpu.dot_dimension_numbers<[1], [0], [0], [1], [0, 0, 1, 1], [], []>} : vector<1x128xf32>, vector<128x8xf32>, vector<1x8xf32> -> vector<1x8xf32>
    %cst_224 = arith.constant 0.001953125 : f32
    %249 = vector.broadcast %cst_224 : f32 to vector<1x8xf32>
    %250 = arith.mulf %248, %249 : vector<1x8xf32>
    %c0_225 = arith.constant 0 : index
    %c0_226 = arith.constant 0 : index
    %251 = vector.load %arg16[%c0_225, %c0_226] : memref<1x8xf32, #tpu.memory_space<vmem>>, vector<1x8xf32>
    %cst_227 = arith.constant 9.99999974E-6 : f32
    %252 = vector.broadcast %cst_227 : f32 to vector<1x8xf32>
    %253 = arith.addf %250, %252 : vector<1x8xf32>
    %254 = math.rsqrt %253 : vector<1x8xf32>
    %255 = arith.mulf %251, %254 : vector<1x8xf32>
    %c0_228 = arith.constant 0 : index
    %c0_229 = arith.constant 0 : index
    %256 = vector.load %arg17[%c0_228, %c0_229] : memref<1x8xf32, #tpu.memory_space<vmem>>, vector<1x8xf32>
    %257 = arith.mulf %233, %255 : vector<1x8xf32>
    %258 = arith.subf %256, %257 : vector<1x8xf32>
    %cst_230 = arith.constant dense<0.000000e+00> : vector<1x128xf32>
    %259 = tpu.matmul %255, %125, %cst_230 {dimension_numbers = #tpu.dot_dimension_numbers<[1], [0], [0], [1], [0, 0, 1, 1], [], []>} : vector<1x8xf32>, vector<8x128xf32>, vector<1x128xf32> -> vector<1x128xf32>
    %cst_231 = arith.constant dense<0.000000e+00> : vector<1x128xf32>
    %260 = tpu.matmul %258, %125, %cst_231 {dimension_numbers = #tpu.dot_dimension_numbers<[1], [0], [0], [1], [0, 0, 1, 1], [], []>} : vector<1x8xf32>, vector<8x128xf32>, vector<1x128xf32> -> vector<1x128xf32>
    %261 = vector.broadcast %259 : vector<1x128xf32> to vector<16x128xf32>
    %262 = arith.mulf %202, %261 : vector<16x128xf32>
    %263 = vector.broadcast %260 : vector<1x128xf32> to vector<16x128xf32>
    %264 = arith.addf %262, %263 : vector<16x128xf32>
    %c0_232 = arith.constant 0 : index
    %c0_233 = arith.constant 0 : index
    %265 = vector.load %arg18[%c0_232, %c0_233] : memref<32x128xf32, #tpu.memory_space<vmem>>, vector<16x128xf32>
    tpu.vector_store %arg18[%c0_232, %c0_233], %264 {strides = array<i32>} : memref<32x128xf32, #tpu.memory_space<vmem>>, vector<16x128xf32>,
    %266 = vector.broadcast %259 : vector<1x128xf32> to vector<16x128xf32>
    %267 = arith.mulf %223, %266 : vector<16x128xf32>
    %268 = vector.broadcast %260 : vector<1x128xf32> to vector<16x128xf32>
    %269 = arith.addf %267, %268 : vector<16x128xf32>
    %c16 = arith.constant 16 : index
    %c0_234 = arith.constant 0 : index
    %270 = vector.load %arg18[%c16, %c0_234] : memref<32x128xf32, #tpu.memory_space<vmem>>, vector<16x128xf32>
    tpu.vector_store %arg18[%c16, %c0_234], %269 {strides = array<i32>} : memref<32x128xf32, #tpu.memory_space<vmem>>, vector<16x128xf32>,
    return
  }
}

</mosaic_0001>

<llo_original>
// kernel: tile.33
$region0: #{tile.33}
  %s0 = inlined_call_operand.vmem [shape: f32[16,8,8], index: 0, kind: input, shape index: {}]
  %s1 = inlined_call_operand.vmem [shape: f32[128,8], index: 1, kind: output, shape index: {}]
  %s2 = smov 3
  %v3 = vld [vmem:[%s0] ss:$16 sm:%s2]
  %s4 = smov 12
  %v5 = vld [vmem:[%s0] ss:$16 sm:%s4]
  %vm6 = vcmask 1043458
  %v7 = vsel %vm6, %v5, %v3
  %s8 = smov 48
  %v9 = vld [vmem:[%s0] ss:$16 sm:%s8]
  %vm10 = vcmask 1045508
  %v11 = vsel %vm10, %v9, %v7
  %s12 = smov 192
  %v13 = vld [vmem:[%s0] ss:$16 sm:%s12]
  %vm14 = vcmask 1047558
  %v15 = vsel %vm14, %v13, %v11
  %vm16 = vcmask 64512
  %17 = vst.msk [vmem:[%s1] sm:$0xff] %vm16, %v15
  %s18 = scalar_lea.vmem %s0, 15
  %s19 = smov 3
  %v20 = vld [vmem:[%s18] ss:$16 sm:%s19]
  %s21 = scalar_lea.vmem %s0, 15
  %s22 = smov 12
  %v23 = vld [vmem:[%s21] ss:$16 sm:%s22]
  %vm24 = vcmask 1043458
  %v25 = vsel %vm24, %v23, %v20
  %s26 = scalar_lea.vmem %s0, 15
  %s27 = smov 48
  %v28 = vld [vmem:[%s26] ss:$16 sm:%s27]
  %vm29 = vcmask 1045508
  %v30 = vsel %vm29, %v28, %v25
  %s31 = scalar_lea.vmem %s0, 15
  %s32 = smov 192
  %v33 = vld [vmem:[%s31] ss:$16 sm:%s32]
  %vm34 = vcmask 1047558
  %v35 = vsel %vm34, %v33, %v30
  %36 = vrot.lane.b32.xlu0 %v35, 120
  %v37 = vpop.permute.xlu0 %36
  %vm38 = vcmask 1048512
  %39 = vst.msk [vmem:[%s1] sm:$0xff] %vm38, %v37
  %s40 = scalar_lea.vmem %s0, 14
  %s41 = smov 3
  %v42 = vld [vmem:[%s40] ss:$16 sm:%s41]
  %s43 = scalar_lea.vmem %s0, 14
  %s44 = smov 12
  %v45 = vld [vmem:[%s43] ss:$16 sm:%s44]
  %vm46 = vcmask 1043458
  %v47 = vsel %vm46, %v45, %v42
  %s48 = scalar_lea.vmem %s0, 14
  %s49 = smov 48
  %v50 = vld [vmem:[%s48] ss:$16 sm:%s49]
  %vm51 = vcmask 1045508
  %v52 = vsel %vm51, %v50, %v47
  %s53 = scalar_lea.vmem %s0, 14
  %s54 = smov 192
  %v55 = vld [vmem:[%s53] ss:$16 sm:%s54]
  %vm56 = vcmask 1047558
  %v57 = vsel %vm56, %v55, %v52
  %58 = vrot.lane.b32.xlu0 %v57, 112
  %v59 = vpop.permute.xlu0 %58
  %vm60 = vcmask 982912
  %61 = vst.msk [vmem:[%s1] sm:$0xff] %vm60, %v59
  %s62 = scalar_lea.vmem %s0, 13
  %s63 = smov 3
  %v64 = vld [vmem:[%s62] ss:$16 sm:%s63]
  %s65 = scalar_lea.vmem %s0, 13
  %s66 = smov 12
  %v67 = vld [vmem:[%s65] ss:$16 sm:%s66]
  %vm68 = vcmask 1043458
  %v69 = vsel %vm68, %v67, %v64
  %s70 = scalar_lea.vmem %s0, 13
  %s71 = smov 48
  %v72 = vld [vmem:[%s70] ss:$16 sm:%s71]
  %vm73 = vcmask 1045508
  %v74 = vsel %vm73, %v72, %v69
  %s75 = scalar_lea.vmem %s0, 13
  %s76 = smov 192
  %v77 = vld [vmem:[%s75] ss:$16 sm:%s76]
  %vm78 = vcmask 1047558
  %v79 = vsel %vm78, %v77, %v74
  %80 = vrot.lane.b32.xlu0 %v79, 104
  %v81 = vpop.permute.xlu0 %80
  %vm82 = vcmask 917312
  %83 = vst.msk [vmem:[%s1] sm:$0xff] %vm82, %v81
  %s84 = scalar_lea.vmem %s0, 12
  %s85 = smov 3
  %v86 = vld [vmem:[%s84] ss:$16 sm:%s85]
  %s87 = scalar_lea.vmem %s0, 12
  %s88 = smov 12
  %v89 = vld [vmem:[%s87] ss:$16 sm:%s88]
  %vm90 = vcmask 1043458
  %v91 = vsel %vm90, %v89, %v86
  %s92 = scalar_lea.vmem %s0, 12
  %s93 = smov 48
  %v94 = vld [vmem:[%s92] ss:$16 sm:%s93]
  %vm95 = vcmask 1045508
  %v96 = vsel %vm95, %v94, %v91
  %s97 = scalar_lea.vmem %s0, 12
  %s98 = smov 192
  %v99 = vld [vmem:[%s97] ss:$16 sm:%s98]
  %vm100 = vcmask 1047558
  %v101 = vsel %vm100, %v99, %v96
  %102 = vrot.lane.b32.xlu0 %v101, 96
  %v103 = vpop.permute.xlu0 %102
  %vm104 = vcmask 851712
  %105 = vst.msk [vmem:[%s1] sm:$0xff] %vm104, %v103
  %s106 = scalar_lea.vmem %s0, 11
  %s107 = smov 3
  %v108 = vld [vmem:[%s106] ss:$16 sm:%s107]
  %s109 = scalar_lea.vmem %s0, 11
  %s110 = smov 12
  %v111 = vld [vmem:[%s109] ss:$16 sm:%s110]
  %vm112 = vcmask 1043458
  %v113 = vsel %vm112, %v111, %v108
  %s114 = scalar_lea.vmem %s0, 11
  %s115 = smov 48
  %v116 = vld [vmem:[%s114] ss:$16 sm:%s115]
  %vm117 = vcmask 1045508
  %v118 = vsel %vm117, %v116, %v113
  %s119 = scalar_lea.vmem %s0, 11
  %s120 = smov 192
  %v121 = vld [vmem:[%s119] ss:$16 sm:%s120]
  %vm122 = vcmask 1047558
  %v123 = vsel %vm122, %v121, %v118
  %124 = vrot.lane.b32.xlu0 %v123, 88
  %v125 = vpop.permute.xlu0 %124
  %vm126 = vcmask 786112
  %127 = vst.msk [vmem:[%s1] sm:$0xff] %vm126, %v125
  %s128 = scalar_lea.vmem %s0, 10
  %s129 = smov 3
  %v130 = vld [vmem:[%s128] ss:$16 sm:%s129]
  %s131 = scalar_lea.vmem %s0, 10
  %s132 = smov 12
  %v133 = vld [vmem:[%s131] ss:$16 sm:%s132]
  %vm134 = vcmask 1043458
  %v135 = vsel %vm134, %v133, %v130
  %s136 = scalar_lea.vmem %s0, 10
  %s137 = smov 48
  %v138 = vld [vmem:[%s136] ss:$16 sm:%s137]
  %vm139 = vcmask 1045508
  %v140 = vsel %vm139, %v138, %v135
  %s141 = scalar_lea.vmem %s0, 10
  %s142 = smov 192
  %v143 = vld [vmem:[%s141] ss:$16 sm:%s142]
  %vm144 = vcmask 1047558
  %v145 = vsel %vm144, %v143, %v140
  %146 = vrot.lane.b32.xlu0 %v145, 80
  %v147 = vpop.permute.xlu0 %146
  %vm148 = vcmask 720512
  %149 = vst.msk [vmem:[%s1] sm:$0xff] %vm148, %v147
  %s150 = scalar_lea.vmem %s0, 9
  %s151 = smov 3
  %v152 = vld [vmem:[%s150] ss:$16 sm:%s151]
  %s153 = scalar_lea.vmem %s0, 9
  %s154 = smov 12
  %v155 = vld [vmem:[%s153] ss:$16 sm:%s154]
  %vm156 = vcmask 1043458
  %v157 = vsel %vm156, %v155, %v152
  %s158 = scalar_lea.vmem %s0, 9
  %s159 = smov 48
  %v160 = vld [vmem:[%s158] ss:$16 sm:%s159]
  %vm161 = vcmask 1045508
  %v162 = vsel %vm161, %v160, %v157
  %s163 = scalar_lea.vmem %s0, 9
  %s164 = smov 192
  %v165 = vld [vmem:[%s163] ss:$16 sm:%s164]
  %vm166 = vcmask 1047558
  %v167 = vsel %vm166, %v165, %v162
  %168 = vrot.lane.b32.xlu0 %v167, 72
  %v169 = vpop.permute.xlu0 %168
  %vm170 = vcmask 654912
  %171 = vst.msk [vmem:[%s1] sm:$0xff] %vm170, %v169
  %s172 = scalar_lea.vmem %s0, 8
  %s173 = smov 3
  %v174 = vld [vmem:[%s172] ss:$16 sm:%s173]
  %s175 = scalar_lea.vmem %s0, 8
  %s176 = smov 12
  %v177 = vld [vmem:[%s175] ss:$16 sm:%s176]
  %vm178 = vcmask 1043458
  %v179 = vsel %vm178, %v177, %v174
  %s180 = scalar_lea.vmem %s0, 8
  %s181 = smov 48
  %v182 = vld [vmem:[%s180] ss:$16 sm:%s181]
  %vm183 = vcmask 1045508
  %v184 = vsel %vm183, %v182, %v179
  %s185 = scalar_lea.vmem %s0, 8
  %s186 = smov 192
  %v187 = vld [vmem:[%s185] ss:$16 sm:%s186]
  %vm188 = vcmask 1047558
  %v189 = vsel %vm188, %v187, %v184
  %190 = vrot.lane.b32.xlu0 %v189, 64
  %v191 = vpop.permute.xlu0 %190
  %vm192 = vcmask 589312
  %193 = vst.msk [vmem:[%s1] sm:$0xff] %vm192, %v191
  %s194 = scalar_lea.vmem %s0, 7
  %s195 = smov 3
  %v196 = vld [vmem:[%s194] ss:$16 sm:%s195]
  %s197 = scalar_lea.vmem %s0, 7
  %s198 = smov 12
  %v199 = vld [vmem:[%s197] ss:$16 sm:%s198]
  %vm200 = vcmask 1043458
  %v201 = vsel %vm200, %v199, %v196
  %s202 = scalar_lea.vmem %s0, 7
  %s203 = smov 48
  %v204 = vld [vmem:[%s202] ss:$16 sm:%s203]
  %vm205 = vcmask 1045508
  %v206 = vsel %vm205, %v204, %v201
  %s207 = scalar_lea.vmem %s0, 7
  %s208 = smov 192
  %v209 = vld [vmem:[%s207] ss:$16 sm:%s208]
  %vm210 = vcmask 1047558
  %v211 = vsel %vm210, %v209, %v206
  %212 = vrot.lane.b32.xlu0 %v211, 56
  %v213 = vpop.permute.xlu0 %212
  %vm214 = vcmask 523712
  %215 = vst.msk [vmem:[%s1] sm:$0xff] %vm214, %v213
  %s216 = scalar_lea.vmem %s0, 6
  %s217 = smov 3
  %v218 = vld [vmem:[%s216] ss:$16 sm:%s217]
  %s219 = scalar_lea.vmem %s0, 6
  %s220 = smov 12
  %v221 = vld [vmem:[%s219] ss:$16 sm:%s220]
  %vm222 = vcmask 1043458
  %v223 = vsel %vm222, %v221, %v218
  %s224 = scalar_lea.vmem %s0, 6
  %s225 = smov 48
  %v226 = vld [vmem:[%s224] ss:$16 sm:%s225]
  %vm227 = vcmask 1045508
  %v228 = vsel %vm227, %v226, %v223
  %s229 = scalar_lea.vmem %s0, 6
  %s230 = smov 192
  %v231 = vld [vmem:[%s229] ss:$16 sm:%s230]
  %vm232 = vcmask 1047558
  %v233 = vsel %vm232, %v231, %v228
  %234 = vrot.lane.b32.xlu0 %v233, 48
  %v235 = vpop.permute.xlu0 %234
  %vm236 = vcmask 458112
  %237 = vst.msk [vmem:[%s1] sm:$0xff] %vm236, %v235
  %s238 = scalar_lea.vmem %s0, 5
  %s239 = smov 3
  %v240 = vld [vmem:[%s238] ss:$16 sm:%s239]
  %s241 = scalar_lea.vmem %s0, 5
  %s242 = smov 12
  %v243 = vld [vmem:[%s241] ss:$16 sm:%s242]
  %vm244 = vcmask 1043458
  %v245 = vsel %vm244, %v243, %v240
  %s246 = scalar_lea.vmem %s0, 5
  %s247 = smov 48
  %v248 = vld [vmem:[%s246] ss:$16 sm:%s247]
  %vm249 = vcmask 1045508
  %v250 = vsel %vm249, %v248, %v245
  %s251 = scalar_lea.vmem %s0, 5
  %s252 = smov 192
  %v253 = vld [vmem:[%s251] ss:$16 sm:%s252]
  %vm254 = vcmask 1047558
  %v255 = vsel %vm254, %v253, %v250
  %256 = vrot.lane.b32.xlu0 %v255, 40
  %v257 = vpop.permute.xlu0 %256
  %vm258 = vcmask 392512
  %259 = vst.msk [vmem:[%s1] sm:$0xff] %vm258, %v257
  %s260 = scalar_lea.vmem %s0, 4
  %s261 = smov 3
  %v262 = vld [vmem:[%s260] ss:$16 sm:%s261]
  %s263 = scalar_lea.vmem %s0, 4
  %s264 = smov 12
  %v265 = vld [vmem:[%s263] ss:$16 sm:%s264]
  %vm266 = vcmask 1043458
  %v267 = vsel %vm266, %v265, %v262
  %s268 = scalar_lea.vmem %s0, 4
  %s269 = smov 48
  %v270 = vld [vmem:[%s268] ss:$16 sm:%s269]
  %vm271 = vcmask 1045508
  %v272 = vsel %vm271, %v270, %v267
  %s273 = scalar_lea.vmem %s0, 4
  %s274 = smov 192
  %v275 = vld [vmem:[%s273] ss:$16 sm:%s274]
  %vm276 = vcmask 1047558
  %v277 = vsel %vm276, %v275, %v272
  %278 = vrot.lane.b32.xlu0 %v277, 32
  %v279 = vpop.permute.xlu0 %278
  %vm280 = vcmask 326912
  %281 = vst.msk [vmem:[%s1] sm:$0xff] %vm280, %v279
  %s282 = scalar_lea.vmem %s0, 3
  %s283 = smov 3
  %v284 = vld [vmem:[%s282] ss:$16 sm:%s283]
  %s285 = scalar_lea.vmem %s0, 3
  %s286 = smov 12
  %v287 = vld [vmem:[%s285] ss:$16 sm:%s286]
  %vm288 = vcmask 1043458
  %v289 = vsel %vm288, %v287, %v284
  %s290 = scalar_lea.vmem %s0, 3
  %s291 = smov 48
  %v292 = vld [vmem:[%s290] ss:$16 sm:%s291]
  %vm293 = vcmask 1045508
  %v294 = vsel %vm293, %v292, %v289
  %s295 = scalar_lea.vmem %s0, 3
  %s296 = smov 192
  %v297 = vld [vmem:[%s295] ss:$16 sm:%s296]
  %vm298 = vcmask 1047558
  %v299 = vsel %vm298, %v297, %v294
  %300 = vrot.lane.b32.xlu0 %v299, 24
  %v301 = vpop.permute.xlu0 %300
  %vm302 = vcmask 261312
  %303 = vst.msk [vmem:[%s1] sm:$0xff] %vm302, %v301
  %s304 = scalar_lea.vmem %s0, 2
  %s305 = smov 3
  %v306 = vld [vmem:[%s304] ss:$16 sm:%s305]
  %s307 = scalar_lea.vmem %s0, 2
  %s308 = smov 12
  %v309 = vld [vmem:[%s307] ss:$16 sm:%s308]
  %vm310 = vcmask 1043458
  %v311 = vsel %vm310, %v309, %v306
  %s312 = scalar_lea.vmem %s0, 2
  %s313 = smov 48
  %v314 = vld [vmem:[%s312] ss:$16 sm:%s313]
  %vm315 = vcmask 1045508
  %v316 = vsel %vm315, %v314, %v311
  %s317 = scalar_lea.vmem %s0, 2
  %s318 = smov 192
  %v319 = vld [vmem:[%s317] ss:$16 sm:%s318]
  %vm320 = vcmask 1047558
  %v321 = vsel %vm320, %v319, %v316
  %322 = vrot.lane.b32.xlu0 %v321, 16
  %v323 = vpop.permute.xlu0 %322
  %vm324 = vcmask 195712
  %325 = vst.msk [vmem:[%s1] sm:$0xff] %vm324, %v323
  %s326 = scalar_lea.vmem %s0, 1
  %s327 = smov 3
  %v328 = vld [vmem:[%s326] ss:$16 sm:%s327]
  %s329 = scalar_lea.vmem %s0, 1
  %s330 = smov 12
  %v331 = vld [vmem:[%s329] ss:$16 sm:%s330]
  %vm332 = vcmask 1043458
  %v333 = vsel %vm332, %v331, %v328
  %s334 = scalar_lea.vmem %s0, 1
  %s335 = smov 48
  %v336 = vld [vmem:[%s334] ss:$16 sm:%s335]
  %vm337 = vcmask 1045508
  %v338 = vsel %vm337, %v336, %v333
  %s339 = scalar_lea.vmem %s0, 1
  %s340 = smov 192
  %v341 = vld [vmem:[%s339] ss:$16 sm:%s340]
  %vm342 = vcmask 1047558
  %v343 = vsel %vm342, %v341, %v338
  %344 = vrot.lane.b32.xlu0 %v343, 8
  %v345 = vpop.permute.xlu0 %344
  %vm346 = vcmask 130112
  %347 = vst.msk [vmem:[%s1] sm:$0xff] %vm346, %v345

// kernel: tile.19
$region0: #{tile.19}
  #allocation0 [shape = 's32[1]{0}', space=sflag, size = 0x4, scoped, tag = 'scoped memory for tile.19']
  %s0 = inlined_call_operand.vmem [shape: f32[4], index: 0, kind: input, shape index: {}]
  %s1 = inlined_call_operand.vmem [shape: f32[16,4], index: 1, kind: output, shape index: {}]
  // Predicated region
  $region2: #{tile.19} parent=0 // pred_check
    _
  $region3: #{tile.19} parent=0 // pred_check_branch
    %3 = sbr.rel (0) target = $region5
  $region4: #{tile.19} parent=0 // pred_region
    _
  $region5: #{tile.19} parent=0 // pred_fallthru
    _
  %v4 = vld [vmem:[%s0] ss:$0 sm:$0xff]
  %5 = vst [vmem:[%s1] sm:$0xff] %v4
  %s6 = scalar_lea.vmem %s1, 8
  %7 = vst [vmem:[%s6] sm:$0xff] %v4

// kernel: tile.20
$region0: #{tile.20}
  %s0 = inlined_call_operand.vmem [shape: f32[16,4], index: 0, kind: input, shape index: {}]
  %s1 = inlined_call_operand.vmem [shape: f32[1,64], index: 1, kind: output, shape index: {}]
  $region1: #{tile.20} parent=0
    #allocation0 [shape = 'u8[4096]{0}', space=vmem, size = 0x1000, scoped, tag = 'scoped mem for output reshape']
    %v2 = vld [vmem:[%s0] sm:$0x1]
    %vm3 = vcmask 31744
    %4 = vst.msk [vmem:[#allocation0] sm:$0x1] %vm3, %v2
    %s5 = scalar_lea.vmem %s0, 15
    %v6 = vld [vmem:[%s5] sm:$0x1]
    %7 = vrot.lane.b32.xlu0 %v6, 60
    %v8 = vpop.permute.xlu0 %7
    %vm9 = vcmask 523744
    %10 = vst.msk [vmem:[#allocation0] sm:$0x1] %vm9, %v8
    %s11 = scalar_lea.vmem %s0, 14
    %v12 = vld [vmem:[%s11] sm:$0x1]
    %13 = vrot.lane.b32.xlu0 %v12, 56
    %v14 = vpop.permute.xlu0 %13
    %vm15 = vcmask 490944
    %16 = vst.msk [vmem:[#allocation0] sm:$0x1] %vm15, %v14
    %s17 = scalar_lea.vmem %s0, 13
    %v18 = vld [vmem:[%s17] sm:$0x1]
    %19 = vrot.lane.b32.xlu0 %v18, 52
    %v20 = vpop.permute.xlu0 %19
    %vm21 = vcmask 458144
    %22 = vst.msk [vmem:[#allocation0] sm:$0x1] %vm21, %v20
    %s23 = scalar_lea.vmem %s0, 12
    %v24 = vld [vmem:[%s23] sm:$0x1]
    %25 = vrot.lane.b32.xlu0 %v24, 48
    %v26 = vpop.permute.xlu0 %25
    %vm27 = vcmask 425344
    %28 = vst.msk [vmem:[#allocation0] sm:$0x1] %vm27, %v26
    %s29 = scalar_lea.vmem %s0, 11
    %v30 = vld [vmem:[%s29] sm:$0x1]
    %31 = vrot.lane.b32.xlu0 %v30, 44
    %v32 = vpop.permute.xlu0 %31
    %vm33 = vcmask 392544
    %34 = vst.msk [vmem:[#allocation0] sm:$0x1] %vm33, %v32
    %s35 = scalar_lea.vmem %s0, 10
    %v36 = vld [vmem:[%s35] sm:$0x1]
    %37 = vrot.lane.b32.xlu0 %v36, 40
    %v38 = vpop.permute.xlu0 %37
    %vm39 = vcmask 359744
    %40 = vst.msk [vmem:[#allocation0] sm:$0x1] %vm39, %v38
    %s41 = scalar_lea.vmem %s0, 9
    %v42 = vld [vmem:[%s41] sm:$0x1]
    %43 = vrot.lane.b32.xlu0 %v42, 36
    %v44 = vpop.permute.xlu0 %43
    %vm45 = vcmask 326944
    %46 = vst.msk [vmem:[#allocation0] sm:$0x1] %vm45, %v44
    %s47 = scalar_lea.vmem %s0, 8
    %v48 = vld [vmem:[%s47] sm:$0x1]
    %49 = vrot.lane.b32.xlu0 %v48, 32
    %v50 = vpop.permute.xlu0 %49
    %vm51 = vcmask 294144
    %52 = vst.msk [vmem:[#allocation0] sm:$0x1] %vm51, %v50
    %s53 = scalar_lea.vmem %s0, 7
    %v54 = vld [vmem:[%s53] sm:$0x1]
    %55 = vrot.lane.b32.xlu0 %v54, 28
    %v56 = vpop.permute.xlu0 %55
    %vm57 = vcmask 261344
    %58 = vst.msk [vmem:[#allocation0] sm:$0x1] %vm57, %v56
    %s59 = scalar_lea.vmem %s0, 6
    %v60 = vld [vmem:[%s59] sm:$0x1]
    %61 = vrot.lane.b32.xlu0 %v60, 24
    %v62 = vpop.permute.xlu0 %61
    %vm63 = vcmask 228544
    %64 = vst.msk [vmem:[#allocation0] sm:$0x1] %vm63, %v62
    %s65 = scalar_lea.vmem %s0, 5
    %v66 = vld [vmem:[%s65] sm:$0x1]
    %67 = vrot.lane.b32.xlu0 %v66, 20
    %v68 = vpop.permute.xlu0 %67
    %vm69 = vcmask 195744
    %70 = vst.msk [vmem:[#allocation0] sm:$0x1] %vm69, %v68
    %s71 = scalar_lea.vmem %s0, 4
    %v72 = vld [vmem:[%s71] sm:$0x1]
    %73 = vrot.lane.b32.xlu0 %v72, 16
    %v74 = vpop.permute.xlu0 %73
    %vm75 = vcmask 162944
    %76 = vst.msk [vmem:[#allocation0] sm:$0x1] %vm75, %v74
    %s77 = scalar_lea.vmem %s0, 3
    %v78 = vld [vmem:[%s77] sm:$0x1]
    %79 = vrot.lane.b32.xlu0 %v78, 12
    %v80 = vpop.permute.xlu0 %79
    %vm81 = vcmask 130144
    %82 = vst.msk [vmem:[#allocation0] sm:$0x1] %vm81, %v80
    %s83 = scalar_lea.vmem %s0, 2
    %v84 = vld [vmem:[%s83] sm:$0x1]
    %85 = vrot.lane.b32.xlu0 %v84, 8
    %v86 = vpop.permute.xlu0 %85
    %vm87 = vcmask 97344
    %88 = vst.msk [vmem:[#allocation0] sm:$0x1] %vm87, %v86
    %s89 = scalar_lea.vmem %s0, 1
    %v90 = vld [vmem:[%s89] sm:$0x1]
    %91 = vrot.lane.b32.xlu0 %v90, 4
    %v92 = vpop.permute.xlu0 %91
    %vm93 = vcmask 64544
    %94 = vst.msk [vmem:[#allocation0] sm:$0x1] %vm93, %v92
    %s96 = sshll.u32 1, 1
    %s97 = ssub.s32 %s96, 1
    %v99 = vld [vmem:[#allocation0] sm:%s97]
    %s100 = sshll.u32 1, 1
    %s101 = ssub.s32 %s100, 1
    %102 = vst [vmem:[%s1] sm:%s101] %v99

// kernel: tile.23
$region0: #{tile.23}
  #allocation0 [shape = 's32[1]{0}', space=sflag, size = 0x4, scoped, tag = 'scoped memory for tile.23']
  %s0 = inlined_call_operand.vmem [shape: f32[8], index: 0, kind: input, shape index: {}]
  %s1 = inlined_call_operand.vmem [shape: f32[16,8], index: 1, kind: output, shape index: {}]
  // Predicated region
  $region2: #{tile.23} parent=0 // pred_check
    _
  $region3: #{tile.23} parent=0 // pred_check_branch
    %3 = sbr.rel (0) target = $region5
  $region4: #{tile.23} parent=0 // pred_region
    _
  $region5: #{tile.23} parent=0 // pred_fallthru
    _
  %v4 = vld [vmem:[%s0] ss:$0 sm:$0xff]
  %5 = vst [vmem:[%s1] sm:$0xff] %v4
  %s6 = scalar_lea.vmem %s1, 8
  %7 = vst [vmem:[%s6] sm:$0xff] %v4

// kernel: tile.24
$region0: #{tile.24}
  %s0 = inlined_call_operand.vmem [shape: f32[16,8], index: 0, kind: input, shape index: {}]
  %s1 = inlined_call_operand.vmem [shape: f32[1,128], index: 1, kind: output, shape index: {}]
  $region1: #{tile.24} parent=0
    #allocation0 [shape = 'u8[4096]{0}', space=vmem, size = 0x1000, scoped, tag = 'scoped mem for output reshape']
    %v2 = vld [vmem:[%s0] sm:$0x1]
    %vm3 = vcmask 64512
    %4 = vst.msk [vmem:[#allocation0] sm:$0x1] %vm3, %v2
    %s5 = scalar_lea.vmem %s0, 15
    %v6 = vld [vmem:[%s5] sm:$0x1]
    %7 = vrot.lane.b32.xlu0 %v6, 120
    %v8 = vpop.permute.xlu0 %7
    %vm9 = vcmask 1048512
    %10 = vst.msk [vmem:[#allocation0] sm:$0x1] %vm9, %v8
    %s11 = scalar_lea.vmem %s0, 14
    %v12 = vld [vmem:[%s11] sm:$0x1]
    %13 = vrot.lane.b32.xlu0 %v12, 112
    %v14 = vpop.permute.xlu0 %13
    %vm15 = vcmask 982912
    %16 = vst.msk [vmem:[#allocation0] sm:$0x1] %vm15, %v14
    %s17 = scalar_lea.vmem %s0, 13
    %v18 = vld [vmem:[%s17] sm:$0x1]
    %19 = vrot.lane.b32.xlu0 %v18, 104
    %v20 = vpop.permute.xlu0 %19
    %vm21 = vcmask 917312
    %22 = vst.msk [vmem:[#allocation0] sm:$0x1] %vm21, %v20
    %s23 = scalar_lea.vmem %s0, 12
    %v24 = vld [vmem:[%s23] sm:$0x1]
    %25 = vrot.lane.b32.xlu0 %v24, 96
    %v26 = vpop.permute.xlu0 %25
    %vm27 = vcmask 851712
    %28 = vst.msk [vmem:[#allocation0] sm:$0x1] %vm27, %v26
    %s29 = scalar_lea.vmem %s0, 11
    %v30 = vld [vmem:[%s29] sm:$0x1]
    %31 = vrot.lane.b32.xlu0 %v30, 88
    %v32 = vpop.permute.xlu0 %31
    %vm33 = vcmask 786112
    %34 = vst.msk [vmem:[#allocation0] sm:$0x1] %vm33, %v32
    %s35 = scalar_lea.vmem %s0, 10
    %v36 = vld [vmem:[%s35] sm:$0x1]
    %37 = vrot.lane.b32.xlu0 %v36, 80
    %v38 = vpop.permute.xlu0 %37
    %vm39 = vcmask 720512
    %40 = vst.msk [vmem:[#allocation0] sm:$0x1] %vm39, %v38
    %s41 = scalar_lea.vmem %s0, 9
    %v42 = vld [vmem:[%s41] sm:$0x1]
    %43 = vrot.lane.b32.xlu0 %v42, 72
    %v44 = vpop.permute.xlu0 %43
    %vm45 = vcmask 654912
    %46 = vst.msk [vmem:[#allocation0] sm:$0x1] %vm45, %v44
    %s47 = scalar_lea.vmem %s0, 8
    %v48 = vld [vmem:[%s47] sm:$0x1]
    %49 = vrot.lane.b32.xlu0 %v48, 64
    %v50 = vpop.permute.xlu0 %49
    %vm51 = vcmask 589312
    %52 = vst.msk [vmem:[#allocation0] sm:$0x1] %vm51, %v50
    %s53 = scalar_lea.vmem %s0, 7
    %v54 = vld [vmem:[%s53] sm:$0x1]
    %55 = vrot.lane.b32.xlu0 %v54, 56
    %v56 = vpop.permute.xlu0 %55
    %vm57 = vcmask 523712
    %58 = vst.msk [vmem:[#allocation0] sm:$0x1] %vm57, %v56
    %s59 = scalar_lea.vmem %s0, 6
    %v60 = vld [vmem:[%s59] sm:$0x1]
    %61 = vrot.lane.b32.xlu0 %v60, 48
    %v62 = vpop.permute.xlu0 %61
    %vm63 = vcmask 458112
    %64 = vst.msk [vmem:[#allocation0] sm:$0x1] %vm63, %v62
    %s65 = scalar_lea.vmem %s0, 5
    %v66 = vld [vmem:[%s65] sm:$0x1]
    %67 = vrot.lane.b32.xlu0 %v66, 40
    %v68 = vpop.permute.xlu0 %67
    %vm69 = vcmask 392512
    %70 = vst.msk [vmem:[#allocation0] sm:$0x1] %vm69, %v68
    %s71 = scalar_lea.vmem %s0, 4
    %v72 = vld [vmem:[%s71] sm:$0x1]
    %73 = vrot.lane.b32.xlu0 %v72, 32
    %v74 = vpop.permute.xlu0 %73
    %vm75 = vcmask 326912
    %76 = vst.msk [vmem:[#allocation0] sm:$0x1] %vm75, %v74
    %s77 = scalar_lea.vmem %s0, 3
    %v78 = vld [vmem:[%s77] sm:$0x1]
    %79 = vrot.lane.b32.xlu0 %v78, 24
    %v80 = vpop.permute.xlu0 %79
    %vm81 = vcmask 261312
    %82 = vst.msk [vmem:[#allocation0] sm:$0x1] %vm81, %v80
    %s83 = scalar_lea.vmem %s0, 2
    %v84 = vld [vmem:[%s83] sm:$0x1]
    %85 = vrot.lane.b32.xlu0 %v84, 16
    %v86 = vpop.permute.xlu0 %85
    %vm87 = vcmask 195712
    %88 = vst.msk [vmem:[#allocation0] sm:$0x1] %vm87, %v86
    %s89 = scalar_lea.vmem %s0, 1
    %v90 = vld [vmem:[%s89] sm:$0x1]
    %91 = vrot.lane.b32.xlu0 %v90, 8
    %v92 = vpop.permute.xlu0 %91
    %vm93 = vcmask 130112
    %94 = vst.msk [vmem:[#allocation0] sm:$0x1] %vm93, %v92
    %s96 = sshll.u32 1, 1
    %s97 = ssub.s32 %s96, 1
    %v99 = vld [vmem:[#allocation0] sm:%s97]
    %s100 = sshll.u32 1, 1
    %s101 = ssub.s32 %s100, 1
    %102 = vst [vmem:[%s1] sm:%s101] %v99

// kernel: up_forward.1
$region0: #{up_forward.1}
  #allocation0 [shape = 'u32[]', space=smem, size = 0x4, offset = 0x4, fixed_abs, tag = 'smem constant byte address 0x4 - core index']
  #allocation1 [shape = 'u32[144,128]{1,0:T(1,128)}', space=vmem, size = 0x12000, scoped, tag = 'internal scratch']
  #allocation2 [shape = 'f32[2,18,64]{2,1,0:T(8,128)}', space=vmem, size = 0x6000, scoped, tag = 'scratch operand']
  #allocation3 [shape = 'f32[2,18,64]{2,1,0:T(8,128)}', space=vmem, size = 0x6000, scoped, tag = 'scratch operand']
  #allocation4 [shape = 'f32[2,18,128]{2,1,0:T(8,128)}', space=vmem, size = 0x6000, scoped, tag = 'scratch operand']
  %s0 = inlined_call_operand.vmem [shape: f32[2,8,32], index: 0, kind: input, shape index: {}]
  %s1 = inlined_call_operand.vmem [shape: f32[2,16,64], index: 1, kind: input, shape index: {}]
  %s2 = inlined_call_operand.vmem [shape: f32[32,64], index: 2, kind: input, shape index: {}]
  %s3 = inlined_call_operand.vmem [shape: f32[32,64], index: 3, kind: input, shape index: {}]
  %s4 = inlined_call_operand.vmem [shape: f32[1,64], index: 4, kind: input, shape index: {}]
  %s5 = inlined_call_operand.vmem [shape: f32[16,8], index: 5, kind: input, shape index: {}]
  %s6 = inlined_call_operand.vmem [shape: f32[16,8], index: 6, kind: input, shape index: {}]
  %s7 = inlined_call_operand.vmem [shape: f32[3,64,128], index: 7, kind: input, shape index: {}]
  %s8 = inlined_call_operand.vmem [shape: f32[3,64,128], index: 8, kind: input, shape index: {}]
  %s9 = inlined_call_operand.vmem [shape: f32[1,128], index: 9, kind: input, shape index: {}]
  %s10 = inlined_call_operand.vmem [shape: f32[3,128,128], index: 10, kind: input, shape index: {}]
  %s11 = inlined_call_operand.vmem [shape: f32[1,128], index: 11, kind: input, shape index: {}]
  %s12 = inlined_call_operand.vmem [shape: f32[128,8], index: 12, kind: input, shape index: {}]
  %s13 = inlined_call_operand.vmem [shape: f32[8,128], index: 13, kind: input, shape index: {}]
  %s14 = inlined_call_operand.vmem [shape: f32[1,8], index: 14, kind: input, shape index: {}, may-alias: {14,16}]
  %s15 = inlined_call_operand.vmem [shape: f32[1,8], index: 15, kind: input, shape index: {}, may-alias: {15,17}]
  %s16 = inlined_call_operand.vmem [shape: f32[1,8], index: 16, kind: input, shape index: {}, may-alias: {14,16}]
  %s17 = inlined_call_operand.vmem [shape: f32[1,8], index: 17, kind: input, shape index: {}, may-alias: {15,17}]
  %s18 = inlined_call_operand.vmem [shape: f32[32,128], index: 18, kind: output, shape index: {}]
  %s19 = sld [smem:[#allocation0]]
  $region82: #{up_forward.1} parent=0
    _
  %s21 = ssub.s32 1, %s19
  %s22 = scalar_select 0, %s21, %s19
  // Predicated region
  $region2: #{up_forward.1} parent=0 // pred_check
    _
  $region3: #{up_forward.1} parent=0 // pred_check_branch
    %24 = sbr.rel (0) target = $region5
  $region4: #{up_forward.1} parent=0 // pred_region
    _
  $region5: #{up_forward.1} parent=0 // pred_fallthru
    _
  // Predicated region
  $region6: #{up_forward.1} parent=0 // pred_check
    _
  $region7: #{up_forward.1} parent=0 // pred_check_branch
    %26 = sbr.rel (0) target = $region9
  $region8: #{up_forward.1} parent=0 // pred_region
    _
  $region9: #{up_forward.1} parent=0 // pred_fallthru
    _
  // Predicated region
  $region10: #{up_forward.1} parent=0 // pred_check
    _
  $region11: #{up_forward.1} parent=0 // pred_check_branch
    %28 = sbr.rel (0) target = $region13
  $region12: #{up_forward.1} parent=0 // pred_region
    _
  $region13: #{up_forward.1} parent=0 // pred_fallthru
    _
  // Predicated region
  $region14: #{up_forward.1} parent=0 // pred_check
    _
  $region15: #{up_forward.1} parent=0 // pred_check_branch
    %30 = sbr.rel (0) target = $region17
  $region16: #{up_forward.1} parent=0 // pred_region
    _
  $region17: #{up_forward.1} parent=0 // pred_fallthru
    _
  // Predicated region
  $region18: #{up_forward.1} parent=0 // pred_check
    _
  $region19: #{up_forward.1} parent=0 // pred_check_branch
    %32 = sbr.rel (0) target = $region21
  $region20: #{up_forward.1} parent=0 // pred_region
    _
  $region21: #{up_forward.1} parent=0 // pred_fallthru
    _
  // Predicated region
  $region22: #{up_forward.1} parent=0 // pred_check
    _
  $region23: #{up_forward.1} parent=0 // pred_check_branch
    %34 = sbr.rel (0) target = $region25
  $region24: #{up_forward.1} parent=0 // pred_region
    _
  $region25: #{up_forward.1} parent=0 // pred_fallthru
    _
  // Predicated region
  $region26: #{up_forward.1} parent=0 // pred_check
    _
  $region27: #{up_forward.1} parent=0 // pred_check_branch
    %36 = sbr.rel (0) target = $region29
  $region28: #{up_forward.1} parent=0 // pred_region
    _
  $region29: #{up_forward.1} parent=0 // pred_fallthru
    _
  // Predicated region
  $region30: #{up_forward.1} parent=0 // pred_check
    _
  $region31: #{up_forward.1} parent=0 // pred_check_branch
    %38 = sbr.rel (0) target = $region33
  $region32: #{up_forward.1} parent=0 // pred_region
    _
  $region33: #{up_forward.1} parent=0 // pred_fallthru
    _
  // Predicated region
  $region34: #{up_forward.1} parent=0 // pred_check
    _
  $region35: #{up_forward.1} parent=0 // pred_check_branch
    %40 = sbr.rel (0) target = $region37
  $region36: #{up_forward.1} parent=0 // pred_region
    _
  $region37: #{up_forward.1} parent=0 // pred_fallthru
    _
  // Predicated region
  $region38: #{up_forward.1} parent=0 // pred_check
    _
  $region39: #{up_forward.1} parent=0 // pred_check_branch
    %42 = sbr.rel (0) target = $region41
  $region40: #{up_forward.1} parent=0 // pred_region
    _
  $region41: #{up_forward.1} parent=0 // pred_fallthru
    _
  // Predicated region
  $region42: #{up_forward.1} parent=0 // pred_check
    _
  $region43: #{up_forward.1} parent=0 // pred_check_branch
    %44 = sbr.rel (0) target = $region45
  $region44: #{up_forward.1} parent=0 // pred_region
    _
  $region45: #{up_forward.1} parent=0 // pred_fallthru
    _
  // Predicated region
  $region46: #{up_forward.1} parent=0 // pred_check
    _
  $region47: #{up_forward.1} parent=0 // pred_check_branch
    %46 = sbr.rel (0) target = $region49
  $region48: #{up_forward.1} parent=0 // pred_region
    _
  $region49: #{up_forward.1} parent=0 // pred_fallthru
    _
  // Predicated region
  $region50: #{up_forward.1} parent=0 // pred_check
    _
  $region51: #{up_forward.1} parent=0 // pred_check_branch
    %48 = sbr.rel (0) target = $region53
  $region52: #{up_forward.1} parent=0 // pred_region
    _
  $region53: #{up_forward.1} parent=0 // pred_fallthru
    _
  // Predicated region
  $region54: #{up_forward.1} parent=0 // pred_check
    _
  $region55: #{up_forward.1} parent=0 // pred_check_branch
    %50 = sbr.rel (0) target = $region57
  $region56: #{up_forward.1} parent=0 // pred_region
    _
  $region57: #{up_forward.1} parent=0 // pred_fallthru
    _
  // Predicated region
  $region58: #{up_forward.1} parent=0 // pred_check
    _
  $region59: #{up_forward.1} parent=0 // pred_check_branch
    %52 = sbr.rel (0) target = $region61
  $region60: #{up_forward.1} parent=0 // pred_region
    _
  $region61: #{up_forward.1} parent=0 // pred_fallthru
    _
  // Predicated region
  $region62: #{up_forward.1} parent=0 // pred_check
    _
  $region63: #{up_forward.1} parent=0 // pred_check_branch
    %54 = sbr.rel (0) target = $region65
  $region64: #{up_forward.1} parent=0 // pred_region
    _
  $region65: #{up_forward.1} parent=0 // pred_fallthru
    _
  // Predicated region
  $region66: #{up_forward.1} parent=0 // pred_check
    _
  $region67: #{up_forward.1} parent=0 // pred_check_branch
    %56 = sbr.rel (0) target = $region69
  $region68: #{up_forward.1} parent=0 // pred_region
    _
  $region69: #{up_forward.1} parent=0 // pred_fallthru
    _
  // Predicated region
  $region70: #{up_forward.1} parent=0 // pred_check
    _
  $region71: #{up_forward.1} parent=0 // pred_check_branch
    %58 = sbr.rel (0) target = $region73
  $region72: #{up_forward.1} parent=0 // pred_region
    _
  $region73: #{up_forward.1} parent=0 // pred_fallthru
    _
  %vm59 = vcmask 523264
  %60 = vst.msk [vmem:[#allocation2] sm:$0xff] %vm59, 0.0
  %61 = vst.msk [vmem:[#allocation2 + $0x8] sm:$0xff] %vm59, 0.0
  %vm62 = vcmask 517120
  %63 = vst.msk [vmem:[#allocation2 + $0x10] sm:$0x3] %vm62, 0.0
  %64 = vst.msk [vmem:[#allocation2 + $0x18] sm:$0xff] %vm59, 0.0
  %65 = vst.msk [vmem:[#allocation2 + $0x20] sm:$0xff] %vm59, 0.0
  %66 = vst.msk [vmem:[#allocation2 + $0x28] sm:$0x3] %vm62, 0.0
  %67 = vst.msk [vmem:[#allocation3] sm:$0xff] %vm59, 0.0
  %68 = vst.msk [vmem:[#allocation3 + $0x8] sm:$0xff] %vm59, 0.0
  %69 = vst.msk [vmem:[#allocation3 + $0x10] sm:$0x3] %vm62, 0.0
  %70 = vst.msk [vmem:[#allocation3 + $0x18] sm:$0xff] %vm59, 0.0
  %71 = vst.msk [vmem:[#allocation3 + $0x20] sm:$0xff] %vm59, 0.0
  %72 = vst.msk [vmem:[#allocation3 + $0x28] sm:$0x3] %vm62, 0.0
  %73 = vst [vmem:[#allocation4] sm:$0xff] 0.0
  %74 = vst [vmem:[#allocation4 + $0x8] sm:$0xff] 0.0
  %75 = vst [vmem:[#allocation4 + $0x10] sm:$0x3] 0.0
  %76 = vst [vmem:[#allocation4 + $0x18] sm:$0xff] 0.0
  %77 = vst [vmem:[#allocation4 + $0x20] sm:$0xff] 0.0
  %78 = vst [vmem:[#allocation4 + $0x28] sm:$0x3] 0.0
  %v79 = vld [vmem:[%s1] sm:$0xff]
  %v80 = vld [vmem:[%s1 + $0x8] sm:$0xff]
  %81 = vst.msk [vmem:[#allocation2 + $0x1] sm:$0xff] %vm59, %v79
  %82 = vst.msk [vmem:[#allocation2 + $0x9] sm:$0xff] %vm59, %v80
  %s83 = scalar_lea.vmem %s1, 16
  %v84 = vld [vmem:[%s83] sm:$0xff]
  %v85 = vld [vmem:[%s83 + $0x8] sm:$0xff]
  %s86 = scalar_lea.vmem [#allocation2], 24
  %87 = vst.msk [vmem:[%s86 + $0x1] sm:$0xff] %vm59, %v84
  %88 = vst.msk [vmem:[%s86 + $0x9] sm:$0xff] %vm59, %v85
  %v89 = vld [vmem:[%s2] sm:$0xff]
  %v90 = vld [vmem:[%s2 + $0x8] sm:$0xff]
  %v91 = vld [vmem:[%s2 + $0x10] sm:$0xff]
  %v92 = vld [vmem:[%s2 + $0x18] sm:$0xff]
  %v93 = vld [vmem:[%s3] sm:$0xff]
  %v94 = vld [vmem:[%s3 + $0x8] sm:$0xff]
  %v95 = vld [vmem:[%s3 + $0x10] sm:$0xff]
  %v96 = vld [vmem:[%s3 + $0x18] sm:$0xff]
  %v97 = vld [vmem:[%s5] sm:$0xff]
  %v98 = vld [vmem:[%s5 + $0x8] sm:$0xff]
  %v99 = vld [vmem:[%s6] sm:$0xff]
  %v100 = vld [vmem:[%s6 + $0x8] sm:$0xff]
  %v101 = vld [vmem:[%s4] sm:$0x1]
  %v102 = vld [vmem:[%s0] sm:$0xff]
  %vm103 = vcmask 261120
  %v105 = vsel %vm103, %v102, 0
  %107 = vmatprep.subr.mxu0 0.0
  %108 = vmatpush1.msra.mxu0 0.0
  %109 = vmatprep.subr.mxu0 0.0
  %110 = vmatpush1.msra.mxu0 0.0
  %111 = vmatprep.subr.mxu0 0.0
  %112 = vmatpush1.msra.mxu0 0.0
  %113 = vmatprep.subr.mxu0 0.0
  %114 = vmatpush1.msra.mxu0 0.0
  %115 = vmatprep.subr.mxu0 0.0
  %116 = vmatpush1.msra.mxu0 0.0
  %117 = vmatprep.subr.mxu0 0.0
  %118 = vmatpush1.msra.mxu0 0.0
  %119 = vmatprep.subr.mxu0 0.0
  %120 = vmatpush1.msra.mxu0 0.0
  %121 = vmatprep.subr.mxu0 0.0
  %122 = vmatpush1.msra.mxu0 0.0
  %123 = vmatprep.subr.mxu0 0.0
  %124 = vmatpush1.msra.mxu0 0.0
  %125 = vmatprep.subr.mxu0 0.0
  %126 = vmatpush1.msra.mxu0 0.0
  %127 = vmatprep.subr.mxu0 0.0
  %128 = vmatpush1.msra.mxu0 0.0
  %129 = vmatprep.subr.mxu0 0.0
  %130 = vmatpush1.msra.mxu0 0.0
  %131 = vmatprep.subr.mxu0 0.0
  %132 = vmatpush1.msra.mxu0 %v92
  %133 = vmatprep.subr.mxu0 0.0
  %134 = vmatpush1.msra.mxu0 %v91
  %135 = vmatprep.subr.mxu0 0.0
  %136 = vmatpush1.msra.mxu0 %v90
  %137 = vmatprep.subr.mxu0 0.0
  %138 = vmatpush1.msra.mxu0 %v89
  %139 = vmatprep.subr.mxu0 0.0
  %140 = vmatpush2.msra.mxu0 0.0
  %141 = vmatprep.subr.mxu0 0.0
  %142 = vmatpush2.msra.mxu0 0.0
  %143 = vmatprep.subr.mxu0 0.0
  %144 = vmatpush2.msra.mxu0 0.0
  %145 = vmatprep.subr.mxu0 0.0
  %146 = vmatpush2.msra.mxu0 0.0
  %147 = vmatprep.subr.mxu0 0.0
  %148 = vmatpush2.msra.mxu0 0.0
  %149 = vmatprep.subr.mxu0 0.0
  %150 = vmatpush2.msra.mxu0 0.0
  %151 = vmatprep.subr.mxu0 0.0
  %152 = vmatpush2.msra.mxu0 0.0
  %153 = vmatprep.subr.mxu0 0.0
  %154 = vmatpush2.msra.mxu0 0.0
  %155 = vmatprep.subr.mxu0 0.0
  %156 = vmatpush2.msra.mxu0 0.0
  %157 = vmatprep.subr.mxu0 0.0
  %158 = vmatpush2.msra.mxu0 0.0
  %159 = vmatprep.subr.mxu0 0.0
  %160 = vmatpush2.msra.mxu0 0.0
  %161 = vmatprep.subr.mxu0 0.0
  %162 = vmatpush2.msra.mxu0 0.0
  %163 = vmatprep.subr.mxu0 0.0
  %164 = vmatpush2.msra.mxu0 0.0
  %165 = vmatprep.subr.mxu0 0.0
  %166 = vmatpush2.msra.mxu0 0.0
  %167 = vmatprep.subr.mxu0 0.0
  %168 = vmatpush2.msra.mxu0 0.0
  %169 = vmatprep.subr.mxu0 0.0
  %170 = vmatpush2.msra.mxu0 0.0
  %171 = vmatprep.mubr.f32.mxu0 0.0
  %172 = vmatmul.mubr.f32.gmra.mxu0 %v105
  %v173 = vpop.f32.mrf.mxu0
  %v174 = vadd.f32 0.0, %v173
  %v175 = vpop.f32.mrf.mxu0
  %176 = vdwg.mxu0
  %177 = vmatprep.subr.mxu0 0.0
  %178 = vmatpush1.msra.mxu0 0.0
  %179 = vmatprep.subr.mxu0 0.0
  %180 = vmatpush1.msra.mxu0 0.0
  %181 = vmatprep.subr.mxu0 0.0
  %182 = vmatpush1.msra.mxu0 0.0
  %183 = vmatprep.subr.mxu0 0.0
  %184 = vmatpush1.msra.mxu0 0.0
  %185 = vmatprep.subr.mxu0 0.0
  %186 = vmatpush1.msra.mxu0 0.0
  %187 = vmatprep.subr.mxu0 0.0
  %188 = vmatpush1.msra.mxu0 0.0
  %189 = vmatprep.subr.mxu0 0.0
  %190 = vmatpush1.msra.mxu0 0.0
  %191 = vmatprep.subr.mxu0 0.0
  %192 = vmatpush1.msra.mxu0 0.0
  %193 = vmatprep.subr.mxu0 0.0
  %194 = vmatpush1.msra.mxu0 0.0
  %195 = vmatprep.subr.mxu0 0.0
  %196 = vmatpush1.msra.mxu0 0.0
  %197 = vmatprep.subr.mxu0 0.0
  %198 = vmatpush1.msra.mxu0 0.0
  %199 = vmatprep.subr.mxu0 0.0
  %200 = vmatpush1.msra.mxu0 0.0
  %201 = vmatprep.subr.mxu0 0.0
  %202 = vmatpush1.msra.mxu0 %v96
  %203 = vmatprep.subr.mxu0 0.0
  %204 = vmatpush1.msra.mxu0 %v95
  %205 = vmatprep.subr.mxu0 0.0
  %206 = vmatpush1.msra.mxu0 %v94
  %207 = vmatprep.subr.mxu0 0.0
  %208 = vmatpush1.msra.mxu0 %v93
  %209 = vmatprep.subr.mxu0 0.0
  %210 = vmatpush2.msra.mxu0 0.0
  %211 = vmatprep.subr.mxu0 0.0
  %212 = vmatpush2.msra.mxu0 0.0
  %213 = vmatprep.subr.mxu0 0.0
  %214 = vmatpush2.msra.mxu0 0.0
  %215 = vmatprep.subr.mxu0 0.0
  %216 = vmatpush2.msra.mxu0 0.0
  %217 = vmatprep.subr.mxu0 0.0
  %218 = vmatpush2.msra.mxu0 0.0
  %219 = vmatprep.subr.mxu0 0.0
  %220 = vmatpush2.msra.mxu0 0.0
  %221 = vmatprep.subr.mxu0 0.0
  %222 = vmatpush2.msra.mxu0 0.0
  %223 = vmatprep.subr.mxu0 0.0
  %224 = vmatpush2.msra.mxu0 0.0
  %225 = vmatprep.subr.mxu0 0.0
  %226 = vmatpush2.msra.mxu0 0.0
  %227 = vmatprep.subr.mxu0 0.0
  %228 = vmatpush2.msra.mxu0 0.0
  %229 = vmatprep.subr.mxu0 0.0
  %230 = vmatpush2.msra.mxu0 0.0
  %231 = vmatprep.subr.mxu0 0.0
  %232 = vmatpush2.msra.mxu0 0.0
  %233 = vmatprep.subr.mxu0 0.0
  %234 = vmatpush2.msra.mxu0 0.0
  %235 = vmatprep.subr.mxu0 0.0
  %236 = vmatpush2.msra.mxu0 0.0
  %237 = vmatprep.subr.mxu0 0.0
  %238 = vmatpush2.msra.mxu0 0.0
  %239 = vmatprep.subr.mxu0 0.0
  %240 = vmatpush2.msra.mxu0 0.0
  %241 = vmatprep.mubr.f32.mxu0 0.0
  %242 = vmatmul.mubr.f32.gmra.mxu0 %v105
  %v243 = vpop.f32.mrf.mxu0
  %v244 = vadd.f32 0.0, %v243
  %v245 = vpop.f32.mrf.mxu0
  %246 = vdwg.mxu0
  %vm247 = vcmask 64512
  %v249 = vsel %vm247, %v99, 0
  %v252 = vsel %vm247, %v100, 0
  %254 = vmatprep.subr.mxu0 0.0
  %255 = vmatpush1.msra.mxu0 0.0
  %256 = vmatprep.subr.mxu0 0.0
  %257 = vmatpush1.msra.mxu0 0.0
  %258 = vmatprep.subr.mxu0 0.0
  %259 = vmatpush1.msra.mxu0 0.0
  %260 = vmatprep.subr.mxu0 0.0
  %261 = vmatpush1.msra.mxu0 0.0
  %262 = vmatprep.subr.mxu0 0.0
  %263 = vmatpush1.msra.mxu0 0.0
  %264 = vmatprep.subr.mxu0 0.0
  %265 = vmatpush1.msra.mxu0 0.0
  %266 = vmatprep.subr.mxu0 0.0
  %267 = vmatpush1.msra.mxu0 0.0
  %268 = vmatprep.subr.mxu0 0.0
  %269 = vmatpush1.msra.mxu0 0.0
  %270 = vmatprep.subr.mxu0 0.0
  %271 = vmatpush1.msra.mxu0 0.0
  %272 = vmatprep.subr.mxu0 0.0
  %273 = vmatpush1.msra.mxu0 0.0
  %274 = vmatprep.subr.mxu0 0.0
  %275 = vmatpush1.msra.mxu0 0.0
  %276 = vmatprep.subr.mxu0 0.0
  %277 = vmatpush1.msra.mxu0 0.0
  %278 = vmatprep.subr.mxu0 0.0
  %279 = vmatpush1.msra.mxu0 0.0
  %280 = vmatprep.subr.mxu0 0.0
  %281 = vmatpush1.msra.mxu0 0.0
  %282 = vmatprep.subr.mxu0 0.0
  %283 = vmatpush1.msra.mxu0 0.0
  %284 = vmatprep.subr.mxu0 0.0
  %285 = vmatpush1.msra.mxu0 %v244
  %286 = vmatprep.subr.mxu0 0.0
  %287 = vmatpush2.msra.mxu0 0.0
  %288 = vmatprep.subr.mxu0 0.0
  %289 = vmatpush2.msra.mxu0 0.0
  %290 = vmatprep.subr.mxu0 0.0
  %291 = vmatpush2.msra.mxu0 0.0
  %292 = vmatprep.subr.mxu0 0.0
  %293 = vmatpush2.msra.mxu0 0.0
  %294 = vmatprep.subr.mxu0 0.0
  %295 = vmatpush2.msra.mxu0 0.0
  %296 = vmatprep.subr.mxu0 0.0
  %297 = vmatpush2.msra.mxu0 0.0
  %298 = vmatprep.subr.mxu0 0.0
  %299 = vmatpush2.msra.mxu0 0.0
  %300 = vmatprep.subr.mxu0 0.0
  %301 = vmatpush2.msra.mxu0 0.0
  %302 = vmatprep.subr.mxu0 0.0
  %303 = vmatpush2.msra.mxu0 0.0
  %304 = vmatprep.subr.mxu0 0.0
  %305 = vmatpush2.msra.mxu0 0.0
  %306 = vmatprep.subr.mxu0 0.0
  %307 = vmatpush2.msra.mxu0 0.0
  %308 = vmatprep.subr.mxu0 0.0
  %309 = vmatpush2.msra.mxu0 0.0
  %310 = vmatprep.subr.mxu0 0.0
  %311 = vmatpush2.msra.mxu0 0.0
  %312 = vmatprep.subr.mxu0 0.0
  %313 = vmatpush2.msra.mxu0 0.0
  %314 = vmatprep.subr.mxu0 0.0
  %315 = vmatpush2.msra.mxu0 0.0
  %316 = vmatprep.subr.mxu0 0.0
  %317 = vmatpush2.msra.mxu0 0.0
  %318 = vmatprep.mubr.f32.mxu0 0.0
  %319 = vmatmul.mubr.f32.gmra.mxu0 %v249
  %v320 = vpop.f32.mrf.mxu0
  %v321 = vadd.f32 0.0, %v320
  %v322 = vpop.f32.mrf.mxu0
  %323 = vmatprep.mubr.f32.mxu0 0.0
  %324 = vmatmul.mubr.f32.gmra.mxu0 %v252
  %v325 = vpop.f32.mrf.mxu0
  %v326 = vadd.f32 0.0, %v325
  %v327 = vpop.f32.mrf.mxu0
  %328 = vdwg.mxu0
  %v330 = vsel %vm247, %v97, 0
  %v333 = vsel %vm247, %v98, 0
  %335 = vmatprep.subr.mxu0 0.0
  %336 = vmatpush1.msra.mxu0 0.0
  %337 = vmatprep.subr.mxu0 0.0
  %338 = vmatpush1.msra.mxu0 0.0
  %339 = vmatprep.subr.mxu0 0.0
  %340 = vmatpush1.msra.mxu0 0.0
  %341 = vmatprep.subr.mxu0 0.0
  %342 = vmatpush1.msra.mxu0 0.0
  %343 = vmatprep.subr.mxu0 0.0
  %344 = vmatpush1.msra.mxu0 0.0
  %345 = vmatprep.subr.mxu0 0.0
  %346 = vmatpush1.msra.mxu0 0.0
  %347 = vmatprep.subr.mxu0 0.0
  %348 = vmatpush1.msra.mxu0 0.0
  %349 = vmatprep.subr.mxu0 0.0
  %350 = vmatpush1.msra.mxu0 0.0
  %351 = vmatprep.subr.mxu0 0.0
  %352 = vmatpush1.msra.mxu0 0.0
  %353 = vmatprep.subr.mxu0 0.0
  %354 = vmatpush1.msra.mxu0 0.0
  %355 = vmatprep.subr.mxu0 0.0
  %356 = vmatpush1.msra.mxu0 0.0
  %357 = vmatprep.subr.mxu0 0.0
  %358 = vmatpush1.msra.mxu0 0.0
  %359 = vmatprep.subr.mxu0 0.0
  %360 = vmatpush1.msra.mxu0 0.0
  %361 = vmatprep.subr.mxu0 0.0
  %362 = vmatpush1.msra.mxu0 0.0
  %363 = vmatprep.subr.mxu0 0.0
  %364 = vmatpush1.msra.mxu0 0.0
  %365 = vmatprep.subr.mxu0 0.0
  %366 = vmatpush1.msra.mxu0 %v174
  %367 = vmatprep.subr.mxu0 0.0
  %368 = vmatpush2.msra.mxu0 0.0
  %369 = vmatprep.subr.mxu0 0.0
  %370 = vmatpush2.msra.mxu0 0.0
  %371 = vmatprep.subr.mxu0 0.0
  %372 = vmatpush2.msra.mxu0 0.0
  %373 = vmatprep.subr.mxu0 0.0
  %374 = vmatpush2.msra.mxu0 0.0
  %375 = vmatprep.subr.mxu0 0.0
  %376 = vmatpush2.msra.mxu0 0.0
  %377 = vmatprep.subr.mxu0 0.0
  %378 = vmatpush2.msra.mxu0 0.0
  %379 = vmatprep.subr.mxu0 0.0
  %380 = vmatpush2.msra.mxu0 0.0
  %381 = vmatprep.subr.mxu0 0.0
  %382 = vmatpush2.msra.mxu0 0.0
  %383 = vmatprep.subr.mxu0 0.0
  %384 = vmatpush2.msra.mxu0 0.0
  %385 = vmatprep.subr.mxu0 0.0
  %386 = vmatpush2.msra.mxu0 0.0
  %387 = vmatprep.subr.mxu0 0.0
  %388 = vmatpush2.msra.mxu0 0.0
  %389 = vmatprep.subr.mxu0 0.0
  %390 = vmatpush2.msra.mxu0 0.0
  %391 = vmatprep.subr.mxu0 0.0
  %392 = vmatpush2.msra.mxu0 0.0
  %393 = vmatprep.subr.mxu0 0.0
  %394 = vmatpush2.msra.mxu0 0.0
  %395 = vmatprep.subr.mxu0 0.0
  %396 = vmatpush2.msra.mxu0 0.0
  %397 = vmatprep.subr.mxu0 0.0
  %398 = vmatpush2.msra.mxu0 0.0
  %399 = vmatprep.mubr.f32.mxu0 0.0
  %400 = vmatmul.mubr.f32.gmra.mxu0 %v330
  %v401 = vpop.f32.mrf.mxu0
  %v402 = vadd.f32 %v321, %v401
  %v403 = vpop.f32.mrf.mxu0
  %404 = vmatprep.mubr.f32.mxu0 0.0
  %405 = vmatmul.mubr.f32.gmra.mxu0 %v333
  %v406 = vpop.f32.mrf.mxu0
  %v407 = vadd.f32 %v326, %v406
  %v408 = vpop.f32.mrf.mxu0
  %409 = vdwg.mxu0
  %v411 = vlaneseq
  %v412 = vshrl.u32 %v411, 7
  %v413 = vsub.s32 0, %v412
  %v414 = vrot.slane %v101, %v413
  %v416 = vadd.f32 %v402, %v414
  %v417 = vadd.f32 %v407, %v414
  %418 = vst.msk [vmem:[#allocation3 + $0x1] sm:$0xff] %vm59, %v416
  %419 = vst.msk [vmem:[#allocation3 + $0x9] sm:$0xff] %vm59, %v417
  %s420 = scalar_lea.vmem %s0, 8
  %v421 = vld [vmem:[%s420] sm:$0xff]
  %v423 = vsel %vm103, %v421, 0
  %425 = vmatprep.subr.mxu0 0.0
  %426 = vmatpush1.msra.mxu0 0.0
  %427 = vmatprep.subr.mxu0 0.0
  %428 = vmatpush1.msra.mxu0 0.0
  %429 = vmatprep.subr.mxu0 0.0
  %430 = vmatpush1.msra.mxu0 0.0
  %431 = vmatprep.subr.mxu0 0.0
  %432 = vmatpush1.msra.mxu0 0.0
  %433 = vmatprep.subr.mxu0 0.0
  %434 = vmatpush1.msra.mxu0 0.0
  %435 = vmatprep.subr.mxu0 0.0
  %436 = vmatpush1.msra.mxu0 0.0
  %437 = vmatprep.subr.mxu0 0.0
  %438 = vmatpush1.msra.mxu0 0.0
  %439 = vmatprep.subr.mxu0 0.0
  %440 = vmatpush1.msra.mxu0 0.0
  %441 = vmatprep.subr.mxu0 0.0
  %442 = vmatpush1.msra.mxu0 0.0
  %443 = vmatprep.subr.mxu0 0.0
  %444 = vmatpush1.msra.mxu0 0.0
  %445 = vmatprep.subr.mxu0 0.0
  %446 = vmatpush1.msra.mxu0 0.0
  %447 = vmatprep.subr.mxu0 0.0
  %448 = vmatpush1.msra.mxu0 0.0
  %449 = vmatprep.subr.mxu0 0.0
  %450 = vmatpush1.msra.mxu0 %v92
  %451 = vmatprep.subr.mxu0 0.0
  %452 = vmatpush1.msra.mxu0 %v91
  %453 = vmatprep.subr.mxu0 0.0
  %454 = vmatpush1.msra.mxu0 %v90
  %455 = vmatprep.subr.mxu0 0.0
  %456 = vmatpush1.msra.mxu0 %v89
  %457 = vmatprep.subr.mxu0 0.0
  %458 = vmatpush2.msra.mxu0 0.0
  %459 = vmatprep.subr.mxu0 0.0
  %460 = vmatpush2.msra.mxu0 0.0
  %461 = vmatprep.subr.mxu0 0.0
  %462 = vmatpush2.msra.mxu0 0.0
  %463 = vmatprep.subr.mxu0 0.0
  %464 = vmatpush2.msra.mxu0 0.0
  %465 = vmatprep.subr.mxu0 0.0
  %466 = vmatpush2.msra.mxu0 0.0
  %467 = vmatprep.subr.mxu0 0.0
  %468 = vmatpush2.msra.mxu0 0.0
  %469 = vmatprep.subr.mxu0 0.0
  %470 = vmatpush2.msra.mxu0 0.0
  %471 = vmatprep.subr.mxu0 0.0
  %472 = vmatpush2.msra.mxu0 0.0
  %473 = vmatprep.subr.mxu0 0.0
  %474 = vmatpush2.msra.mxu0 0.0
  %475 = vmatprep.subr.mxu0 0.0
  %476 = vmatpush2.msra.mxu0 0.0
  %477 = vmatprep.subr.mxu0 0.0
  %478 = vmatpush2.msra.mxu0 0.0
  %479 = vmatprep.subr.mxu0 0.0
  %480 = vmatpush2.msra.mxu0 0.0
  %481 = vmatprep.subr.mxu0 0.0
  %482 = vmatpush2.msra.mxu0 0.0
  %483 = vmatprep.subr.mxu0 0.0
  %484 = vmatpush2.msra.mxu0 0.0
  %485 = vmatprep.subr.mxu0 0.0
  %486 = vmatpush2.msra.mxu0 0.0
  %487 = vmatprep.subr.mxu0 0.0
  %488 = vmatpush2.msra.mxu0 0.0
  %489 = vmatprep.mubr.f32.mxu0 0.0
  %490 = vmatmul.mubr.f32.gmra.mxu0 %v423
  %v491 = vpop.f32.mrf.mxu0
  %v492 = vadd.f32 0.0, %v491
  %v493 = vpop.f32.mrf.mxu0
  %494 = vdwg.mxu0
  %495 = vmatprep.subr.mxu0 0.0
  %496 = vmatpush1.msra.mxu0 0.0
  %497 = vmatprep.subr.mxu0 0.0
  %498 = vmatpush1.msra.mxu0 0.0
  %499 = vmatprep.subr.mxu0 0.0
  %500 = vmatpush1.msra.mxu0 0.0
  %501 = vmatprep.subr.mxu0 0.0
  %502 = vmatpush1.msra.mxu0 0.0
  %503 = vmatprep.subr.mxu0 0.0
  %504 = vmatpush1.msra.mxu0 0.0
  %505 = vmatprep.subr.mxu0 0.0
  %506 = vmatpush1.msra.mxu0 0.0
  %507 = vmatprep.subr.mxu0 0.0
  %508 = vmatpush1.msra.mxu0 0.0
  %509 = vmatprep.subr.mxu0 0.0
  %510 = vmatpush1.msra.mxu0 0.0
  %511 = vmatprep.subr.mxu0 0.0
  %512 = vmatpush1.msra.mxu0 0.0
  %513 = vmatprep.subr.mxu0 0.0
  %514 = vmatpush1.msra.mxu0 0.0
  %515 = vmatprep.subr.mxu0 0.0
  %516 = vmatpush1.msra.mxu0 0.0
  %517 = vmatprep.subr.mxu0 0.0
  %518 = vmatpush1.msra.mxu0 0.0
  %519 = vmatprep.subr.mxu0 0.0
  %520 = vmatpush1.msra.mxu0 %v96
  %521 = vmatprep.subr.mxu0 0.0
  %522 = vmatpush1.msra.mxu0 %v95
  %523 = vmatprep.subr.mxu0 0.0
  %524 = vmatpush1.msra.mxu0 %v94
  %525 = vmatprep.subr.mxu0 0.0
  %526 = vmatpush1.msra.mxu0 %v93
  %527 = vmatprep.subr.mxu0 0.0
  %528 = vmatpush2.msra.mxu0 0.0
  %529 = vmatprep.subr.mxu0 0.0
  %530 = vmatpush2.msra.mxu0 0.0
  %531 = vmatprep.subr.mxu0 0.0
  %532 = vmatpush2.msra.mxu0 0.0
  %533 = vmatprep.subr.mxu0 0.0
  %534 = vmatpush2.msra.mxu0 0.0
  %535 = vmatprep.subr.mxu0 0.0
  %536 = vmatpush2.msra.mxu0 0.0
  %537 = vmatprep.subr.mxu0 0.0
  %538 = vmatpush2.msra.mxu0 0.0
  %539 = vmatprep.subr.mxu0 0.0
  %540 = vmatpush2.msra.mxu0 0.0
  %541 = vmatprep.subr.mxu0 0.0
  %542 = vmatpush2.msra.mxu0 0.0
  %543 = vmatprep.subr.mxu0 0.0
  %544 = vmatpush2.msra.mxu0 0.0
  %545 = vmatprep.subr.mxu0 0.0
  %546 = vmatpush2.msra.mxu0 0.0
  %547 = vmatprep.subr.mxu0 0.0
  %548 = vmatpush2.msra.mxu0 0.0
  %549 = vmatprep.subr.mxu0 0.0
  %550 = vmatpush2.msra.mxu0 0.0
  %551 = vmatprep.subr.mxu0 0.0
  %552 = vmatpush2.msra.mxu0 0.0
  %553 = vmatprep.subr.mxu0 0.0
  %554 = vmatpush2.msra.mxu0 0.0
  %555 = vmatprep.subr.mxu0 0.0
  %556 = vmatpush2.msra.mxu0 0.0
  %557 = vmatprep.subr.mxu0 0.0
  %558 = vmatpush2.msra.mxu0 0.0
  %559 = vmatprep.mubr.f32.mxu0 0.0
  %560 = vmatmul.mubr.f32.gmra.mxu0 %v423
  %v561 = vpop.f32.mrf.mxu0
  %v562 = vadd.f32 0.0, %v561
  %v563 = vpop.f32.mrf.mxu0
  %564 = vdwg.mxu0
  %565 = vmatprep.subr.mxu0 0.0
  %566 = vmatpush1.msra.mxu0 0.0
  %567 = vmatprep.subr.mxu0 0.0
  %568 = vmatpush1.msra.mxu0 0.0
  %569 = vmatprep.subr.mxu0 0.0
  %570 = vmatpush1.msra.mxu0 0.0
  %571 = vmatprep.subr.mxu0 0.0
  %572 = vmatpush1.msra.mxu0 0.0
  %573 = vmatprep.subr.mxu0 0.0
  %574 = vmatpush1.msra.mxu0 0.0
  %575 = vmatprep.subr.mxu0 0.0
  %576 = vmatpush1.msra.mxu0 0.0
  %577 = vmatprep.subr.mxu0 0.0
  %578 = vmatpush1.msra.mxu0 0.0
  %579 = vmatprep.subr.mxu0 0.0
  %580 = vmatpush1.msra.mxu0 0.0
  %581 = vmatprep.subr.mxu0 0.0
  %582 = vmatpush1.msra.mxu0 0.0
  %583 = vmatprep.subr.mxu0 0.0
  %584 = vmatpush1.msra.mxu0 0.0
  %585 = vmatprep.subr.mxu0 0.0
  %586 = vmatpush1.msra.mxu0 0.0
  %587 = vmatprep.subr.mxu0 0.0
  %588 = vmatpush1.msra.mxu0 0.0
  %589 = vmatprep.subr.mxu0 0.0
  %590 = vmatpush1.msra.mxu0 0.0
  %591 = vmatprep.subr.mxu0 0.0
  %592 = vmatpush1.msra.mxu0 0.0
  %593 = vmatprep.subr.mxu0 0.0
  %594 = vmatpush1.msra.mxu0 0.0
  %595 = vmatprep.subr.mxu0 0.0
  %596 = vmatpush1.msra.mxu0 %v562
  %597 = vmatprep.subr.mxu0 0.0
  %598 = vmatpush2.msra.mxu0 0.0
  %599 = vmatprep.subr.mxu0 0.0
  %600 = vmatpush2.msra.mxu0 0.0
  %601 = vmatprep.subr.mxu0 0.0
  %602 = vmatpush2.msra.mxu0 0.0
  %603 = vmatprep.subr.mxu0 0.0
  %604 = vmatpush2.msra.mxu0 0.0
  %605 = vmatprep.subr.mxu0 0.0
  %606 = vmatpush2.msra.mxu0 0.0
  %607 = vmatprep.subr.mxu0 0.0
  %608 = vmatpush2.msra.mxu0 0.0
  %609 = vmatprep.subr.mxu0 0.0
  %610 = vmatpush2.msra.mxu0 0.0
  %611 = vmatprep.subr.mxu0 0.0
  %612 = vmatpush2.msra.mxu0 0.0
  %613 = vmatprep.subr.mxu0 0.0
  %614 = vmatpush2.msra.mxu0 0.0
  %615 = vmatprep.subr.mxu0 0.0
  %616 = vmatpush2.msra.mxu0 0.0
  %617 = vmatprep.subr.mxu0 0.0
  %618 = vmatpush2.msra.mxu0 0.0
  %619 = vmatprep.subr.mxu0 0.0
  %620 = vmatpush2.msra.mxu0 0.0
  %621 = vmatprep.subr.mxu0 0.0
  %622 = vmatpush2.msra.mxu0 0.0
  %623 = vmatprep.subr.mxu0 0.0
  %624 = vmatpush2.msra.mxu0 0.0
  %625 = vmatprep.subr.mxu0 0.0
  %626 = vmatpush2.msra.mxu0 0.0
  %627 = vmatprep.subr.mxu0 0.0
  %628 = vmatpush2.msra.mxu0 0.0
  %629 = vmatprep.mubr.f32.mxu0 0.0
  %630 = vmatmul.mubr.f32.gmra.mxu0 %v249
  %v631 = vpop.f32.mrf.mxu0
  %v632 = vadd.f32 0.0, %v631
  %v633 = vpop.f32.mrf.mxu0
  %634 = vmatprep.mubr.f32.mxu0 0.0
  %635 = vmatmul.mubr.f32.gmra.mxu0 %v252
  %v636 = vpop.f32.mrf.mxu0
  %v637 = vadd.f32 0.0, %v636
  %v638 = vpop.f32.mrf.mxu0
  %639 = vdwg.mxu0
  %640 = vmatprep.subr.mxu0 0.0
  %641 = vmatpush1.msra.mxu0 0.0
  %642 = vmatprep.subr.mxu0 0.0
  %643 = vmatpush1.msra.mxu0 0.0
  %644 = vmatprep.subr.mxu0 0.0
  %645 = vmatpush1.msra.mxu0 0.0
  %646 = vmatprep.subr.mxu0 0.0
  %647 = vmatpush1.msra.mxu0 0.0
  %648 = vmatprep.subr.mxu0 0.0
  %649 = vmatpush1.msra.mxu0 0.0
  %650 = vmatprep.subr.mxu0 0.0
  %651 = vmatpush1.msra.mxu0 0.0
  %652 = vmatprep.subr.mxu0 0.0
  %653 = vmatpush1.msra.mxu0 0.0
  %654 = vmatprep.subr.mxu0 0.0
  %655 = vmatpush1.msra.mxu0 0.0
  %656 = vmatprep.subr.mxu0 0.0
  %657 = vmatpush1.msra.mxu0 0.0
  %658 = vmatprep.subr.mxu0 0.0
  %659 = vmatpush1.msra.mxu0 0.0
  %660 = vmatprep.subr.mxu0 0.0
  %661 = vmatpush1.msra.mxu0 0.0
  %662 = vmatprep.subr.mxu0 0.0
  %663 = vmatpush1.msra.mxu0 0.0
  %664 = vmatprep.subr.mxu0 0.0
  %665 = vmatpush1.msra.mxu0 0.0
  %666 = vmatprep.subr.mxu0 0.0
  %667 = vmatpush1.msra.mxu0 0.0
  %668 = vmatprep.subr.mxu0 0.0
  %669 = vmatpush1.msra.mxu0 0.0
  %670 = vmatprep.subr.mxu0 0.0
  %671 = vmatpush1.msra.mxu0 %v492
  %672 = vmatprep.subr.mxu0 0.0
  %673 = vmatpush2.msra.mxu0 0.0
  %674 = vmatprep.subr.mxu0 0.0
  %675 = vmatpush2.msra.mxu0 0.0
  %676 = vmatprep.subr.mxu0 0.0
  %677 = vmatpush2.msra.mxu0 0.0
  %678 = vmatprep.subr.mxu0 0.0
  %679 = vmatpush2.msra.mxu0 0.0
  %680 = vmatprep.subr.mxu0 0.0
  %681 = vmatpush2.msra.mxu0 0.0
  %682 = vmatprep.subr.mxu0 0.0
  %683 = vmatpush2.msra.mxu0 0.0
  %684 = vmatprep.subr.mxu0 0.0
  %685 = vmatpush2.msra.mxu0 0.0
  %686 = vmatprep.subr.mxu0 0.0
  %687 = vmatpush2.msra.mxu0 0.0
  %688 = vmatprep.subr.mxu0 0.0
  %689 = vmatpush2.msra.mxu0 0.0
  %690 = vmatprep.subr.mxu0 0.0
  %691 = vmatpush2.msra.mxu0 0.0
  %692 = vmatprep.subr.mxu0 0.0
  %693 = vmatpush2.msra.mxu0 0.0
  %694 = vmatprep.subr.mxu0 0.0
  %695 = vmatpush2.msra.mxu0 0.0
  %696 = vmatprep.subr.mxu0 0.0
  %697 = vmatpush2.msra.mxu0 0.0
  %698 = vmatprep.subr.mxu0 0.0
  %699 = vmatpush2.msra.mxu0 0.0
  %700 = vmatprep.subr.mxu0 0.0
  %701 = vmatpush2.msra.mxu0 0.0
  %702 = vmatprep.subr.mxu0 0.0
  %703 = vmatpush2.msra.mxu0 0.0
  %704 = vmatprep.mubr.f32.mxu0 0.0
  %705 = vmatmul.mubr.f32.gmra.mxu0 %v330
  %v706 = vpop.f32.mrf.mxu0
  %v707 = vadd.f32 %v632, %v706
  %v708 = vpop.f32.mrf.mxu0
  %709 = vmatprep.mubr.f32.mxu0 0.0
  %710 = vmatmul.mubr.f32.gmra.mxu0 %v333
  %v711 = vpop.f32.mrf.mxu0
  %v712 = vadd.f32 %v637, %v711
  %v713 = vpop.f32.mrf.mxu0
  %714 = vdwg.mxu0
  %v715 = vadd.f32 %v707, %v414
  %v716 = vadd.f32 %v712, %v414
  %s717 = scalar_lea.vmem [#allocation3], 24
  %718 = vst.msk [vmem:[%s717 + $0x1] sm:$0xff] %vm59, %v715
  %719 = vst.msk [vmem:[%s717 + $0x9] sm:$0xff] %vm59, %v716
  %v720 = vld [vmem:[%s9] sm:$0x1]
  %v721 = vld [vmem:[#allocation2] sm:$0xff]
  %v722 = vld [vmem:[#allocation2 + $0x8] sm:$0xff]
  %v723 = vld [vmem:[%s7] sm:$0xff]
  %v724 = vld [vmem:[%s7 + $0x8] sm:$0xff]
  %v725 = vld [vmem:[%s7 + $0x10] sm:$0xff]
  %v726 = vld [vmem:[%s7 + $0x18] sm:$0xff]
  %v727 = vld [vmem:[%s7 + $0x20] sm:$0xff]
  %v728 = vld [vmem:[%s7 + $0x28] sm:$0xff]
  %v729 = vld [vmem:[%s7 + $0x30] sm:$0xff]
  %v730 = vld [vmem:[%s7 + $0x38] sm:$0xff]
  %v731 = vld [vmem:[#allocation3] sm:$0xff]
  %v732 = vld [vmem:[#allocation3 + $0x8] sm:$0xff]
  %v733 = vld [vmem:[%s8] sm:$0xff]
  %v734 = vld [vmem:[%s8 + $0x8] sm:$0xff]
  %v735 = vld [vmem:[%s8 + $0x10] sm:$0xff]
  %v736 = vld [vmem:[%s8 + $0x18] sm:$0xff]
  %v737 = vld [vmem:[%s8 + $0x20] sm:$0xff]
  %v738 = vld [vmem:[%s8 + $0x28] sm:$0xff]
  %v739 = vld [vmem:[%s8 + $0x30] sm:$0xff]
  %v740 = vld [vmem:[%s8 + $0x38] sm:$0xff]
  %v742 = vsel %vm59, %v731, 0
  %v745 = vsel %vm59, %v732, 0
  %747 = vmatprep.subr.mxu0 0.0
  %748 = vmatpush1.msra.mxu0 0.0
  %749 = vmatprep.subr.mxu0 0.0
  %750 = vmatpush1.msra.mxu0 0.0
  %751 = vmatprep.subr.mxu0 0.0
  %752 = vmatpush1.msra.mxu0 0.0
  %753 = vmatprep.subr.mxu0 0.0
  %754 = vmatpush1.msra.mxu0 0.0
  %755 = vmatprep.subr.mxu0 0.0
  %756 = vmatpush1.msra.mxu0 0.0
  %757 = vmatprep.subr.mxu0 0.0
  %758 = vmatpush1.msra.mxu0 0.0
  %759 = vmatprep.subr.mxu0 0.0
  %760 = vmatpush1.msra.mxu0 0.0
  %761 = vmatprep.subr.mxu0 0.0
  %762 = vmatpush1.msra.mxu0 0.0
  %763 = vmatprep.subr.mxu0 0.0
  %764 = vmatpush1.msra.mxu0 %v740
  %765 = vmatprep.subr.mxu0 0.0
  %766 = vmatpush1.msra.mxu0 %v739
  %767 = vmatprep.subr.mxu0 0.0
  %768 = vmatpush1.msra.mxu0 %v738
  %769 = vmatprep.subr.mxu0 0.0
  %770 = vmatpush1.msra.mxu0 %v737
  %771 = vmatprep.subr.mxu0 0.0
  %772 = vmatpush1.msra.mxu0 %v736
  %773 = vmatprep.subr.mxu0 0.0
  %774 = vmatpush1.msra.mxu0 %v735
  %775 = vmatprep.subr.mxu0 0.0
  %776 = vmatpush1.msra.mxu0 %v734
  %777 = vmatprep.subr.mxu0 0.0
  %778 = vmatpush1.msra.mxu0 %v733
  %779 = vmatprep.subr.mxu0 0.0
  %780 = vmatpush2.msra.mxu0 0.0
  %781 = vmatprep.subr.mxu0 0.0
  %782 = vmatpush2.msra.mxu0 0.0
  %783 = vmatprep.subr.mxu0 0.0
  %784 = vmatpush2.msra.mxu0 0.0
  %785 = vmatprep.subr.mxu0 0.0
  %786 = vmatpush2.msra.mxu0 0.0
  %787 = vmatprep.subr.mxu0 0.0
  %788 = vmatpush2.msra.mxu0 0.0
  %789 = vmatprep.subr.mxu0 0.0
  %790 = vmatpush2.msra.mxu0 0.0
  %791 = vmatprep.subr.mxu0 0.0
  %792 = vmatpush2.msra.mxu0 0.0
  %793 = vmatprep.subr.mxu0 0.0
  %794 = vmatpush2.msra.mxu0 0.0
  %795 = vmatprep.subr.mxu0 0.0
  %796 = vmatpush2.msra.mxu0 0.0
  %797 = vmatprep.subr.mxu0 0.0
  %798 = vmatpush2.msra.mxu0 0.0
  %799 = vmatprep.subr.mxu0 0.0
  %800 = vmatpush2.msra.mxu0 0.0
  %801 = vmatprep.subr.mxu0 0.0
  %802 = vmatpush2.msra.mxu0 0.0
  %803 = vmatprep.subr.mxu0 0.0
  %804 = vmatpush2.msra.mxu0 0.0
  %805 = vmatprep.subr.mxu0 0.0
  %806 = vmatpush2.msra.mxu0 0.0
  %807 = vmatprep.subr.mxu0 0.0
  %808 = vmatpush2.msra.mxu0 0.0
  %809 = vmatprep.subr.mxu0 0.0
  %810 = vmatpush2.msra.mxu0 0.0
  %811 = vmatprep.mubr.f32.mxu0 0.0
  %812 = vmatmul.mubr.f32.gmra.mxu0 %v742
  %v813 = vpop.f32.mrf.mxu0
  %v814 = vadd.f32 0.0, %v813
  %v815 = vpop.f32.mrf.mxu0
  %816 = vmatprep.mubr.f32.mxu0 0.0
  %817 = vmatmul.mubr.f32.gmra.mxu0 %v745
  %v818 = vpop.f32.mrf.mxu0
  %v819 = vadd.f32 0.0, %v818
  %v820 = vpop.f32.mrf.mxu0
  %821 = vdwg.mxu0
  %v823 = vsel %vm59, %v721, 0
  %v826 = vsel %vm59, %v722, 0
  %828 = vmatprep.subr.mxu0 0.0
  %829 = vmatpush1.msra.mxu0 0.0
  %830 = vmatprep.subr.mxu0 0.0
  %831 = vmatpush1.msra.mxu0 0.0
  %832 = vmatprep.subr.mxu0 0.0
  %833 = vmatpush1.msra.mxu0 0.0
  %834 = vmatprep.subr.mxu0 0.0
  %835 = vmatpush1.msra.mxu0 0.0
  %836 = vmatprep.subr.mxu0 0.0
  %837 = vmatpush1.msra.mxu0 0.0
  %838 = vmatprep.subr.mxu0 0.0
  %839 = vmatpush1.msra.mxu0 0.0
  %840 = vmatprep.subr.mxu0 0.0
  %841 = vmatpush1.msra.mxu0 0.0
  %842 = vmatprep.subr.mxu0 0.0
  %843 = vmatpush1.msra.mxu0 0.0
  %844 = vmatprep.subr.mxu0 0.0
  %845 = vmatpush1.msra.mxu0 %v730
  %846 = vmatprep.subr.mxu0 0.0
  %847 = vmatpush1.msra.mxu0 %v729
  %848 = vmatprep.subr.mxu0 0.0
  %849 = vmatpush1.msra.mxu0 %v728
  %850 = vmatprep.subr.mxu0 0.0
  %851 = vmatpush1.msra.mxu0 %v727
  %852 = vmatprep.subr.mxu0 0.0
  %853 = vmatpush1.msra.mxu0 %v726
  %854 = vmatprep.subr.mxu0 0.0
  %855 = vmatpush1.msra.mxu0 %v725
  %856 = vmatprep.subr.mxu0 0.0
  %857 = vmatpush1.msra.mxu0 %v724
  %858 = vmatprep.subr.mxu0 0.0
  %859 = vmatpush1.msra.mxu0 %v723
  %860 = vmatprep.subr.mxu0 0.0
  %861 = vmatpush2.msra.mxu0 0.0
  %862 = vmatprep.subr.mxu0 0.0
  %863 = vmatpush2.msra.mxu0 0.0
  %864 = vmatprep.subr.mxu0 0.0
  %865 = vmatpush2.msra.mxu0 0.0
  %866 = vmatprep.subr.mxu0 0.0
  %867 = vmatpush2.msra.mxu0 0.0
  %868 = vmatprep.subr.mxu0 0.0
  %869 = vmatpush2.msra.mxu0 0.0
  %870 = vmatprep.subr.mxu0 0.0
  %871 = vmatpush2.msra.mxu0 0.0
  %872 = vmatprep.subr.mxu0 0.0
  %873 = vmatpush2.msra.mxu0 0.0
  %874 = vmatprep.subr.mxu0 0.0
  %875 = vmatpush2.msra.mxu0 0.0
  %876 = vmatprep.subr.mxu0 0.0
  %877 = vmatpush2.msra.mxu0 0.0
  %878 = vmatprep.subr.mxu0 0.0
  %879 = vmatpush2.msra.mxu0 0.0
  %880 = vmatprep.subr.mxu0 0.0
  %881 = vmatpush2.msra.mxu0 0.0
  %882 = vmatprep.subr.mxu0 0.0
  %883 = vmatpush2.msra.mxu0 0.0
  %884 = vmatprep.subr.mxu0 0.0
  %885 = vmatpush2.msra.mxu0 0.0
  %886 = vmatprep.subr.mxu0 0.0
  %887 = vmatpush2.msra.mxu0 0.0
  %888 = vmatprep.subr.mxu0 0.0
  %889 = vmatpush2.msra.mxu0 0.0
  %890 = vmatprep.subr.mxu0 0.0
  %891 = vmatpush2.msra.mxu0 0.0
  %892 = vmatprep.mubr.f32.mxu0 0.0
  %893 = vmatmul.mubr.f32.gmra.mxu0 %v823
  %v894 = vpop.f32.mrf.mxu0
  %v895 = vadd.f32 %v814, %v894
  %v896 = vpop.f32.mrf.mxu0
  %897 = vmatprep.mubr.f32.mxu0 0.0
  %898 = vmatmul.mubr.f32.gmra.mxu0 %v826
  %v899 = vpop.f32.mrf.mxu0
  %v900 = vadd.f32 %v819, %v899
  %v901 = vpop.f32.mrf.mxu0
  %902 = vdwg.mxu0
  %v903 = vld [vmem:[#allocation2 + $0x1] sm:$0xff]
  %v904 = vld [vmem:[#allocation2 + $0x9] sm:$0xff]
  %s905 = scalar_lea.vmem %s7, 64
  %v906 = vld [vmem:[%s905] sm:$0xff]
  %v907 = vld [vmem:[%s905 + $0x8] sm:$0xff]
  %v908 = vld [vmem:[%s905 + $0x10] sm:$0xff]
  %v909 = vld [vmem:[%s905 + $0x18] sm:$0xff]
  %v910 = vld [vmem:[%s905 + $0x20] sm:$0xff]
  %v911 = vld [vmem:[%s905 + $0x28] sm:$0xff]
  %v912 = vld [vmem:[%s905 + $0x30] sm:$0xff]
  %v913 = vld [vmem:[%s905 + $0x38] sm:$0xff]
  %v915 = vsel %vm59, %v903, 0
  %v918 = vsel %vm59, %v904, 0
  %920 = vmatprep.subr.mxu0 0.0
  %921 = vmatpush1.msra.mxu0 0.0
  %922 = vmatprep.subr.mxu0 0.0
  %923 = vmatpush1.msra.mxu0 0.0
  %924 = vmatprep.subr.mxu0 0.0
  %925 = vmatpush1.msra.mxu0 0.0
  %926 = vmatprep.subr.mxu0 0.0
  %927 = vmatpush1.msra.mxu0 0.0
  %928 = vmatprep.subr.mxu0 0.0
  %929 = vmatpush1.msra.mxu0 0.0
  %930 = vmatprep.subr.mxu0 0.0
  %931 = vmatpush1.msra.mxu0 0.0
  %932 = vmatprep.subr.mxu0 0.0
  %933 = vmatpush1.msra.mxu0 0.0
  %934 = vmatprep.subr.mxu0 0.0
  %935 = vmatpush1.msra.mxu0 0.0
  %936 = vmatprep.subr.mxu0 0.0
  %937 = vmatpush1.msra.mxu0 %v913
  %938 = vmatprep.subr.mxu0 0.0
  %939 = vmatpush1.msra.mxu0 %v912
  %940 = vmatprep.subr.mxu0 0.0
  %941 = vmatpush1.msra.mxu0 %v911
  %942 = vmatprep.subr.mxu0 0.0
  %943 = vmatpush1.msra.mxu0 %v910
  %944 = vmatprep.subr.mxu0 0.0
  %945 = vmatpush1.msra.mxu0 %v909
  %946 = vmatprep.subr.mxu0 0.0
  %947 = vmatpush1.msra.mxu0 %v908
  %948 = vmatprep.subr.mxu0 0.0
  %949 = vmatpush1.msra.mxu0 %v907
  %950 = vmatprep.subr.mxu0 0.0
  %951 = vmatpush1.msra.mxu0 %v906
  %952 = vmatprep.subr.mxu0 0.0
  %953 = vmatpush2.msra.mxu0 0.0
  %954 = vmatprep.subr.mxu0 0.0
  %955 = vmatpush2.msra.mxu0 0.0
  %956 = vmatprep.subr.mxu0 0.0
  %957 = vmatpush2.msra.mxu0 0.0
  %958 = vmatprep.subr.mxu0 0.0
  %959 = vmatpush2.msra.mxu0 0.0
  %960 = vmatprep.subr.mxu0 0.0
  %961 = vmatpush2.msra.mxu0 0.0
  %962 = vmatprep.subr.mxu0 0.0
  %963 = vmatpush2.msra.mxu0 0.0
  %964 = vmatprep.subr.mxu0 0.0
  %965 = vmatpush2.msra.mxu0 0.0
  %966 = vmatprep.subr.mxu0 0.0
  %967 = vmatpush2.msra.mxu0 0.0
  %968 = vmatprep.subr.mxu0 0.0
  %969 = vmatpush2.msra.mxu0 0.0
  %970 = vmatprep.subr.mxu0 0.0
  %971 = vmatpush2.msra.mxu0 0.0
  %972 = vmatprep.subr.mxu0 0.0
  %973 = vmatpush2.msra.mxu0 0.0
  %974 = vmatprep.subr.mxu0 0.0
  %975 = vmatpush2.msra.mxu0 0.0
  %976 = vmatprep.subr.mxu0 0.0
  %977 = vmatpush2.msra.mxu0 0.0
  %978 = vmatprep.subr.mxu0 0.0
  %979 = vmatpush2.msra.mxu0 0.0
  %980 = vmatprep.subr.mxu0 0.0
  %981 = vmatpush2.msra.mxu0 0.0
  %982 = vmatprep.subr.mxu0 0.0
  %983 = vmatpush2.msra.mxu0 0.0
  %984 = vmatprep.mubr.f32.mxu0 0.0
  %985 = vmatmul.mubr.f32.gmra.mxu0 %v915
  %v986 = vpop.f32.mrf.mxu0
  %v987 = vadd.f32 0.0, %v986
  %v988 = vpop.f32.mrf.mxu0
  %989 = vmatprep.mubr.f32.mxu0 0.0
  %990 = vmatmul.mubr.f32.gmra.mxu0 %v918
  %v991 = vpop.f32.mrf.mxu0
  %v992 = vadd.f32 0.0, %v991
  %v993 = vpop.f32.mrf.mxu0
  %994 = vdwg.mxu0
  %v995 = vadd.f32 %v895, %v987
  %v996 = vadd.f32 %v900, %v992
  %v997 = vld [vmem:[#allocation3 + $0x1] sm:$0xff]
  %v998 = vld [vmem:[#allocation3 + $0x9] sm:$0xff]
  %s999 = scalar_lea.vmem %s8, 64
  %v1000 = vld [vmem:[%s999] sm:$0xff]
  %v1001 = vld [vmem:[%s999 + $0x8] sm:$0xff]
  %v1002 = vld [vmem:[%s999 + $0x10] sm:$0xff]
  %v1003 = vld [vmem:[%s999 + $0x18] sm:$0xff]
  %v1004 = vld [vmem:[%s999 + $0x20] sm:$0xff]
  %v1005 = vld [vmem:[%s999 + $0x28] sm:$0xff]
  %v1006 = vld [vmem:[%s999 + $0x30] sm:$0xff]
  %v1007 = vld [vmem:[%s999 + $0x38] sm:$0xff]
  %v1009 = vsel %vm59, %v997, 0
  %v1012 = vsel %vm59, %v998, 0
  %1014 = vmatprep.subr.mxu0 0.0
  %1015 = vmatpush1.msra.mxu0 0.0
  %1016 = vmatprep.subr.mxu0 0.0
  %1017 = vmatpush1.msra.mxu0 0.0
  %1018 = vmatprep.subr.mxu0 0.0
  %1019 = vmatpush1.msra.mxu0 0.0
  %1020 = vmatprep.subr.mxu0 0.0
  %1021 = vmatpush1.msra.mxu0 0.0
  %1022 = vmatprep.subr.mxu0 0.0
  %1023 = vmatpush1.msra.mxu0 0.0
  %1024 = vmatprep.subr.mxu0 0.0
  %1025 = vmatpush1.msra.mxu0 0.0
  %1026 = vmatprep.subr.mxu0 0.0
  %1027 = vmatpush1.msra.mxu0 0.0
  %1028 = vmatprep.subr.mxu0 0.0
  %1029 = vmatpush1.msra.mxu0 0.0
  %1030 = vmatprep.subr.mxu0 0.0
  %1031 = vmatpush1.msra.mxu0 %v1007
  %1032 = vmatprep.subr.mxu0 0.0
  %1033 = vmatpush1.msra.mxu0 %v1006
  %1034 = vmatprep.subr.mxu0 0.0
  %1035 = vmatpush1.msra.mxu0 %v1005
  %1036 = vmatprep.subr.mxu0 0.0
  %1037 = vmatpush1.msra.mxu0 %v1004
  %1038 = vmatprep.subr.mxu0 0.0
  %1039 = vmatpush1.msra.mxu0 %v1003
  %1040 = vmatprep.subr.mxu0 0.0
  %1041 = vmatpush1.msra.mxu0 %v1002
  %1042 = vmatprep.subr.mxu0 0.0
  %1043 = vmatpush1.msra.mxu0 %v1001
  %1044 = vmatprep.subr.mxu0 0.0
  %1045 = vmatpush1.msra.mxu0 %v1000
  %1046 = vmatprep.subr.mxu0 0.0
  %1047 = vmatpush2.msra.mxu0 0.0
  %1048 = vmatprep.subr.mxu0 0.0
  %1049 = vmatpush2.msra.mxu0 0.0
  %1050 = vmatprep.subr.mxu0 0.0
  %1051 = vmatpush2.msra.mxu0 0.0
  %1052 = vmatprep.subr.mxu0 0.0
  %1053 = vmatpush2.msra.mxu0 0.0
  %1054 = vmatprep.subr.mxu0 0.0
  %1055 = vmatpush2.msra.mxu0 0.0
  %1056 = vmatprep.subr.mxu0 0.0
  %1057 = vmatpush2.msra.mxu0 0.0
  %1058 = vmatprep.subr.mxu0 0.0
  %1059 = vmatpush2.msra.mxu0 0.0
  %1060 = vmatprep.subr.mxu0 0.0
  %1061 = vmatpush2.msra.mxu0 0.0
  %1062 = vmatprep.subr.mxu0 0.0
  %1063 = vmatpush2.msra.mxu0 0.0
  %1064 = vmatprep.subr.mxu0 0.0
  %1065 = vmatpush2.msra.mxu0 0.0
  %1066 = vmatprep.subr.mxu0 0.0
  %1067 = vmatpush2.msra.mxu0 0.0
  %1068 = vmatprep.subr.mxu0 0.0
  %1069 = vmatpush2.msra.mxu0 0.0
  %1070 = vmatprep.subr.mxu0 0.0
  %1071 = vmatpush2.msra.mxu0 0.0
  %1072 = vmatprep.subr.mxu0 0.0
  %1073 = vmatpush2.msra.mxu0 0.0
  %1074 = vmatprep.subr.mxu0 0.0
  %1075 = vmatpush2.msra.mxu0 0.0
  %1076 = vmatprep.subr.mxu0 0.0
  %1077 = vmatpush2.msra.mxu0 0.0
  %1078 = vmatprep.mubr.f32.mxu0 0.0
  %1079 = vmatmul.mubr.f32.gmra.mxu0 %v1009
  %v1080 = vpop.f32.mrf.mxu0
  %v1081 = vadd.f32 0.0, %v1080
  %v1082 = vpop.f32.mrf.mxu0
  %1083 = vmatprep.mubr.f32.mxu0 0.0
  %1084 = vmatmul.mubr.f32.gmra.mxu0 %v1012
  %v1085 = vpop.f32.mrf.mxu0
  %v1086 = vadd.f32 0.0, %v1085
  %v1087 = vpop.f32.mrf.mxu0
  %1088 = vdwg.mxu0
  %v1089 = vadd.f32 %v995, %v1081
  %v1090 = vadd.f32 %v996, %v1086
  %v1091 = vld [vmem:[#allocation2 + $0x2] sm:$0xff]
  %v1092 = vld [vmem:[#allocation2 + $0xa] sm:$0xff]
  %s1093 = scalar_lea.vmem %s7, 128
  %v1094 = vld [vmem:[%s1093] sm:$0xff]
  %v1095 = vld [vmem:[%s1093 + $0x8] sm:$0xff]
  %v1096 = vld [vmem:[%s1093 + $0x10] sm:$0xff]
  %v1097 = vld [vmem:[%s1093 + $0x18] sm:$0xff]
  %v1098 = vld [vmem:[%s1093 + $0x20] sm:$0xff]
  %v1099 = vld [vmem:[%s1093 + $0x28] sm:$0xff]
  %v1100 = vld [vmem:[%s1093 + $0x30] sm:$0xff]
  %v1101 = vld [vmem:[%s1093 + $0x38] sm:$0xff]
  %v1103 = vsel %vm59, %v1091, 0
  %v1106 = vsel %vm59, %v1092, 0
  %1108 = vmatprep.subr.mxu0 0.0
  %1109 = vmatpush1.msra.mxu0 0.0
  %1110 = vmatprep.subr.mxu0 0.0
  %1111 = vmatpush1.msra.mxu0 0.0
  %1112 = vmatprep.subr.mxu0 0.0
  %1113 = vmatpush1.msra.mxu0 0.0
  %1114 = vmatprep.subr.mxu0 0.0
  %1115 = vmatpush1.msra.mxu0 0.0
  %1116 = vmatprep.subr.mxu0 0.0
  %1117 = vmatpush1.msra.mxu0 0.0
  %1118 = vmatprep.subr.mxu0 0.0
  %1119 = vmatpush1.msra.mxu0 0.0
  %1120 = vmatprep.subr.mxu0 0.0
  %1121 = vmatpush1.msra.mxu0 0.0
  %1122 = vmatprep.subr.mxu0 0.0
  %1123 = vmatpush1.msra.mxu0 0.0
  %1124 = vmatprep.subr.mxu0 0.0
  %1125 = vmatpush1.msra.mxu0 %v1101
  %1126 = vmatprep.subr.mxu0 0.0
  %1127 = vmatpush1.msra.mxu0 %v1100
  %1128 = vmatprep.subr.mxu0 0.0
  %1129 = vmatpush1.msra.mxu0 %v1099
  %1130 = vmatprep.subr.mxu0 0.0
  %1131 = vmatpush1.msra.mxu0 %v1098
  %1132 = vmatprep.subr.mxu0 0.0
  %1133 = vmatpush1.msra.mxu0 %v1097
  %1134 = vmatprep.subr.mxu0 0.0
  %1135 = vmatpush1.msra.mxu0 %v1096
  %1136 = vmatprep.subr.mxu0 0.0
  %1137 = vmatpush1.msra.mxu0 %v1095
  %1138 = vmatprep.subr.mxu0 0.0
  %1139 = vmatpush1.msra.mxu0 %v1094
  %1140 = vmatprep.subr.mxu0 0.0
  %1141 = vmatpush2.msra.mxu0 0.0
  %1142 = vmatprep.subr.mxu0 0.0
  %1143 = vmatpush2.msra.mxu0 0.0
  %1144 = vmatprep.subr.mxu0 0.0
  %1145 = vmatpush2.msra.mxu0 0.0
  %1146 = vmatprep.subr.mxu0 0.0
  %1147 = vmatpush2.msra.mxu0 0.0
  %1148 = vmatprep.subr.mxu0 0.0
  %1149 = vmatpush2.msra.mxu0 0.0
  %1150 = vmatprep.subr.mxu0 0.0
  %1151 = vmatpush2.msra.mxu0 0.0
  %1152 = vmatprep.subr.mxu0 0.0
  %1153 = vmatpush2.msra.mxu0 0.0
  %1154 = vmatprep.subr.mxu0 0.0
  %1155 = vmatpush2.msra.mxu0 0.0
  %1156 = vmatprep.subr.mxu0 0.0
  %1157 = vmatpush2.msra.mxu0 0.0
  %1158 = vmatprep.subr.mxu0 0.0
  %1159 = vmatpush2.msra.mxu0 0.0
  %1160 = vmatprep.subr.mxu0 0.0
  %1161 = vmatpush2.msra.mxu0 0.0
  %1162 = vmatprep.subr.mxu0 0.0
  %1163 = vmatpush2.msra.mxu0 0.0
  %1164 = vmatprep.subr.mxu0 0.0
  %1165 = vmatpush2.msra.mxu0 0.0
  %1166 = vmatprep.subr.mxu0 0.0
  %1167 = vmatpush2.msra.mxu0 0.0
  %1168 = vmatprep.subr.mxu0 0.0
  %1169 = vmatpush2.msra.mxu0 0.0
  %1170 = vmatprep.subr.mxu0 0.0
  %1171 = vmatpush2.msra.mxu0 0.0
  %1172 = vmatprep.mubr.f32.mxu0 0.0
  %1173 = vmatmul.mubr.f32.gmra.mxu0 %v1103
  %v1174 = vpop.f32.mrf.mxu0
  %v1175 = vadd.f32 0.0, %v1174
  %v1176 = vpop.f32.mrf.mxu0
  %1177 = vmatprep.mubr.f32.mxu0 0.0
  %1178 = vmatmul.mubr.f32.gmra.mxu0 %v1106
  %v1179 = vpop.f32.mrf.mxu0
  %v1180 = vadd.f32 0.0, %v1179
  %v1181 = vpop.f32.mrf.mxu0
  %1182 = vdwg.mxu0
  %v1183 = vadd.f32 %v1089, %v1175
  %v1184 = vadd.f32 %v1090, %v1180
  %v1185 = vld [vmem:[#allocation3 + $0x2] sm:$0xff]
  %v1186 = vld [vmem:[#allocation3 + $0xa] sm:$0xff]
  %s1187 = scalar_lea.vmem %s8, 128
  %v1188 = vld [vmem:[%s1187] sm:$0xff]
  %v1189 = vld [vmem:[%s1187 + $0x8] sm:$0xff]
  %v1190 = vld [vmem:[%s1187 + $0x10] sm:$0xff]
  %v1191 = vld [vmem:[%s1187 + $0x18] sm:$0xff]
  %v1192 = vld [vmem:[%s1187 + $0x20] sm:$0xff]
  %v1193 = vld [vmem:[%s1187 + $0x28] sm:$0xff]
  %v1194 = vld [vmem:[%s1187 + $0x30] sm:$0xff]
  %v1195 = vld [vmem:[%s1187 + $0x38] sm:$0xff]
  %v1197 = vsel %vm59, %v1185, 0
  %v1200 = vsel %vm59, %v1186, 0
  %1202 = vmatprep.subr.mxu0 0.0
  %1203 = vmatpush1.msra.mxu0 0.0
  %1204 = vmatprep.subr.mxu0 0.0
  %1205 = vmatpush1.msra.mxu0 0.0
  %1206 = vmatprep.subr.mxu0 0.0
  %1207 = vmatpush1.msra.mxu0 0.0
  %1208 = vmatprep.subr.mxu0 0.0
  %1209 = vmatpush1.msra.mxu0 0.0
  %1210 = vmatprep.subr.mxu0 0.0
  %1211 = vmatpush1.msra.mxu0 0.0
  %1212 = vmatprep.subr.mxu0 0.0
  %1213 = vmatpush1.msra.mxu0 0.0
  %1214 = vmatprep.subr.mxu0 0.0
  %1215 = vmatpush1.msra.mxu0 0.0
  %1216 = vmatprep.subr.mxu0 0.0
  %1217 = vmatpush1.msra.mxu0 0.0
  %1218 = vmatprep.subr.mxu0 0.0
  %1219 = vmatpush1.msra.mxu0 %v1195
  %1220 = vmatprep.subr.mxu0 0.0
  %1221 = vmatpush1.msra.mxu0 %v1194
  %1222 = vmatprep.subr.mxu0 0.0
  %1223 = vmatpush1.msra.mxu0 %v1193
  %1224 = vmatprep.subr.mxu0 0.0
  %1225 = vmatpush1.msra.mxu0 %v1192
  %1226 = vmatprep.subr.mxu0 0.0
  %1227 = vmatpush1.msra.mxu0 %v1191
  %1228 = vmatprep.subr.mxu0 0.0
  %1229 = vmatpush1.msra.mxu0 %v1190
  %1230 = vmatprep.subr.mxu0 0.0
  %1231 = vmatpush1.msra.mxu0 %v1189
  %1232 = vmatprep.subr.mxu0 0.0
  %1233 = vmatpush1.msra.mxu0 %v1188
  %1234 = vmatprep.subr.mxu0 0.0
  %1235 = vmatpush2.msra.mxu0 0.0
  %1236 = vmatprep.subr.mxu0 0.0
  %1237 = vmatpush2.msra.mxu0 0.0
  %1238 = vmatprep.subr.mxu0 0.0
  %1239 = vmatpush2.msra.mxu0 0.0
  %1240 = vmatprep.subr.mxu0 0.0
  %1241 = vmatpush2.msra.mxu0 0.0
  %1242 = vmatprep.subr.mxu0 0.0
  %1243 = vmatpush2.msra.mxu0 0.0
  %1244 = vmatprep.subr.mxu0 0.0
  %1245 = vmatpush2.msra.mxu0 0.0
  %1246 = vmatprep.subr.mxu0 0.0
  %1247 = vmatpush2.msra.mxu0 0.0
  %1248 = vmatprep.subr.mxu0 0.0
  %1249 = vmatpush2.msra.mxu0 0.0
  %1250 = vmatprep.subr.mxu0 0.0
  %1251 = vmatpush2.msra.mxu0 0.0
  %1252 = vmatprep.subr.mxu0 0.0
  %1253 = vmatpush2.msra.mxu0 0.0
  %1254 = vmatprep.subr.mxu0 0.0
  %1255 = vmatpush2.msra.mxu0 0.0
  %1256 = vmatprep.subr.mxu0 0.0
  %1257 = vmatpush2.msra.mxu0 0.0
  %1258 = vmatprep.subr.mxu0 0.0
  %1259 = vmatpush2.msra.mxu0 0.0
  %1260 = vmatprep.subr.mxu0 0.0
  %1261 = vmatpush2.msra.mxu0 0.0
  %1262 = vmatprep.subr.mxu0 0.0
  %1263 = vmatpush2.msra.mxu0 0.0
  %1264 = vmatprep.subr.mxu0 0.0
  %1265 = vmatpush2.msra.mxu0 0.0
  %1266 = vmatprep.mubr.f32.mxu0 0.0
  %1267 = vmatmul.mubr.f32.gmra.mxu0 %v1197
  %v1268 = vpop.f32.mrf.mxu0
  %v1269 = vadd.f32 0.0, %v1268
  %v1270 = vpop.f32.mrf.mxu0
  %1271 = vmatprep.mubr.f32.mxu0 0.0
  %1272 = vmatmul.mubr.f32.gmra.mxu0 %v1200
  %v1273 = vpop.f32.mrf.mxu0
  %v1274 = vadd.f32 0.0, %v1273
  %v1275 = vpop.f32.mrf.mxu0
  %1276 = vdwg.mxu0
  %v1277 = vadd.f32 %v1183, %v1269
  %v1278 = vadd.f32 %v1184, %v1274
  %v1280 = vlaneseq
  %v1281 = vshrl.u32 %v1280, 7
  %v1282 = vsub.s32 0, %v1281
  %v1283 = vrot.slane %v720, %v1282
  %v1285 = vadd.f32 %v1277, %v1283
  %v1286 = vadd.f32 %v1278, %v1283
  %v1287 = vld [vmem:[%s86] sm:$0xff]
  %v1288 = vld [vmem:[%s86 + $0x8] sm:$0xff]
  %v1289 = vld [vmem:[%s717] sm:$0xff]
  %v1290 = vld [vmem:[%s717 + $0x8] sm:$0xff]
  %v1292 = vsel %vm59, %v1289, 0
  %v1295 = vsel %vm59, %v1290, 0
  %1297 = vmatprep.subr.mxu0 0.0
  %1298 = vmatpush1.msra.mxu0 0.0
  %1299 = vmatprep.subr.mxu0 0.0
  %1300 = vmatpush1.msra.mxu0 0.0
  %1301 = vmatprep.subr.mxu0 0.0
  %1302 = vmatpush1.msra.mxu0 0.0
  %1303 = vmatprep.subr.mxu0 0.0
  %1304 = vmatpush1.msra.mxu0 0.0
  %1305 = vmatprep.subr.mxu0 0.0
  %1306 = vmatpush1.msra.mxu0 0.0
  %1307 = vmatprep.subr.mxu0 0.0
  %1308 = vmatpush1.msra.mxu0 0.0
  %1309 = vmatprep.subr.mxu0 0.0
  %1310 = vmatpush1.msra.mxu0 0.0
  %1311 = vmatprep.subr.mxu0 0.0
  %1312 = vmatpush1.msra.mxu0 0.0
  %1313 = vmatprep.subr.mxu0 0.0
  %1314 = vmatpush1.msra.mxu0 %v740
  %1315 = vmatprep.subr.mxu0 0.0
  %1316 = vmatpush1.msra.mxu0 %v739
  %1317 = vmatprep.subr.mxu0 0.0
  %1318 = vmatpush1.msra.mxu0 %v738
  %1319 = vmatprep.subr.mxu0 0.0
  %1320 = vmatpush1.msra.mxu0 %v737
  %1321 = vmatprep.subr.mxu0 0.0
  %1322 = vmatpush1.msra.mxu0 %v736
  %1323 = vmatprep.subr.mxu0 0.0
  %1324 = vmatpush1.msra.mxu0 %v735
  %1325 = vmatprep.subr.mxu0 0.0
  %1326 = vmatpush1.msra.mxu0 %v734
  %1327 = vmatprep.subr.mxu0 0.0
  %1328 = vmatpush1.msra.mxu0 %v733
  %1329 = vmatprep.subr.mxu0 0.0
  %1330 = vmatpush2.msra.mxu0 0.0
  %1331 = vmatprep.subr.mxu0 0.0
  %1332 = vmatpush2.msra.mxu0 0.0
  %1333 = vmatprep.subr.mxu0 0.0
  %1334 = vmatpush2.msra.mxu0 0.0
  %1335 = vmatprep.subr.mxu0 0.0
  %1336 = vmatpush2.msra.mxu0 0.0
  %1337 = vmatprep.subr.mxu0 0.0
  %1338 = vmatpush2.msra.mxu0 0.0
  %1339 = vmatprep.subr.mxu0 0.0
  %1340 = vmatpush2.msra.mxu0 0.0
  %1341 = vmatprep.subr.mxu0 0.0
  %1342 = vmatpush2.msra.mxu0 0.0
  %1343 = vmatprep.subr.mxu0 0.0
  %1344 = vmatpush2.msra.mxu0 0.0
  %1345 = vmatprep.subr.mxu0 0.0
  %1346 = vmatpush2.msra.mxu0 0.0
  %1347 = vmatprep.subr.mxu0 0.0
  %1348 = vmatpush2.msra.mxu0 0.0
  %1349 = vmatprep.subr.mxu0 0.0
  %1350 = vmatpush2.msra.mxu0 0.0
  %1351 = vmatprep.subr.mxu0 0.0
  %1352 = vmatpush2.msra.mxu0 0.0
  %1353 = vmatprep.subr.mxu0 0.0
  %1354 = vmatpush2.msra.mxu0 0.0
  %1355 = vmatprep.subr.mxu0 0.0
  %1356 = vmatpush2.msra.mxu0 0.0
  %1357 = vmatprep.subr.mxu0 0.0
  %1358 = vmatpush2.msra.mxu0 0.0
  %1359 = vmatprep.subr.mxu0 0.0
  %1360 = vmatpush2.msra.mxu0 0.0
  %1361 = vmatprep.mubr.f32.mxu0 0.0
  %1362 = vmatmul.mubr.f32.gmra.mxu0 %v1292
  %v1363 = vpop.f32.mrf.mxu0
  %v1364 = vadd.f32 0.0, %v1363
  %v1365 = vpop.f32.mrf.mxu0
  %1366 = vmatprep.mubr.f32.mxu0 0.0
  %1367 = vmatmul.mubr.f32.gmra.mxu0 %v1295
  %v1368 = vpop.f32.mrf.mxu0
  %v1369 = vadd.f32 0.0, %v1368
  %v1370 = vpop.f32.mrf.mxu0
  %1371 = vdwg.mxu0
  %v1373 = vsel %vm59, %v1287, 0
  %v1376 = vsel %vm59, %v1288, 0
  %1378 = vmatprep.subr.mxu0 0.0
  %1379 = vmatpush1.msra.mxu0 0.0
  %1380 = vmatprep.subr.mxu0 0.0
  %1381 = vmatpush1.msra.mxu0 0.0
  %1382 = vmatprep.subr.mxu0 0.0
  %1383 = vmatpush1.msra.mxu0 0.0
  %1384 = vmatprep.subr.mxu0 0.0
  %1385 = vmatpush1.msra.mxu0 0.0
  %1386 = vmatprep.subr.mxu0 0.0
  %1387 = vmatpush1.msra.mxu0 0.0
  %1388 = vmatprep.subr.mxu0 0.0
  %1389 = vmatpush1.msra.mxu0 0.0
  %1390 = vmatprep.subr.mxu0 0.0
  %1391 = vmatpush1.msra.mxu0 0.0
  %1392 = vmatprep.subr.mxu0 0.0
  %1393 = vmatpush1.msra.mxu0 0.0
  %1394 = vmatprep.subr.mxu0 0.0
  %1395 = vmatpush1.msra.mxu0 %v730
  %1396 = vmatprep.subr.mxu0 0.0
  %1397 = vmatpush1.msra.mxu0 %v729
  %1398 = vmatprep.subr.mxu0 0.0
  %1399 = vmatpush1.msra.mxu0 %v728
  %1400 = vmatprep.subr.mxu0 0.0
  %1401 = vmatpush1.msra.mxu0 %v727
  %1402 = vmatprep.subr.mxu0 0.0
  %1403 = vmatpush1.msra.mxu0 %v726
  %1404 = vmatprep.subr.mxu0 0.0
  %1405 = vmatpush1.msra.mxu0 %v725
  %1406 = vmatprep.subr.mxu0 0.0
  %1407 = vmatpush1.msra.mxu0 %v724
  %1408 = vmatprep.subr.mxu0 0.0
  %1409 = vmatpush1.msra.mxu0 %v723
  %1410 = vmatprep.subr.mxu0 0.0
  %1411 = vmatpush2.msra.mxu0 0.0
  %1412 = vmatprep.subr.mxu0 0.0
  %1413 = vmatpush2.msra.mxu0 0.0
  %1414 = vmatprep.subr.mxu0 0.0
  %1415 = vmatpush2.msra.mxu0 0.0
  %1416 = vmatprep.subr.mxu0 0.0
  %1417 = vmatpush2.msra.mxu0 0.0
  %1418 = vmatprep.subr.mxu0 0.0
  %1419 = vmatpush2.msra.mxu0 0.0
  %1420 = vmatprep.subr.mxu0 0.0
  %1421 = vmatpush2.msra.mxu0 0.0
  %1422 = vmatprep.subr.mxu0 0.0
  %1423 = vmatpush2.msra.mxu0 0.0
  %1424 = vmatprep.subr.mxu0 0.0
  %1425 = vmatpush2.msra.mxu0 0.0
  %1426 = vmatprep.subr.mxu0 0.0
  %1427 = vmatpush2.msra.mxu0 0.0
  %1428 = vmatprep.subr.mxu0 0.0
  %1429 = vmatpush2.msra.mxu0 0.0
  %1430 = vmatprep.subr.mxu0 0.0
  %1431 = vmatpush2.msra.mxu0 0.0
  %1432 = vmatprep.subr.mxu0 0.0
  %1433 = vmatpush2.msra.mxu0 0.0
  %1434 = vmatprep.subr.mxu0 0.0
  %1435 = vmatpush2.msra.mxu0 0.0
  %1436 = vmatprep.subr.mxu0 0.0
  %1437 = vmatpush2.msra.mxu0 0.0
  %1438 = vmatprep.subr.mxu0 0.0
  %1439 = vmatpush2.msra.mxu0 0.0
  %1440 = vmatprep.subr.mxu0 0.0
  %1441 = vmatpush2.msra.mxu0 0.0
  %1442 = vmatprep.mubr.f32.mxu0 0.0
  %1443 = vmatmul.mubr.f32.gmra.mxu0 %v1373
  %v1444 = vpop.f32.mrf.mxu0
  %v1445 = vadd.f32 %v1364, %v1444
  %v1446 = vpop.f32.mrf.mxu0
  %1447 = vmatprep.mubr.f32.mxu0 0.0
  %1448 = vmatmul.mubr.f32.gmra.mxu0 %v1376
  %v1449 = vpop.f32.mrf.mxu0
  %v1450 = vadd.f32 %v1369, %v1449
  %v1451 = vpop.f32.mrf.mxu0
  %1452 = vdwg.mxu0
  %v1453 = vld [vmem:[%s86 + $0x1] sm:$0xff]
  %v1454 = vld [vmem:[%s86 + $0x9] sm:$0xff]
  %v1456 = vsel %vm59, %v1453, 0
  %v1459 = vsel %vm59, %v1454, 0
  %1461 = vmatprep.subr.mxu0 0.0
  %1462 = vmatpush1.msra.mxu0 0.0
  %1463 = vmatprep.subr.mxu0 0.0
  %1464 = vmatpush1.msra.mxu0 0.0
  %1465 = vmatprep.subr.mxu0 0.0
  %1466 = vmatpush1.msra.mxu0 0.0
  %1467 = vmatprep.subr.mxu0 0.0
  %1468 = vmatpush1.msra.mxu0 0.0
  %1469 = vmatprep.subr.mxu0 0.0
  %1470 = vmatpush1.msra.mxu0 0.0
  %1471 = vmatprep.subr.mxu0 0.0
  %1472 = vmatpush1.msra.mxu0 0.0
  %1473 = vmatprep.subr.mxu0 0.0
  %1474 = vmatpush1.msra.mxu0 0.0
  %1475 = vmatprep.subr.mxu0 0.0
  %1476 = vmatpush1.msra.mxu0 0.0
  %1477 = vmatprep.subr.mxu0 0.0
  %1478 = vmatpush1.msra.mxu0 %v913
  %1479 = vmatprep.subr.mxu0 0.0
  %1480 = vmatpush1.msra.mxu0 %v912
  %1481 = vmatprep.subr.mxu0 0.0
  %1482 = vmatpush1.msra.mxu0 %v911
  %1483 = vmatprep.subr.mxu0 0.0
  %1484 = vmatpush1.msra.mxu0 %v910
  %1485 = vmatprep.subr.mxu0 0.0
  %1486 = vmatpush1.msra.mxu0 %v909
  %1487 = vmatprep.subr.mxu0 0.0
  %1488 = vmatpush1.msra.mxu0 %v908
  %1489 = vmatprep.subr.mxu0 0.0
  %1490 = vmatpush1.msra.mxu0 %v907
  %1491 = vmatprep.subr.mxu0 0.0
  %1492 = vmatpush1.msra.mxu0 %v906
  %1493 = vmatprep.subr.mxu0 0.0
  %1494 = vmatpush2.msra.mxu0 0.0
  %1495 = vmatprep.subr.mxu0 0.0
  %1496 = vmatpush2.msra.mxu0 0.0
  %1497 = vmatprep.subr.mxu0 0.0
  %1498 = vmatpush2.msra.mxu0 0.0
  %1499 = vmatprep.subr.mxu0 0.0
  %1500 = vmatpush2.msra.mxu0 0.0
  %1501 = vmatprep.subr.mxu0 0.0
  %1502 = vmatpush2.msra.mxu0 0.0
  %1503 = vmatprep.subr.mxu0 0.0
  %1504 = vmatpush2.msra.mxu0 0.0
  %1505 = vmatprep.subr.mxu0 0.0
  %1506 = vmatpush2.msra.mxu0 0.0
  %1507 = vmatprep.subr.mxu0 0.0
  %1508 = vmatpush2.msra.mxu0 0.0
  %1509 = vmatprep.subr.mxu0 0.0
  %1510 = vmatpush2.msra.mxu0 0.0
  %1511 = vmatprep.subr.mxu0 0.0
  %1512 = vmatpush2.msra.mxu0 0.0
  %1513 = vmatprep.subr.mxu0 0.0
  %1514 = vmatpush2.msra.mxu0 0.0
  %1515 = vmatprep.subr.mxu0 0.0
  %1516 = vmatpush2.msra.mxu0 0.0
  %1517 = vmatprep.subr.mxu0 0.0
  %1518 = vmatpush2.msra.mxu0 0.0
  %1519 = vmatprep.subr.mxu0 0.0
  %1520 = vmatpush2.msra.mxu0 0.0
  %1521 = vmatprep.subr.mxu0 0.0
  %1522 = vmatpush2.msra.mxu0 0.0
  %1523 = vmatprep.subr.mxu0 0.0
  %1524 = vmatpush2.msra.mxu0 0.0
  %1525 = vmatprep.mubr.f32.mxu0 0.0
  %1526 = vmatmul.mubr.f32.gmra.mxu0 %v1456
  %v1527 = vpop.f32.mrf.mxu0
  %v1528 = vadd.f32 0.0, %v1527
  %v1529 = vpop.f32.mrf.mxu0
  %1530 = vmatprep.mubr.f32.mxu0 0.0
  %1531 = vmatmul.mubr.f32.gmra.mxu0 %v1459
  %v1532 = vpop.f32.mrf.mxu0
  %v1533 = vadd.f32 0.0, %v1532
  %v1534 = vpop.f32.mrf.mxu0
  %1535 = vdwg.mxu0
  %v1536 = vadd.f32 %v1445, %v1528
  %v1537 = vadd.f32 %v1450, %v1533
  %v1538 = vld [vmem:[%s717 + $0x1] sm:$0xff]
  %v1539 = vld [vmem:[%s717 + $0x9] sm:$0xff]
  %v1541 = vsel %vm59, %v1538, 0
  %v1544 = vsel %vm59, %v1539, 0
  %1546 = vmatprep.subr.mxu0 0.0
  %1547 = vmatpush1.msra.mxu0 0.0
  %1548 = vmatprep.subr.mxu0 0.0
  %1549 = vmatpush1.msra.mxu0 0.0
  %1550 = vmatprep.subr.mxu0 0.0
  %1551 = vmatpush1.msra.mxu0 0.0
  %1552 = vmatprep.subr.mxu0 0.0
  %1553 = vmatpush1.msra.mxu0 0.0
  %1554 = vmatprep.subr.mxu0 0.0
  %1555 = vmatpush1.msra.mxu0 0.0
  %1556 = vmatprep.subr.mxu0 0.0
  %1557 = vmatpush1.msra.mxu0 0.0
  %1558 = vmatprep.subr.mxu0 0.0
  %1559 = vmatpush1.msra.mxu0 0.0
  %1560 = vmatprep.subr.mxu0 0.0
  %1561 = vmatpush1.msra.mxu0 0.0
  %1562 = vmatprep.subr.mxu0 0.0
  %1563 = vmatpush1.msra.mxu0 %v1007
  %1564 = vmatprep.subr.mxu0 0.0
  %1565 = vmatpush1.msra.mxu0 %v1006
  %1566 = vmatprep.subr.mxu0 0.0
  %1567 = vmatpush1.msra.mxu0 %v1005
  %1568 = vmatprep.subr.mxu0 0.0
  %1569 = vmatpush1.msra.mxu0 %v1004
  %1570 = vmatprep.subr.mxu0 0.0
  %1571 = vmatpush1.msra.mxu0 %v1003
  %1572 = vmatprep.subr.mxu0 0.0
  %1573 = vmatpush1.msra.mxu0 %v1002
  %1574 = vmatprep.subr.mxu0 0.0
  %1575 = vmatpush1.msra.mxu0 %v1001
  %1576 = vmatprep.subr.mxu0 0.0
  %1577 = vmatpush1.msra.mxu0 %v1000
  %1578 = vmatprep.subr.mxu0 0.0
  %1579 = vmatpush2.msra.mxu0 0.0
  %1580 = vmatprep.subr.mxu0 0.0
  %1581 = vmatpush2.msra.mxu0 0.0
  %1582 = vmatprep.subr.mxu0 0.0
  %1583 = vmatpush2.msra.mxu0 0.0
  %1584 = vmatprep.subr.mxu0 0.0
  %1585 = vmatpush2.msra.mxu0 0.0
  %1586 = vmatprep.subr.mxu0 0.0
  %1587 = vmatpush2.msra.mxu0 0.0
  %1588 = vmatprep.subr.mxu0 0.0
  %1589 = vmatpush2.msra.mxu0 0.0
  %1590 = vmatprep.subr.mxu0 0.0
  %1591 = vmatpush2.msra.mxu0 0.0
  %1592 = vmatprep.subr.mxu0 0.0
  %1593 = vmatpush2.msra.mxu0 0.0
  %1594 = vmatprep.subr.mxu0 0.0
  %1595 = vmatpush2.msra.mxu0 0.0
  %1596 = vmatprep.subr.mxu0 0.0
  %1597 = vmatpush2.msra.mxu0 0.0
  %1598 = vmatprep.subr.mxu0 0.0
  %1599 = vmatpush2.msra.mxu0 0.0
  %1600 = vmatprep.subr.mxu0 0.0
  %1601 = vmatpush2.msra.mxu0 0.0
  %1602 = vmatprep.subr.mxu0 0.0
  %1603 = vmatpush2.msra.mxu0 0.0
  %1604 = vmatprep.subr.mxu0 0.0
  %1605 = vmatpush2.msra.mxu0 0.0
  %1606 = vmatprep.subr.mxu0 0.0
  %1607 = vmatpush2.msra.mxu0 0.0
  %1608 = vmatprep.subr.mxu0 0.0
  %1609 = vmatpush2.msra.mxu0 0.0
  %1610 = vmatprep.mubr.f32.mxu0 0.0
  %1611 = vmatmul.mubr.f32.gmra.mxu0 %v1541
  %v1612 = vpop.f32.mrf.mxu0
  %v1613 = vadd.f32 0.0, %v1612
  %v1614 = vpop.f32.mrf.mxu0
  %1615 = vmatprep.mubr.f32.mxu0 0.0
  %1616 = vmatmul.mubr.f32.gmra.mxu0 %v1544
  %v1617 = vpop.f32.mrf.mxu0
  %v1618 = vadd.f32 0.0, %v1617
  %v1619 = vpop.f32.mrf.mxu0
  %1620 = vdwg.mxu0
  %v1621 = vadd.f32 %v1536, %v1613
  %v1622 = vadd.f32 %v1537, %v1618
  %v1623 = vld [vmem:[%s86 + $0x2] sm:$0xff]
  %v1624 = vld [vmem:[%s86 + $0xa] sm:$0xff]
  %v1626 = vsel %vm59, %v1623, 0
  %v1629 = vsel %vm59, %v1624, 0
  %1631 = vmatprep.subr.mxu0 0.0
  %1632 = vmatpush1.msra.mxu0 0.0
  %1633 = vmatprep.subr.mxu0 0.0
  %1634 = vmatpush1.msra.mxu0 0.0
  %1635 = vmatprep.subr.mxu0 0.0
  %1636 = vmatpush1.msra.mxu0 0.0
  %1637 = vmatprep.subr.mxu0 0.0
  %1638 = vmatpush1.msra.mxu0 0.0
  %1639 = vmatprep.subr.mxu0 0.0
  %1640 = vmatpush1.msra.mxu0 0.0
  %1641 = vmatprep.subr.mxu0 0.0
  %1642 = vmatpush1.msra.mxu0 0.0
  %1643 = vmatprep.subr.mxu0 0.0
  %1644 = vmatpush1.msra.mxu0 0.0
  %1645 = vmatprep.subr.mxu0 0.0
  %1646 = vmatpush1.msra.mxu0 0.0
  %1647 = vmatprep.subr.mxu0 0.0
  %1648 = vmatpush1.msra.mxu0 %v1101
  %1649 = vmatprep.subr.mxu0 0.0
  %1650 = vmatpush1.msra.mxu0 %v1100
  %1651 = vmatprep.subr.mxu0 0.0
  %1652 = vmatpush1.msra.mxu0 %v1099
  %1653 = vmatprep.subr.mxu0 0.0
  %1654 = vmatpush1.msra.mxu0 %v1098
  %1655 = vmatprep.subr.mxu0 0.0
  %1656 = vmatpush1.msra.mxu0 %v1097
  %1657 = vmatprep.subr.mxu0 0.0
  %1658 = vmatpush1.msra.mxu0 %v1096
  %1659 = vmatprep.subr.mxu0 0.0
  %1660 = vmatpush1.msra.mxu0 %v1095
  %1661 = vmatprep.subr.mxu0 0.0
  %1662 = vmatpush1.msra.mxu0 %v1094
  %1663 = vmatprep.subr.mxu0 0.0
  %1664 = vmatpush2.msra.mxu0 0.0
  %1665 = vmatprep.subr.mxu0 0.0
  %1666 = vmatpush2.msra.mxu0 0.0
  %1667 = vmatprep.subr.mxu0 0.0
  %1668 = vmatpush2.msra.mxu0 0.0
  %1669 = vmatprep.subr.mxu0 0.0
  %1670 = vmatpush2.msra.mxu0 0.0
  %1671 = vmatprep.subr.mxu0 0.0
  %1672 = vmatpush2.msra.mxu0 0.0
  %1673 = vmatprep.subr.mxu0 0.0
  %1674 = vmatpush2.msra.mxu0 0.0
  %1675 = vmatprep.subr.mxu0 0.0
  %1676 = vmatpush2.msra.mxu0 0.0
  %1677 = vmatprep.subr.mxu0 0.0
  %1678 = vmatpush2.msra.mxu0 0.0
  %1679 = vmatprep.subr.mxu0 0.0
  %1680 = vmatpush2.msra.mxu0 0.0
  %1681 = vmatprep.subr.mxu0 0.0
  %1682 = vmatpush2.msra.mxu0 0.0
  %1683 = vmatprep.subr.mxu0 0.0
  %1684 = vmatpush2.msra.mxu0 0.0
  %1685 = vmatprep.subr.mxu0 0.0
  %1686 = vmatpush2.msra.mxu0 0.0
  %1687 = vmatprep.subr.mxu0 0.0
  %1688 = vmatpush2.msra.mxu0 0.0
  %1689 = vmatprep.subr.mxu0 0.0
  %1690 = vmatpush2.msra.mxu0 0.0
  %1691 = vmatprep.subr.mxu0 0.0
  %1692 = vmatpush2.msra.mxu0 0.0
  %1693 = vmatprep.subr.mxu0 0.0
  %1694 = vmatpush2.msra.mxu0 0.0
  %1695 = vmatprep.mubr.f32.mxu0 0.0
  %1696 = vmatmul.mubr.f32.gmra.mxu0 %v1626
  %v1697 = vpop.f32.mrf.mxu0
  %v1698 = vadd.f32 0.0, %v1697
  %v1699 = vpop.f32.mrf.mxu0
  %1700 = vmatprep.mubr.f32.mxu0 0.0
  %1701 = vmatmul.mubr.f32.gmra.mxu0 %v1629
  %v1702 = vpop.f32.mrf.mxu0
  %v1703 = vadd.f32 0.0, %v1702
  %v1704 = vpop.f32.mrf.mxu0
  %1705 = vdwg.mxu0
  %v1706 = vadd.f32 %v1621, %v1698
  %v1707 = vadd.f32 %v1622, %v1703
  %v1708 = vld [vmem:[%s717 + $0x2] sm:$0xff]
  %v1709 = vld [vmem:[%s717 + $0xa] sm:$0xff]
  %v1711 = vsel %vm59, %v1708, 0
  %v1714 = vsel %vm59, %v1709, 0
  %1716 = vmatprep.subr.mxu0 0.0
  %1717 = vmatpush1.msra.mxu0 0.0
  %1718 = vmatprep.subr.mxu0 0.0
  %1719 = vmatpush1.msra.mxu0 0.0
  %1720 = vmatprep.subr.mxu0 0.0
  %1721 = vmatpush1.msra.mxu0 0.0
  %1722 = vmatprep.subr.mxu0 0.0
  %1723 = vmatpush1.msra.mxu0 0.0
  %1724 = vmatprep.subr.mxu0 0.0
  %1725 = vmatpush1.msra.mxu0 0.0
  %1726 = vmatprep.subr.mxu0 0.0
  %1727 = vmatpush1.msra.mxu0 0.0
  %1728 = vmatprep.subr.mxu0 0.0
  %1729 = vmatpush1.msra.mxu0 0.0
  %1730 = vmatprep.subr.mxu0 0.0
  %1731 = vmatpush1.msra.mxu0 0.0
  %1732 = vmatprep.subr.mxu0 0.0
  %1733 = vmatpush1.msra.mxu0 %v1195
  %1734 = vmatprep.subr.mxu0 0.0
  %1735 = vmatpush1.msra.mxu0 %v1194
  %1736 = vmatprep.subr.mxu0 0.0
  %1737 = vmatpush1.msra.mxu0 %v1193
  %1738 = vmatprep.subr.mxu0 0.0
  %1739 = vmatpush1.msra.mxu0 %v1192
  %1740 = vmatprep.subr.mxu0 0.0
  %1741 = vmatpush1.msra.mxu0 %v1191
  %1742 = vmatprep.subr.mxu0 0.0
  %1743 = vmatpush1.msra.mxu0 %v1190
  %1744 = vmatprep.subr.mxu0 0.0
  %1745 = vmatpush1.msra.mxu0 %v1189
  %1746 = vmatprep.subr.mxu0 0.0
  %1747 = vmatpush1.msra.mxu0 %v1188
  %1748 = vmatprep.subr.mxu0 0.0
  %1749 = vmatpush2.msra.mxu0 0.0
  %1750 = vmatprep.subr.mxu0 0.0
  %1751 = vmatpush2.msra.mxu0 0.0
  %1752 = vmatprep.subr.mxu0 0.0
  %1753 = vmatpush2.msra.mxu0 0.0
  %1754 = vmatprep.subr.mxu0 0.0
  %1755 = vmatpush2.msra.mxu0 0.0
  %1756 = vmatprep.subr.mxu0 0.0
  %1757 = vmatpush2.msra.mxu0 0.0
  %1758 = vmatprep.subr.mxu0 0.0
  %1759 = vmatpush2.msra.mxu0 0.0
  %1760 = vmatprep.subr.mxu0 0.0
  %1761 = vmatpush2.msra.mxu0 0.0
  %1762 = vmatprep.subr.mxu0 0.0
  %1763 = vmatpush2.msra.mxu0 0.0
  %1764 = vmatprep.subr.mxu0 0.0
  %1765 = vmatpush2.msra.mxu0 0.0
  %1766 = vmatprep.subr.mxu0 0.0
  %1767 = vmatpush2.msra.mxu0 0.0
  %1768 = vmatprep.subr.mxu0 0.0
  %1769 = vmatpush2.msra.mxu0 0.0
  %1770 = vmatprep.subr.mxu0 0.0
  %1771 = vmatpush2.msra.mxu0 0.0
  %1772 = vmatprep.subr.mxu0 0.0
  %1773 = vmatpush2.msra.mxu0 0.0
  %1774 = vmatprep.subr.mxu0 0.0
  %1775 = vmatpush2.msra.mxu0 0.0
  %1776 = vmatprep.subr.mxu0 0.0
  %1777 = vmatpush2.msra.mxu0 0.0
  %1778 = vmatprep.subr.mxu0 0.0
  %1779 = vmatpush2.msra.mxu0 0.0
  %1780 = vmatprep.mubr.f32.mxu0 0.0
  %1781 = vmatmul.mubr.f32.gmra.mxu0 %v1711
  %v1782 = vpop.f32.mrf.mxu0
  %v1783 = vadd.f32 0.0, %v1782
  %v1784 = vpop.f32.mrf.mxu0
  %1785 = vmatprep.mubr.f32.mxu0 0.0
  %1786 = vmatmul.mubr.f32.gmra.mxu0 %v1714
  %v1787 = vpop.f32.mrf.mxu0
  %v1788 = vadd.f32 0.0, %v1787
  %v1789 = vpop.f32.mrf.mxu0
  %1790 = vdwg.mxu0
  %v1791 = vadd.f32 %v1706, %v1783
  %v1792 = vadd.f32 %v1707, %v1788
  %v1793 = vadd.f32 %v1791, %v1283
  %v1794 = vadd.f32 %v1792, %v1283
  %v1795 = vld [vmem:[%s12] sm:$0xff]
  %v1796 = vld [vmem:[%s12 + $0x8] sm:$0xff]
  %v1797 = vld [vmem:[%s12 + $0x10] sm:$0xff]
  %v1798 = vld [vmem:[%s12 + $0x18] sm:$0xff]
  %v1799 = vld [vmem:[%s12 + $0x20] sm:$0xff]
  %v1800 = vld [vmem:[%s12 + $0x28] sm:$0xff]
  %v1801 = vld [vmem:[%s12 + $0x30] sm:$0xff]
  %v1802 = vld [vmem:[%s12 + $0x38] sm:$0xff]
  %v1803 = vld [vmem:[%s12 + $0x40] sm:$0xff]
  %v1804 = vld [vmem:[%s12 + $0x48] sm:$0xff]
  %v1805 = vld [vmem:[%s12 + $0x50] sm:$0xff]
  %v1806 = vld [vmem:[%s12 + $0x58] sm:$0xff]
  %v1807 = vld [vmem:[%s12 + $0x60] sm:$0xff]
  %v1808 = vld [vmem:[%s12 + $0x68] sm:$0xff]
  %v1809 = vld [vmem:[%s12 + $0x70] sm:$0xff]
  %v1810 = vld [vmem:[%s12 + $0x78] sm:$0xff]
  %v1811 = vld [vmem:[%s13] sm:$0xff]
  %v1812 = vadd.f32 %v1285, %v1286
  %v1813 = vrot.slane %v1812, 4
  %v1814 = vadd.f32 %v1812, %v1813
  %v1815 = vrot.slane %v1814, 2
  %v1816 = vadd.f32 %v1814, %v1815
  %v1817 = vrot.slane %v1816, 1
  %v1818 = vadd.f32 %v1816, %v1817
  %v1819 = vadd.f32 %v1818, 0.0
  %v1820 = vadd.f32 %v1793, %v1794
  %v1821 = vrot.slane %v1820, 4
  %v1822 = vadd.f32 %v1820, %v1821
  %v1823 = vrot.slane %v1822, 2
  %v1824 = vadd.f32 %v1822, %v1823
  %v1825 = vrot.slane %v1824, 1
  %v1826 = vadd.f32 %v1824, %v1825
  %v1827 = vadd.f32 %v1819, %v1826
  %1828 = vmatprep.subr.mxu0 0.0
  %1829 = vmatpush1.msra.mxu0 %v1810
  %1830 = vmatprep.subr.mxu0 0.0
  %1831 = vmatpush1.msra.mxu0 %v1809
  %1832 = vmatprep.subr.mxu0 0.0
  %1833 = vmatpush1.msra.mxu0 %v1808
  %1834 = vmatprep.subr.mxu0 0.0
  %1835 = vmatpush1.msra.mxu0 %v1807
  %1836 = vmatprep.subr.mxu0 0.0
  %1837 = vmatpush1.msra.mxu0 %v1806
  %1838 = vmatprep.subr.mxu0 0.0
  %1839 = vmatpush1.msra.mxu0 %v1805
  %1840 = vmatprep.subr.mxu0 0.0
  %1841 = vmatpush1.msra.mxu0 %v1804
  %1842 = vmatprep.subr.mxu0 0.0
  %1843 = vmatpush1.msra.mxu0 %v1803
  %1844 = vmatprep.subr.mxu0 0.0
  %1845 = vmatpush1.msra.mxu0 %v1802
  %1846 = vmatprep.subr.mxu0 0.0
  %1847 = vmatpush1.msra.mxu0 %v1801
  %1848 = vmatprep.subr.mxu0 0.0
  %1849 = vmatpush1.msra.mxu0 %v1800
  %1850 = vmatprep.subr.mxu0 0.0
  %1851 = vmatpush1.msra.mxu0 %v1799
  %1852 = vmatprep.subr.mxu0 0.0
  %1853 = vmatpush1.msra.mxu0 %v1798
  %1854 = vmatprep.subr.mxu0 0.0
  %1855 = vmatpush1.msra.mxu0 %v1797
  %1856 = vmatprep.subr.mxu0 0.0
  %1857 = vmatpush1.msra.mxu0 %v1796
  %1858 = vmatprep.subr.mxu0 0.0
  %1859 = vmatpush1.msra.mxu0 %v1795
  %1860 = vmatprep.subr.mxu0 0.0
  %1861 = vmatpush2.msra.mxu0 0.0
  %1862 = vmatprep.subr.mxu0 0.0
  %1863 = vmatpush2.msra.mxu0 0.0
  %1864 = vmatprep.subr.mxu0 0.0
  %1865 = vmatpush2.msra.mxu0 0.0
  %1866 = vmatprep.subr.mxu0 0.0
  %1867 = vmatpush2.msra.mxu0 0.0
  %1868 = vmatprep.subr.mxu0 0.0
  %1869 = vmatpush2.msra.mxu0 0.0
  %1870 = vmatprep.subr.mxu0 0.0
  %1871 = vmatpush2.msra.mxu0 0.0
  %1872 = vmatprep.subr.mxu0 0.0
  %1873 = vmatpush2.msra.mxu0 0.0
  %1874 = vmatprep.subr.mxu0 0.0
  %1875 = vmatpush2.msra.mxu0 0.0
  %1876 = vmatprep.subr.mxu0 0.0
  %1877 = vmatpush2.msra.mxu0 0.0
  %1878 = vmatprep.subr.mxu0 0.0
  %1879 = vmatpush2.msra.mxu0 0.0
  %1880 = vmatprep.subr.mxu0 0.0
  %1881 = vmatpush2.msra.mxu0 0.0
  %1882 = vmatprep.subr.mxu0 0.0
  %1883 = vmatpush2.msra.mxu0 0.0
  %1884 = vmatprep.subr.mxu0 0.0
  %1885 = vmatpush2.msra.mxu0 0.0
  %1886 = vmatprep.subr.mxu0 0.0
  %1887 = vmatpush2.msra.mxu0 0.0
  %1888 = vmatprep.subr.mxu0 0.0
  %1889 = vmatpush2.msra.mxu0 0.0
  %1890 = vmatprep.subr.mxu0 0.0
  %1891 = vmatpush2.msra.mxu0 0.0
  %1892 = vmatprep.mubr.f32.mxu0 0.0
  %1893 = vmatmul.mubr.f32.gmra.mxu0 %v1827
  %v1894 = vpop.f32.mrf.mxu0
  %v1895 = vadd.f32 0.0, %v1894
  %v1896 = vpop.f32.mrf.mxu0
  %1897 = vdwg.mxu0
  %v1898 = vmul.f32 %v1895, 0.001953125
  %v1900 = vsel %vm247, %v1898, 0
  %1902 = vmatprep.subr.mxu0 0.0
  %1903 = vmatpush1.msra.mxu0 0.0
  %1904 = vmatprep.subr.mxu0 0.0
  %1905 = vmatpush1.msra.mxu0 0.0
  %1906 = vmatprep.subr.mxu0 0.0
  %1907 = vmatpush1.msra.mxu0 0.0
  %1908 = vmatprep.subr.mxu0 0.0
  %1909 = vmatpush1.msra.mxu0 0.0
  %1910 = vmatprep.subr.mxu0 0.0
  %1911 = vmatpush1.msra.mxu0 0.0
  %1912 = vmatprep.subr.mxu0 0.0
  %1913 = vmatpush1.msra.mxu0 0.0
  %1914 = vmatprep.subr.mxu0 0.0
  %1915 = vmatpush1.msra.mxu0 0.0
  %1916 = vmatprep.subr.mxu0 0.0
  %1917 = vmatpush1.msra.mxu0 0.0
  %1918 = vmatprep.subr.mxu0 0.0
  %1919 = vmatpush1.msra.mxu0 0.0
  %1920 = vmatprep.subr.mxu0 0.0
  %1921 = vmatpush1.msra.mxu0 0.0
  %1922 = vmatprep.subr.mxu0 0.0
  %1923 = vmatpush1.msra.mxu0 0.0
  %1924 = vmatprep.subr.mxu0 0.0
  %1925 = vmatpush1.msra.mxu0 0.0
  %1926 = vmatprep.subr.mxu0 0.0
  %1927 = vmatpush1.msra.mxu0 0.0
  %1928 = vmatprep.subr.mxu0 0.0
  %1929 = vmatpush1.msra.mxu0 0.0
  %1930 = vmatprep.subr.mxu0 0.0
  %1931 = vmatpush1.msra.mxu0 0.0
  %1932 = vmatprep.subr.mxu0 0.0
  %1933 = vmatpush1.msra.mxu0 %v1811
  %1934 = vmatprep.subr.mxu0 0.0
  %1935 = vmatpush2.msra.mxu0 0.0
  %1936 = vmatprep.subr.mxu0 0.0
  %1937 = vmatpush2.msra.mxu0 0.0
  %1938 = vmatprep.subr.mxu0 0.0
  %1939 = vmatpush2.msra.mxu0 0.0
  %1940 = vmatprep.subr.mxu0 0.0
  %1941 = vmatpush2.msra.mxu0 0.0
  %1942 = vmatprep.subr.mxu0 0.0
  %1943 = vmatpush2.msra.mxu0 0.0
  %1944 = vmatprep.subr.mxu0 0.0
  %1945 = vmatpush2.msra.mxu0 0.0
  %1946 = vmatprep.subr.mxu0 0.0
  %1947 = vmatpush2.msra.mxu0 0.0
  %1948 = vmatprep.subr.mxu0 0.0
  %1949 = vmatpush2.msra.mxu0 0.0
  %1950 = vmatprep.subr.mxu0 0.0
  %1951 = vmatpush2.msra.mxu0 0.0
  %1952 = vmatprep.subr.mxu0 0.0
  %1953 = vmatpush2.msra.mxu0 0.0
  %1954 = vmatprep.subr.mxu0 0.0
  %1955 = vmatpush2.msra.mxu0 0.0
  %1956 = vmatprep.subr.mxu0 0.0
  %1957 = vmatpush2.msra.mxu0 0.0
  %1958 = vmatprep.subr.mxu0 0.0
  %1959 = vmatpush2.msra.mxu0 0.0
  %1960 = vmatprep.subr.mxu0 0.0
  %1961 = vmatpush2.msra.mxu0 0.0
  %1962 = vmatprep.subr.mxu0 0.0
  %1963 = vmatpush2.msra.mxu0 0.0
  %1964 = vmatprep.subr.mxu0 0.0
  %1965 = vmatpush2.msra.mxu0 0.0
  %1966 = vmatprep.mubr.f32.mxu0 0.0
  %1967 = vmatmul.mubr.f32.gmra.mxu0 %v1900
  %v1968 = vpop.f32.mrf.mxu0
  %v1969 = vadd.f32 0.0, %v1968
  %v1970 = vpop.f32.mrf.mxu0
  %1971 = vdwg.mxu0
  %v1972 = vlaneseq
  %v1973 = vshrl.u32 %v1972, 7
  %v1974 = vsub.s32 0, %v1973
  %v1975 = vrot.slane %v1969, %v1974
  %v1976 = vsub.f32 %v1285, %v1975
  %v1977 = vsub.f32 %v1286, %v1975
  %v1978 = vmul.f32 %v1976, %v1976
  %v1979 = vmul.f32 %v1977, %v1977
  %v1980 = vadd.f32 %v1978, %v1979
  %v1981 = vrot.slane %v1980, 4
  %v1982 = vadd.f32 %v1980, %v1981
  %v1983 = vrot.slane %v1982, 2
  %v1984 = vadd.f32 %v1982, %v1983
  %v1985 = vrot.slane %v1984, 1
  %v1986 = vadd.f32 %v1984, %v1985
  %v1987 = vadd.f32 %v1986, 0.0
  %v1988 = vsub.f32 %v1793, %v1975
  %v1989 = vsub.f32 %v1794, %v1975
  %v1990 = vmul.f32 %v1988, %v1988
  %v1991 = vmul.f32 %v1989, %v1989
  %v1992 = vadd.f32 %v1990, %v1991
  %v1993 = vrot.slane %v1992, 4
  %v1994 = vadd.f32 %v1992, %v1993
  %v1995 = vrot.slane %v1994, 2
  %v1996 = vadd.f32 %v1994, %v1995
  %v1997 = vrot.slane %v1996, 1
  %v1998 = vadd.f32 %v1996, %v1997
  %v1999 = vadd.f32 %v1987, %v1998
  %2000 = vmatprep.subr.mxu0 0.0
  %2001 = vmatpush1.msra.mxu0 %v1810
  %2002 = vmatprep.subr.mxu0 0.0
  %2003 = vmatpush1.msra.mxu0 %v1809
  %2004 = vmatprep.subr.mxu0 0.0
  %2005 = vmatpush1.msra.mxu0 %v1808
  %2006 = vmatprep.subr.mxu0 0.0
  %2007 = vmatpush1.msra.mxu0 %v1807
  %2008 = vmatprep.subr.mxu0 0.0
  %2009 = vmatpush1.msra.mxu0 %v1806
  %2010 = vmatprep.subr.mxu0 0.0
  %2011 = vmatpush1.msra.mxu0 %v1805
  %2012 = vmatprep.subr.mxu0 0.0
  %2013 = vmatpush1.msra.mxu0 %v1804
  %2014 = vmatprep.subr.mxu0 0.0
  %2015 = vmatpush1.msra.mxu0 %v1803
  %2016 = vmatprep.subr.mxu0 0.0
  %2017 = vmatpush1.msra.mxu0 %v1802
  %2018 = vmatprep.subr.mxu0 0.0
  %2019 = vmatpush1.msra.mxu0 %v1801
  %2020 = vmatprep.subr.mxu0 0.0
  %2021 = vmatpush1.msra.mxu0 %v1800
  %2022 = vmatprep.subr.mxu0 0.0
  %2023 = vmatpush1.msra.mxu0 %v1799
  %2024 = vmatprep.subr.mxu0 0.0
  %2025 = vmatpush1.msra.mxu0 %v1798
  %2026 = vmatprep.subr.mxu0 0.0
  %2027 = vmatpush1.msra.mxu0 %v1797
  %2028 = vmatprep.subr.mxu0 0.0
  %2029 = vmatpush1.msra.mxu0 %v1796
  %2030 = vmatprep.subr.mxu0 0.0
  %2031 = vmatpush1.msra.mxu0 %v1795
  %2032 = vmatprep.subr.mxu0 0.0
  %2033 = vmatpush2.msra.mxu0 0.0
  %2034 = vmatprep.subr.mxu0 0.0
  %2035 = vmatpush2.msra.mxu0 0.0
  %2036 = vmatprep.subr.mxu0 0.0
  %2037 = vmatpush2.msra.mxu0 0.0
  %2038 = vmatprep.subr.mxu0 0.0
  %2039 = vmatpush2.msra.mxu0 0.0
  %2040 = vmatprep.subr.mxu0 0.0
  %2041 = vmatpush2.msra.mxu0 0.0
  %2042 = vmatprep.subr.mxu0 0.0
  %2043 = vmatpush2.msra.mxu0 0.0
  %2044 = vmatprep.subr.mxu0 0.0
  %2045 = vmatpush2.msra.mxu0 0.0
  %2046 = vmatprep.subr.mxu0 0.0
  %2047 = vmatpush2.msra.mxu0 0.0
  %2048 = vmatprep.subr.mxu0 0.0
  %2049 = vmatpush2.msra.mxu0 0.0
  %2050 = vmatprep.subr.mxu0 0.0
  %2051 = vmatpush2.msra.mxu0 0.0
  %2052 = vmatprep.subr.mxu0 0.0
  %2053 = vmatpush2.msra.mxu0 0.0
  %2054 = vmatprep.subr.mxu0 0.0
  %2055 = vmatpush2.msra.mxu0 0.0
  %2056 = vmatprep.subr.mxu0 0.0
  %2057 = vmatpush2.msra.mxu0 0.0
  %2058 = vmatprep.subr.mxu0 0.0
  %2059 = vmatpush2.msra.mxu0 0.0
  %2060 = vmatprep.subr.mxu0 0.0
  %2061 = vmatpush2.msra.mxu0 0.0
  %2062 = vmatprep.subr.mxu0 0.0
  %2063 = vmatpush2.msra.mxu0 0.0
  %2064 = vmatprep.mubr.f32.mxu0 0.0
  %2065 = vmatmul.mubr.f32.gmra.mxu0 %v1999
  %v2066 = vpop.f32.mrf.mxu0
  %v2067 = vadd.f32 0.0, %v2066
  %v2068 = vpop.f32.mrf.mxu0
  %2069 = vdwg.mxu0
  %v2070 = vmul.f32 %v2067, 0.001953125
  %v2071 = vld [vmem:[%s14] sm:$0x1]
  %v2072 = vadd.f32 %v2070, 1e-05
  %v2073 = vrsqrt.pop %v2072
  %v2074 = vmul.f32 %v2071, %v2073
  %v2075 = vld [vmem:[%s15] sm:$0x1]
  %v2076 = vmul.f32 %v1898, %v2074
  %v2077 = vsub.f32 %v2075, %v2076
  %v2079 = vsel %vm247, %v2074, 0
  %2081 = vmatprep.subr.mxu0 0.0
  %2082 = vmatpush1.msra.mxu0 0.0
  %2083 = vmatprep.subr.mxu0 0.0
  %2084 = vmatpush1.msra.mxu0 0.0
  %2085 = vmatprep.subr.mxu0 0.0
  %2086 = vmatpush1.msra.mxu0 0.0
  %2087 = vmatprep.subr.mxu0 0.0
  %2088 = vmatpush1.msra.mxu0 0.0
  %2089 = vmatprep.subr.mxu0 0.0
  %2090 = vmatpush1.msra.mxu0 0.0
  %2091 = vmatprep.subr.mxu0 0.0
  %2092 = vmatpush1.msra.mxu0 0.0
  %2093 = vmatprep.subr.mxu0 0.0
  %2094 = vmatpush1.msra.mxu0 0.0
  %2095 = vmatprep.subr.mxu0 0.0
  %2096 = vmatpush1.msra.mxu0 0.0
  %2097 = vmatprep.subr.mxu0 0.0
  %2098 = vmatpush1.msra.mxu0 0.0
  %2099 = vmatprep.subr.mxu0 0.0
  %2100 = vmatpush1.msra.mxu0 0.0
  %2101 = vmatprep.subr.mxu0 0.0
  %2102 = vmatpush1.msra.mxu0 0.0
  %2103 = vmatprep.subr.mxu0 0.0
  %2104 = vmatpush1.msra.mxu0 0.0
  %2105 = vmatprep.subr.mxu0 0.0
  %2106 = vmatpush1.msra.mxu0 0.0
  %2107 = vmatprep.subr.mxu0 0.0
  %2108 = vmatpush1.msra.mxu0 0.0
  %2109 = vmatprep.subr.mxu0 0.0
  %2110 = vmatpush1.msra.mxu0 0.0
  %2111 = vmatprep.subr.mxu0 0.0
  %2112 = vmatpush1.msra.mxu0 %v1811
  %2113 = vmatprep.subr.mxu0 0.0
  %2114 = vmatpush2.msra.mxu0 0.0
  %2115 = vmatprep.subr.mxu0 0.0
  %2116 = vmatpush2.msra.mxu0 0.0
  %2117 = vmatprep.subr.mxu0 0.0
  %2118 = vmatpush2.msra.mxu0 0.0
  %2119 = vmatprep.subr.mxu0 0.0
  %2120 = vmatpush2.msra.mxu0 0.0
  %2121 = vmatprep.subr.mxu0 0.0
  %2122 = vmatpush2.msra.mxu0 0.0
  %2123 = vmatprep.subr.mxu0 0.0
  %2124 = vmatpush2.msra.mxu0 0.0
  %2125 = vmatprep.subr.mxu0 0.0
  %2126 = vmatpush2.msra.mxu0 0.0
  %2127 = vmatprep.subr.mxu0 0.0
  %2128 = vmatpush2.msra.mxu0 0.0
  %2129 = vmatprep.subr.mxu0 0.0
  %2130 = vmatpush2.msra.mxu0 0.0
  %2131 = vmatprep.subr.mxu0 0.0
  %2132 = vmatpush2.msra.mxu0 0.0
  %2133 = vmatprep.subr.mxu0 0.0
  %2134 = vmatpush2.msra.mxu0 0.0
  %2135 = vmatprep.subr.mxu0 0.0
  %2136 = vmatpush2.msra.mxu0 0.0
  %2137 = vmatprep.subr.mxu0 0.0
  %2138 = vmatpush2.msra.mxu0 0.0
  %2139 = vmatprep.subr.mxu0 0.0
  %2140 = vmatpush2.msra.mxu0 0.0
  %2141 = vmatprep.subr.mxu0 0.0
  %2142 = vmatpush2.msra.mxu0 0.0
  %2143 = vmatprep.subr.mxu0 0.0
  %2144 = vmatpush2.msra.mxu0 0.0
  %2145 = vmatprep.mubr.f32.mxu0 0.0
  %2146 = vmatmul.mubr.f32.gmra.mxu0 %v2079
  %v2147 = vpop.f32.mrf.mxu0
  %v2148 = vadd.f32 0.0, %v2147
  %v2149 = vpop.f32.mrf.mxu0
  %2150 = vdwg.mxu0
  %v2152 = vsel %vm247, %v2077, 0
  %2154 = vmatprep.subr.mxu0 0.0
  %2155 = vmatpush1.msra.mxu0 0.0
  %2156 = vmatprep.subr.mxu0 0.0
  %2157 = vmatpush1.msra.mxu0 0.0
  %2158 = vmatprep.subr.mxu0 0.0
  %2159 = vmatpush1.msra.mxu0 0.0
  %2160 = vmatprep.subr.mxu0 0.0
  %2161 = vmatpush1.msra.mxu0 0.0
  %2162 = vmatprep.subr.mxu0 0.0
  %2163 = vmatpush1.msra.mxu0 0.0
  %2164 = vmatprep.subr.mxu0 0.0
  %2165 = vmatpush1.msra.mxu0 0.0
  %2166 = vmatprep.subr.mxu0 0.0
  %2167 = vmatpush1.msra.mxu0 0.0
  %2168 = vmatprep.subr.mxu0 0.0
  %2169 = vmatpush1.msra.mxu0 0.0
  %2170 = vmatprep.subr.mxu0 0.0
  %2171 = vmatpush1.msra.mxu0 0.0
  %2172 = vmatprep.subr.mxu0 0.0
  %2173 = vmatpush1.msra.mxu0 0.0
  %2174 = vmatprep.subr.mxu0 0.0
  %2175 = vmatpush1.msra.mxu0 0.0
  %2176 = vmatprep.subr.mxu0 0.0
  %2177 = vmatpush1.msra.mxu0 0.0
  %2178 = vmatprep.subr.mxu0 0.0
  %2179 = vmatpush1.msra.mxu0 0.0
  %2180 = vmatprep.subr.mxu0 0.0
  %2181 = vmatpush1.msra.mxu0 0.0
  %2182 = vmatprep.subr.mxu0 0.0
  %2183 = vmatpush1.msra.mxu0 0.0
  %2184 = vmatprep.subr.mxu0 0.0
  %2185 = vmatpush1.msra.mxu0 %v1811
  %2186 = vmatprep.subr.mxu0 0.0
  %2187 = vmatpush2.msra.mxu0 0.0
  %2188 = vmatprep.subr.mxu0 0.0
  %2189 = vmatpush2.msra.mxu0 0.0
  %2190 = vmatprep.subr.mxu0 0.0
  %2191 = vmatpush2.msra.mxu0 0.0
  %2192 = vmatprep.subr.mxu0 0.0
  %2193 = vmatpush2.msra.mxu0 0.0
  %2194 = vmatprep.subr.mxu0 0.0
  %2195 = vmatpush2.msra.mxu0 0.0
  %2196 = vmatprep.subr.mxu0 0.0
  %2197 = vmatpush2.msra.mxu0 0.0
  %2198 = vmatprep.subr.mxu0 0.0
  %2199 = vmatpush2.msra.mxu0 0.0
  %2200 = vmatprep.subr.mxu0 0.0
  %2201 = vmatpush2.msra.mxu0 0.0
  %2202 = vmatprep.subr.mxu0 0.0
  %2203 = vmatpush2.msra.mxu0 0.0
  %2204 = vmatprep.subr.mxu0 0.0
  %2205 = vmatpush2.msra.mxu0 0.0
  %2206 = vmatprep.subr.mxu0 0.0
  %2207 = vmatpush2.msra.mxu0 0.0
  %2208 = vmatprep.subr.mxu0 0.0
  %2209 = vmatpush2.msra.mxu0 0.0
  %2210 = vmatprep.subr.mxu0 0.0
  %2211 = vmatpush2.msra.mxu0 0.0
  %2212 = vmatprep.subr.mxu0 0.0
  %2213 = vmatpush2.msra.mxu0 0.0
  %2214 = vmatprep.subr.mxu0 0.0
  %2215 = vmatpush2.msra.mxu0 0.0
  %2216 = vmatprep.subr.mxu0 0.0
  %2217 = vmatpush2.msra.mxu0 0.0
  %2218 = vmatprep.mubr.f32.mxu0 0.0
  %2219 = vmatmul.mubr.f32.gmra.mxu0 %v2152
  %v2220 = vpop.f32.mrf.mxu0
  %v2221 = vadd.f32 0.0, %v2220
  %v2222 = vpop.f32.mrf.mxu0
  %2223 = vdwg.mxu0
  %v2224 = vlaneseq
  %v2225 = vshrl.u32 %v2224, 7
  %v2226 = vsub.s32 0, %v2225
  %v2227 = vrot.slane %v2148, %v2226
  %v2228 = vmul.f32 %v1285, %v2227
  %v2229 = vmul.f32 %v1286, %v2227
  %v2230 = vlaneseq
  %v2231 = vshrl.u32 %v2230, 7
  %v2232 = vsub.s32 0, %v2231
  %v2233 = vrot.slane %v2221, %v2232
  %v2234 = vadd.f32 %v2228, %v2233
  %v2235 = vadd.f32 %v2229, %v2233
  %v2236 = vmax.f32 %v2234, 0.0
  %v2237 = vmax.f32 %v2235, 0.0
  %2238 = vst [vmem:[#allocation4 + $0x1] sm:$0xff] %v2236
  %2239 = vst [vmem:[#allocation4 + $0x9] sm:$0xff] %v2237
  %v2240 = vmul.f32 %v1793, %v2227
  %v2241 = vmul.f32 %v1794, %v2227
  %v2242 = vadd.f32 %v2240, %v2233
  %v2243 = vadd.f32 %v2241, %v2233
  %v2244 = vmax.f32 %v2242, 0.0
  %v2245 = vmax.f32 %v2243, 0.0
  %s2246 = scalar_lea.vmem [#allocation4], 24
  %2247 = vst [vmem:[%s2246 + $0x1] sm:$0xff] %v2244
  %2248 = vst [vmem:[%s2246 + $0x9] sm:$0xff] %v2245
  %v2249 = vld [vmem:[%s11] sm:$0x1]
  %v2250 = vld [vmem:[#allocation4] sm:$0xff]
  %v2251 = vld [vmem:[#allocation4 + $0x8] sm:$0xff]
  %v2252 = vld [vmem:[%s10] sm:$0xff]
  %v2253 = vld [vmem:[%s10 + $0x8] sm:$0xff]
  %v2254 = vld [vmem:[%s10 + $0x10] sm:$0xff]
  %v2255 = vld [vmem:[%s10 + $0x18] sm:$0xff]
  %v2256 = vld [vmem:[%s10 + $0x20] sm:$0xff]
  %v2257 = vld [vmem:[%s10 + $0x28] sm:$0xff]
  %v2258 = vld [vmem:[%s10 + $0x30] sm:$0xff]
  %v2259 = vld [vmem:[%s10 + $0x38] sm:$0xff]
  %v2260 = vld [vmem:[%s10 + $0x40] sm:$0xff]
  %v2261 = vld [vmem:[%s10 + $0x48] sm:$0xff]
  %v2262 = vld [vmem:[%s10 + $0x50] sm:$0xff]
  %v2263 = vld [vmem:[%s10 + $0x58] sm:$0xff]
  %v2264 = vld [vmem:[%s10 + $0x60] sm:$0xff]
  %v2265 = vld [vmem:[%s10 + $0x68] sm:$0xff]
  %v2266 = vld [vmem:[%s10 + $0x70] sm:$0xff]
  %v2267 = vld [vmem:[%s10 + $0x78] sm:$0xff]
  %v2268 = vld [vmem:[#allocation4 + $0x1] sm:$0xff]
  %v2269 = vld [vmem:[#allocation4 + $0x9] sm:$0xff]
  %s2270 = scalar_lea.vmem %s10, 128
  %v2271 = vld [vmem:[%s2270] sm:$0xff]
  %v2272 = vld [vmem:[%s2270 + $0x8] sm:$0xff]
  %v2273 = vld [vmem:[%s2270 + $0x10] sm:$0xff]
  %v2274 = vld [vmem:[%s2270 + $0x18] sm:$0xff]
  %v2275 = vld [vmem:[%s2270 + $0x20] sm:$0xff]
  %v2276 = vld [vmem:[%s2270 + $0x28] sm:$0xff]
  %v2277 = vld [vmem:[%s2270 + $0x30] sm:$0xff]
  %v2278 = vld [vmem:[%s2270 + $0x38] sm:$0xff]
  %v2279 = vld [vmem:[%s2270 + $0x40] sm:$0xff]
  %v2280 = vld [vmem:[%s2270 + $0x48] sm:$0xff]
  %v2281 = vld [vmem:[%s2270 + $0x50] sm:$0xff]
  %v2282 = vld [vmem:[%s2270 + $0x58] sm:$0xff]
  %v2283 = vld [vmem:[%s2270 + $0x60] sm:$0xff]
  %v2284 = vld [vmem:[%s2270 + $0x68] sm:$0xff]
  %v2285 = vld [vmem:[%s2270 + $0x70] sm:$0xff]
  %v2286 = vld [vmem:[%s2270 + $0x78] sm:$0xff]
  %2287 = vmatprep.subr.mxu0 0.0
  %2288 = vmatpush1.msra.mxu0 %v2286
  %2289 = vmatprep.subr.mxu0 0.0
  %2290 = vmatpush1.msra.mxu0 %v2285
  %2291 = vmatprep.subr.mxu0 0.0
  %2292 = vmatpush1.msra.mxu0 %v2284
  %2293 = vmatprep.subr.mxu0 0.0
  %2294 = vmatpush1.msra.mxu0 %v2283
  %2295 = vmatprep.subr.mxu0 0.0
  %2296 = vmatpush1.msra.mxu0 %v2282
  %2297 = vmatprep.subr.mxu0 0.0
  %2298 = vmatpush1.msra.mxu0 %v2281
  %2299 = vmatprep.subr.mxu0 0.0
  %2300 = vmatpush1.msra.mxu0 %v2280
  %2301 = vmatprep.subr.mxu0 0.0
  %2302 = vmatpush1.msra.mxu0 %v2279
  %2303 = vmatprep.subr.mxu0 0.0
  %2304 = vmatpush1.msra.mxu0 %v2278
  %2305 = vmatprep.subr.mxu0 0.0
  %2306 = vmatpush1.msra.mxu0 %v2277
  %2307 = vmatprep.subr.mxu0 0.0
  %2308 = vmatpush1.msra.mxu0 %v2276
  %2309 = vmatprep.subr.mxu0 0.0
  %2310 = vmatpush1.msra.mxu0 %v2275
  %2311 = vmatprep.subr.mxu0 0.0
  %2312 = vmatpush1.msra.mxu0 %v2274
  %2313 = vmatprep.subr.mxu0 0.0
  %2314 = vmatpush1.msra.mxu0 %v2273
  %2315 = vmatprep.subr.mxu0 0.0
  %2316 = vmatpush1.msra.mxu0 %v2272
  %2317 = vmatprep.subr.mxu0 0.0
  %2318 = vmatpush1.msra.mxu0 %v2271
  %2319 = vmatprep.subr.mxu0 0.0
  %2320 = vmatpush2.msra.mxu0 0.0
  %2321 = vmatprep.subr.mxu0 0.0
  %2322 = vmatpush2.msra.mxu0 0.0
  %2323 = vmatprep.subr.mxu0 0.0
  %2324 = vmatpush2.msra.mxu0 0.0
  %2325 = vmatprep.subr.mxu0 0.0
  %2326 = vmatpush2.msra.mxu0 0.0
  %2327 = vmatprep.subr.mxu0 0.0
  %2328 = vmatpush2.msra.mxu0 0.0
  %2329 = vmatprep.subr.mxu0 0.0
  %2330 = vmatpush2.msra.mxu0 0.0
  %2331 = vmatprep.subr.mxu0 0.0
  %2332 = vmatpush2.msra.mxu0 0.0
  %2333 = vmatprep.subr.mxu0 0.0
  %2334 = vmatpush2.msra.mxu0 0.0
  %2335 = vmatprep.subr.mxu0 0.0
  %2336 = vmatpush2.msra.mxu0 0.0
  %2337 = vmatprep.subr.mxu0 0.0
  %2338 = vmatpush2.msra.mxu0 0.0
  %2339 = vmatprep.subr.mxu0 0.0
  %2340 = vmatpush2.msra.mxu0 0.0
  %2341 = vmatprep.subr.mxu0 0.0
  %2342 = vmatpush2.msra.mxu0 0.0
  %2343 = vmatprep.subr.mxu0 0.0
  %2344 = vmatpush2.msra.mxu0 0.0
  %2345 = vmatprep.subr.mxu0 0.0
  %2346 = vmatpush2.msra.mxu0 0.0
  %2347 = vmatprep.subr.mxu0 0.0
  %2348 = vmatpush2.msra.mxu0 0.0
  %2349 = vmatprep.subr.mxu0 0.0
  %2350 = vmatpush2.msra.mxu0 0.0
  %2351 = vmatprep.mubr.f32.mxu0 0.0
  %2352 = vmatmul.mubr.f32.gmra.mxu0 %v2268
  %v2353 = vpop.f32.mrf.mxu0
  %v2354 = vadd.f32 0.0, %v2353
  %v2355 = vpop.f32.mrf.mxu0
  %2356 = vmatprep.mubr.f32.mxu0 0.0
  %2357 = vmatmul.mubr.f32.gmra.mxu0 %v2269
  %v2358 = vpop.f32.mrf.mxu0
  %v2359 = vadd.f32 0.0, %v2358
  %v2360 = vpop.f32.mrf.mxu0
  %2361 = vdwg.mxu0
  %2362 = vmatprep.subr.mxu0 0.0
  %2363 = vmatpush1.msra.mxu0 %v2267
  %2364 = vmatprep.subr.mxu0 0.0
  %2365 = vmatpush1.msra.mxu0 %v2266
  %2366 = vmatprep.subr.mxu0 0.0
  %2367 = vmatpush1.msra.mxu0 %v2265
  %2368 = vmatprep.subr.mxu0 0.0
  %2369 = vmatpush1.msra.mxu0 %v2264
  %2370 = vmatprep.subr.mxu0 0.0
  %2371 = vmatpush1.msra.mxu0 %v2263
  %2372 = vmatprep.subr.mxu0 0.0
  %2373 = vmatpush1.msra.mxu0 %v2262
  %2374 = vmatprep.subr.mxu0 0.0
  %2375 = vmatpush1.msra.mxu0 %v2261
  %2376 = vmatprep.subr.mxu0 0.0
  %2377 = vmatpush1.msra.mxu0 %v2260
  %2378 = vmatprep.subr.mxu0 0.0
  %2379 = vmatpush1.msra.mxu0 %v2259
  %2380 = vmatprep.subr.mxu0 0.0
  %2381 = vmatpush1.msra.mxu0 %v2258
  %2382 = vmatprep.subr.mxu0 0.0
  %2383 = vmatpush1.msra.mxu0 %v2257
  %2384 = vmatprep.subr.mxu0 0.0
  %2385 = vmatpush1.msra.mxu0 %v2256
  %2386 = vmatprep.subr.mxu0 0.0
  %2387 = vmatpush1.msra.mxu0 %v2255
  %2388 = vmatprep.subr.mxu0 0.0
  %2389 = vmatpush1.msra.mxu0 %v2254
  %2390 = vmatprep.subr.mxu0 0.0
  %2391 = vmatpush1.msra.mxu0 %v2253
  %2392 = vmatprep.subr.mxu0 0.0
  %2393 = vmatpush1.msra.mxu0 %v2252
  %2394 = vmatprep.subr.mxu0 0.0
  %2395 = vmatpush2.msra.mxu0 0.0
  %2396 = vmatprep.subr.mxu0 0.0
  %2397 = vmatpush2.msra.mxu0 0.0
  %2398 = vmatprep.subr.mxu0 0.0
  %2399 = vmatpush2.msra.mxu0 0.0
  %2400 = vmatprep.subr.mxu0 0.0
  %2401 = vmatpush2.msra.mxu0 0.0
  %2402 = vmatprep.subr.mxu0 0.0
  %2403 = vmatpush2.msra.mxu0 0.0
  %2404 = vmatprep.subr.mxu0 0.0
  %2405 = vmatpush2.msra.mxu0 0.0
  %2406 = vmatprep.subr.mxu0 0.0
  %2407 = vmatpush2.msra.mxu0 0.0
  %2408 = vmatprep.subr.mxu0 0.0
  %2409 = vmatpush2.msra.mxu0 0.0
  %2410 = vmatprep.subr.mxu0 0.0
  %2411 = vmatpush2.msra.mxu0 0.0
  %2412 = vmatprep.subr.mxu0 0.0
  %2413 = vmatpush2.msra.mxu0 0.0
  %2414 = vmatprep.subr.mxu0 0.0
  %2415 = vmatpush2.msra.mxu0 0.0
  %2416 = vmatprep.subr.mxu0 0.0
  %2417 = vmatpush2.msra.mxu0 0.0
  %2418 = vmatprep.subr.mxu0 0.0
  %2419 = vmatpush2.msra.mxu0 0.0
  %2420 = vmatprep.subr.mxu0 0.0
  %2421 = vmatpush2.msra.mxu0 0.0
  %2422 = vmatprep.subr.mxu0 0.0
  %2423 = vmatpush2.msra.mxu0 0.0
  %2424 = vmatprep.subr.mxu0 0.0
  %2425 = vmatpush2.msra.mxu0 0.0
  %2426 = vmatprep.mubr.f32.mxu0 0.0
  %2427 = vmatmul.mubr.f32.gmra.mxu0 %v2250
  %v2428 = vpop.f32.mrf.mxu0
  %v2429 = vadd.f32 %v2354, %v2428
  %v2430 = vpop.f32.mrf.mxu0
  %2431 = vmatprep.mubr.f32.mxu0 0.0
  %2432 = vmatmul.mubr.f32.gmra.mxu0 %v2251
  %v2433 = vpop.f32.mrf.mxu0
  %v2434 = vadd.f32 %v2359, %v2433
  %v2435 = vpop.f32.mrf.mxu0
  %2436 = vdwg.mxu0
  %v2437 = vld [vmem:[#allocation4 + $0x2] sm:$0xff]
  %v2438 = vld [vmem:[#allocation4 + $0xa] sm:$0xff]
  %s2439 = scalar_lea.vmem %s10, 256
  %v2440 = vld [vmem:[%s2439] sm:$0xff]
  %v2441 = vld [vmem:[%s2439 + $0x8] sm:$0xff]
  %v2442 = vld [vmem:[%s2439 + $0x10] sm:$0xff]
  %v2443 = vld [vmem:[%s2439 + $0x18] sm:$0xff]
  %v2444 = vld [vmem:[%s2439 + $0x20] sm:$0xff]
  %v2445 = vld [vmem:[%s2439 + $0x28] sm:$0xff]
  %v2446 = vld [vmem:[%s2439 + $0x30] sm:$0xff]
  %v2447 = vld [vmem:[%s2439 + $0x38] sm:$0xff]
  %v2448 = vld [vmem:[%s2439 + $0x40] sm:$0xff]
  %v2449 = vld [vmem:[%s2439 + $0x48] sm:$0xff]
  %v2450 = vld [vmem:[%s2439 + $0x50] sm:$0xff]
  %v2451 = vld [vmem:[%s2439 + $0x58] sm:$0xff]
  %v2452 = vld [vmem:[%s2439 + $0x60] sm:$0xff]
  %v2453 = vld [vmem:[%s2439 + $0x68] sm:$0xff]
  %v2454 = vld [vmem:[%s2439 + $0x70] sm:$0xff]
  %v2455 = vld [vmem:[%s2439 + $0x78] sm:$0xff]
  %2456 = vmatprep.subr.mxu0 0.0
  %2457 = vmatpush1.msra.mxu0 %v2455
  %2458 = vmatprep.subr.mxu0 0.0
  %2459 = vmatpush1.msra.mxu0 %v2454
  %2460 = vmatprep.subr.mxu0 0.0
  %2461 = vmatpush1.msra.mxu0 %v2453
  %2462 = vmatprep.subr.mxu0 0.0
  %2463 = vmatpush1.msra.mxu0 %v2452
  %2464 = vmatprep.subr.mxu0 0.0
  %2465 = vmatpush1.msra.mxu0 %v2451
  %2466 = vmatprep.subr.mxu0 0.0
  %2467 = vmatpush1.msra.mxu0 %v2450
  %2468 = vmatprep.subr.mxu0 0.0
  %2469 = vmatpush1.msra.mxu0 %v2449
  %2470 = vmatprep.subr.mxu0 0.0
  %2471 = vmatpush1.msra.mxu0 %v2448
  %2472 = vmatprep.subr.mxu0 0.0
  %2473 = vmatpush1.msra.mxu0 %v2447
  %2474 = vmatprep.subr.mxu0 0.0
  %2475 = vmatpush1.msra.mxu0 %v2446
  %2476 = vmatprep.subr.mxu0 0.0
  %2477 = vmatpush1.msra.mxu0 %v2445
  %2478 = vmatprep.subr.mxu0 0.0
  %2479 = vmatpush1.msra.mxu0 %v2444
  %2480 = vmatprep.subr.mxu0 0.0
  %2481 = vmatpush1.msra.mxu0 %v2443
  %2482 = vmatprep.subr.mxu0 0.0
  %2483 = vmatpush1.msra.mxu0 %v2442
  %2484 = vmatprep.subr.mxu0 0.0
  %2485 = vmatpush1.msra.mxu0 %v2441
  %2486 = vmatprep.subr.mxu0 0.0
  %2487 = vmatpush1.msra.mxu0 %v2440
  %2488 = vmatprep.subr.mxu0 0.0
  %2489 = vmatpush2.msra.mxu0 0.0
  %2490 = vmatprep.subr.mxu0 0.0
  %2491 = vmatpush2.msra.mxu0 0.0
  %2492 = vmatprep.subr.mxu0 0.0
  %2493 = vmatpush2.msra.mxu0 0.0
  %2494 = vmatprep.subr.mxu0 0.0
  %2495 = vmatpush2.msra.mxu0 0.0
  %2496 = vmatprep.subr.mxu0 0.0
  %2497 = vmatpush2.msra.mxu0 0.0
  %2498 = vmatprep.subr.mxu0 0.0
  %2499 = vmatpush2.msra.mxu0 0.0
  %2500 = vmatprep.subr.mxu0 0.0
  %2501 = vmatpush2.msra.mxu0 0.0
  %2502 = vmatprep.subr.mxu0 0.0
  %2503 = vmatpush2.msra.mxu0 0.0
  %2504 = vmatprep.subr.mxu0 0.0
  %2505 = vmatpush2.msra.mxu0 0.0
  %2506 = vmatprep.subr.mxu0 0.0
  %2507 = vmatpush2.msra.mxu0 0.0
  %2508 = vmatprep.subr.mxu0 0.0
  %2509 = vmatpush2.msra.mxu0 0.0
  %2510 = vmatprep.subr.mxu0 0.0
  %2511 = vmatpush2.msra.mxu0 0.0
  %2512 = vmatprep.subr.mxu0 0.0
  %2513 = vmatpush2.msra.mxu0 0.0
  %2514 = vmatprep.subr.mxu0 0.0
  %2515 = vmatpush2.msra.mxu0 0.0
  %2516 = vmatprep.subr.mxu0 0.0
  %2517 = vmatpush2.msra.mxu0 0.0
  %2518 = vmatprep.subr.mxu0 0.0
  %2519 = vmatpush2.msra.mxu0 0.0
  %2520 = vmatprep.mubr.f32.mxu0 0.0
  %2521 = vmatmul.mubr.f32.gmra.mxu0 %v2437
  %v2522 = vpop.f32.mrf.mxu0
  %v2523 = vadd.f32 0.0, %v2522
  %v2524 = vpop.f32.mrf.mxu0
  %2525 = vmatprep.mubr.f32.mxu0 0.0
  %2526 = vmatmul.mubr.f32.gmra.mxu0 %v2438
  %v2527 = vpop.f32.mrf.mxu0
  %v2528 = vadd.f32 0.0, %v2527
  %v2529 = vpop.f32.mrf.mxu0
  %2530 = vdwg.mxu0
  %v2531 = vadd.f32 %v2429, %v2523
  %v2532 = vadd.f32 %v2434, %v2528
  %v2534 = vlaneseq
  %v2535 = vshrl.u32 %v2534, 7
  %v2536 = vsub.s32 0, %v2535
  %v2537 = vrot.slane %v2249, %v2536
  %v2539 = vadd.f32 %v2531, %v2537
  %v2540 = vadd.f32 %v2532, %v2537
  %v2541 = vld [vmem:[%s2246] sm:$0xff]
  %v2542 = vld [vmem:[%s2246 + $0x8] sm:$0xff]
  %v2543 = vld [vmem:[%s2246 + $0x1] sm:$0xff]
  %v2544 = vld [vmem:[%s2246 + $0x9] sm:$0xff]
  %2545 = vmatprep.subr.mxu0 0.0
  %2546 = vmatpush1.msra.mxu0 %v2286
  %2547 = vmatprep.subr.mxu0 0.0
  %2548 = vmatpush1.msra.mxu0 %v2285
  %2549 = vmatprep.subr.mxu0 0.0
  %2550 = vmatpush1.msra.mxu0 %v2284
  %2551 = vmatprep.subr.mxu0 0.0
  %2552 = vmatpush1.msra.mxu0 %v2283
  %2553 = vmatprep.subr.mxu0 0.0
  %2554 = vmatpush1.msra.mxu0 %v2282
  %2555 = vmatprep.subr.mxu0 0.0
  %2556 = vmatpush1.msra.mxu0 %v2281
  %2557 = vmatprep.subr.mxu0 0.0
  %2558 = vmatpush1.msra.mxu0 %v2280
  %2559 = vmatprep.subr.mxu0 0.0
  %2560 = vmatpush1.msra.mxu0 %v2279
  %2561 = vmatprep.subr.mxu0 0.0
  %2562 = vmatpush1.msra.mxu0 %v2278
  %2563 = vmatprep.subr.mxu0 0.0
  %2564 = vmatpush1.msra.mxu0 %v2277
  %2565 = vmatprep.subr.mxu0 0.0
  %2566 = vmatpush1.msra.mxu0 %v2276
  %2567 = vmatprep.subr.mxu0 0.0
  %2568 = vmatpush1.msra.mxu0 %v2275
  %2569 = vmatprep.subr.mxu0 0.0
  %2570 = vmatpush1.msra.mxu0 %v2274
  %2571 = vmatprep.subr.mxu0 0.0
  %2572 = vmatpush1.msra.mxu0 %v2273
  %2573 = vmatprep.subr.mxu0 0.0
  %2574 = vmatpush1.msra.mxu0 %v2272
  %2575 = vmatprep.subr.mxu0 0.0
  %2576 = vmatpush1.msra.mxu0 %v2271
  %2577 = vmatprep.subr.mxu0 0.0
  %2578 = vmatpush2.msra.mxu0 0.0
  %2579 = vmatprep.subr.mxu0 0.0
  %2580 = vmatpush2.msra.mxu0 0.0
  %2581 = vmatprep.subr.mxu0 0.0
  %2582 = vmatpush2.msra.mxu0 0.0
  %2583 = vmatprep.subr.mxu0 0.0
  %2584 = vmatpush2.msra.mxu0 0.0
  %2585 = vmatprep.subr.mxu0 0.0
  %2586 = vmatpush2.msra.mxu0 0.0
  %2587 = vmatprep.subr.mxu0 0.0
  %2588 = vmatpush2.msra.mxu0 0.0
  %2589 = vmatprep.subr.mxu0 0.0
  %2590 = vmatpush2.msra.mxu0 0.0
  %2591 = vmatprep.subr.mxu0 0.0
  %2592 = vmatpush2.msra.mxu0 0.0
  %2593 = vmatprep.subr.mxu0 0.0
  %2594 = vmatpush2.msra.mxu0 0.0
  %2595 = vmatprep.subr.mxu0 0.0
  %2596 = vmatpush2.msra.mxu0 0.0
  %2597 = vmatprep.subr.mxu0 0.0
  %2598 = vmatpush2.msra.mxu0 0.0
  %2599 = vmatprep.subr.mxu0 0.0
  %2600 = vmatpush2.msra.mxu0 0.0
  %2601 = vmatprep.subr.mxu0 0.0
  %2602 = vmatpush2.msra.mxu0 0.0
  %2603 = vmatprep.subr.mxu0 0.0
  %2604 = vmatpush2.msra.mxu0 0.0
  %2605 = vmatprep.subr.mxu0 0.0
  %2606 = vmatpush2.msra.mxu0 0.0
  %2607 = vmatprep.subr.mxu0 0.0
  %2608 = vmatpush2.msra.mxu0 0.0
  %2609 = vmatprep.mubr.f32.mxu0 0.0
  %2610 = vmatmul.mubr.f32.gmra.mxu0 %v2543
  %v2611 = vpop.f32.mrf.mxu0
  %v2612 = vadd.f32 0.0, %v2611
  %v2613 = vpop.f32.mrf.mxu0
  %2614 = vmatprep.mubr.f32.mxu0 0.0
  %2615 = vmatmul.mubr.f32.gmra.mxu0 %v2544
  %v2616 = vpop.f32.mrf.mxu0
  %v2617 = vadd.f32 0.0, %v2616
  %v2618 = vpop.f32.mrf.mxu0
  %2619 = vdwg.mxu0
  %2620 = vmatprep.subr.mxu0 0.0
  %2621 = vmatpush1.msra.mxu0 %v2267
  %2622 = vmatprep.subr.mxu0 0.0
  %2623 = vmatpush1.msra.mxu0 %v2266
  %2624 = vmatprep.subr.mxu0 0.0
  %2625 = vmatpush1.msra.mxu0 %v2265
  %2626 = vmatprep.subr.mxu0 0.0
  %2627 = vmatpush1.msra.mxu0 %v2264
  %2628 = vmatprep.subr.mxu0 0.0
  %2629 = vmatpush1.msra.mxu0 %v2263
  %2630 = vmatprep.subr.mxu0 0.0
  %2631 = vmatpush1.msra.mxu0 %v2262
  %2632 = vmatprep.subr.mxu0 0.0
  %2633 = vmatpush1.msra.mxu0 %v2261
  %2634 = vmatprep.subr.mxu0 0.0
  %2635 = vmatpush1.msra.mxu0 %v2260
  %2636 = vmatprep.subr.mxu0 0.0
  %2637 = vmatpush1.msra.mxu0 %v2259
  %2638 = vmatprep.subr.mxu0 0.0
  %2639 = vmatpush1.msra.mxu0 %v2258
  %2640 = vmatprep.subr.mxu0 0.0
  %2641 = vmatpush1.msra.mxu0 %v2257
  %2642 = vmatprep.subr.mxu0 0.0
  %2643 = vmatpush1.msra.mxu0 %v2256
  %2644 = vmatprep.subr.mxu0 0.0
  %2645 = vmatpush1.msra.mxu0 %v2255
  %2646 = vmatprep.subr.mxu0 0.0
  %2647 = vmatpush1.msra.mxu0 %v2254
  %2648 = vmatprep.subr.mxu0 0.0
  %2649 = vmatpush1.msra.mxu0 %v2253
  %2650 = vmatprep.subr.mxu0 0.0
  %2651 = vmatpush1.msra.mxu0 %v2252
  %2652 = vmatprep.subr.mxu0 0.0
  %2653 = vmatpush2.msra.mxu0 0.0
  %2654 = vmatprep.subr.mxu0 0.0
  %2655 = vmatpush2.msra.mxu0 0.0
  %2656 = vmatprep.subr.mxu0 0.0
  %2657 = vmatpush2.msra.mxu0 0.0
  %2658 = vmatprep.subr.mxu0 0.0
  %2659 = vmatpush2.msra.mxu0 0.0
  %2660 = vmatprep.subr.mxu0 0.0
  %2661 = vmatpush2.msra.mxu0 0.0
  %2662 = vmatprep.subr.mxu0 0.0
  %2663 = vmatpush2.msra.mxu0 0.0
  %2664 = vmatprep.subr.mxu0 0.0
  %2665 = vmatpush2.msra.mxu0 0.0
  %2666 = vmatprep.subr.mxu0 0.0
  %2667 = vmatpush2.msra.mxu0 0.0
  %2668 = vmatprep.subr.mxu0 0.0
  %2669 = vmatpush2.msra.mxu0 0.0
  %2670 = vmatprep.subr.mxu0 0.0
  %2671 = vmatpush2.msra.mxu0 0.0
  %2672 = vmatprep.subr.mxu0 0.0
  %2673 = vmatpush2.msra.mxu0 0.0
  %2674 = vmatprep.subr.mxu0 0.0
  %2675 = vmatpush2.msra.mxu0 0.0
  %2676 = vmatprep.subr.mxu0 0.0
  %2677 = vmatpush2.msra.mxu0 0.0
  %2678 = vmatprep.subr.mxu0 0.0
  %2679 = vmatpush2.msra.mxu0 0.0
  %2680 = vmatprep.subr.mxu0 0.0
  %2681 = vmatpush2.msra.mxu0 0.0
  %2682 = vmatprep.subr.mxu0 0.0
  %2683 = vmatpush2.msra.mxu0 0.0
  %2684 = vmatprep.mubr.f32.mxu0 0.0
  %2685 = vmatmul.mubr.f32.gmra.mxu0 %v2541
  %v2686 = vpop.f32.mrf.mxu0
  %v2687 = vadd.f32 %v2612, %v2686
  %v2688 = vpop.f32.mrf.mxu0
  %2689 = vmatprep.mubr.f32.mxu0 0.0
  %2690 = vmatmul.mubr.f32.gmra.mxu0 %v2542
  %v2691 = vpop.f32.mrf.mxu0
  %v2692 = vadd.f32 %v2617, %v2691
  %v2693 = vpop.f32.mrf.mxu0
  %2694 = vdwg.mxu0
  %v2695 = vld [vmem:[%s2246 + $0x2] sm:$0xff]
  %v2696 = vld [vmem:[%s2246 + $0xa] sm:$0xff]
  %2697 = vmatprep.subr.mxu0 0.0
  %2698 = vmatpush1.msra.mxu0 %v2455
  %2699 = vmatprep.subr.mxu0 0.0
  %2700 = vmatpush1.msra.mxu0 %v2454
  %2701 = vmatprep.subr.mxu0 0.0
  %2702 = vmatpush1.msra.mxu0 %v2453
  %2703 = vmatprep.subr.mxu0 0.0
  %2704 = vmatpush1.msra.mxu0 %v2452
  %2705 = vmatprep.subr.mxu0 0.0
  %2706 = vmatpush1.msra.mxu0 %v2451
  %2707 = vmatprep.subr.mxu0 0.0
  %2708 = vmatpush1.msra.mxu0 %v2450
  %2709 = vmatprep.subr.mxu0 0.0
  %2710 = vmatpush1.msra.mxu0 %v2449
  %2711 = vmatprep.subr.mxu0 0.0
  %2712 = vmatpush1.msra.mxu0 %v2448
  %2713 = vmatprep.subr.mxu0 0.0
  %2714 = vmatpush1.msra.mxu0 %v2447
  %2715 = vmatprep.subr.mxu0 0.0
  %2716 = vmatpush1.msra.mxu0 %v2446
  %2717 = vmatprep.subr.mxu0 0.0
  %2718 = vmatpush1.msra.mxu0 %v2445
  %2719 = vmatprep.subr.mxu0 0.0
  %2720 = vmatpush1.msra.mxu0 %v2444
  %2721 = vmatprep.subr.mxu0 0.0
  %2722 = vmatpush1.msra.mxu0 %v2443
  %2723 = vmatprep.subr.mxu0 0.0
  %2724 = vmatpush1.msra.mxu0 %v2442
  %2725 = vmatprep.subr.mxu0 0.0
  %2726 = vmatpush1.msra.mxu0 %v2441
  %2727 = vmatprep.subr.mxu0 0.0
  %2728 = vmatpush1.msra.mxu0 %v2440
  %2729 = vmatprep.subr.mxu0 0.0
  %2730 = vmatpush2.msra.mxu0 0.0
  %2731 = vmatprep.subr.mxu0 0.0
  %2732 = vmatpush2.msra.mxu0 0.0
  %2733 = vmatprep.subr.mxu0 0.0
  %2734 = vmatpush2.msra.mxu0 0.0
  %2735 = vmatprep.subr.mxu0 0.0
  %2736 = vmatpush2.msra.mxu0 0.0
  %2737 = vmatprep.subr.mxu0 0.0
  %2738 = vmatpush2.msra.mxu0 0.0
  %2739 = vmatprep.subr.mxu0 0.0
  %2740 = vmatpush2.msra.mxu0 0.0
  %2741 = vmatprep.subr.mxu0 0.0
  %2742 = vmatpush2.msra.mxu0 0.0
  %2743 = vmatprep.subr.mxu0 0.0
  %2744 = vmatpush2.msra.mxu0 0.0
  %2745 = vmatprep.subr.mxu0 0.0
  %2746 = vmatpush2.msra.mxu0 0.0
  %2747 = vmatprep.subr.mxu0 0.0
  %2748 = vmatpush2.msra.mxu0 0.0
  %2749 = vmatprep.subr.mxu0 0.0
  %2750 = vmatpush2.msra.mxu0 0.0
  %2751 = vmatprep.subr.mxu0 0.0
  %2752 = vmatpush2.msra.mxu0 0.0
  %2753 = vmatprep.subr.mxu0 0.0
  %2754 = vmatpush2.msra.mxu0 0.0
  %2755 = vmatprep.subr.mxu0 0.0
  %2756 = vmatpush2.msra.mxu0 0.0
  %2757 = vmatprep.subr.mxu0 0.0
  %2758 = vmatpush2.msra.mxu0 0.0
  %2759 = vmatprep.subr.mxu0 0.0
  %2760 = vmatpush2.msra.mxu0 0.0
  %2761 = vmatprep.mubr.f32.mxu0 0.0
  %2762 = vmatmul.mubr.f32.gmra.mxu0 %v2695
  %v2763 = vpop.f32.mrf.mxu0
  %v2764 = vadd.f32 0.0, %v2763
  %v2765 = vpop.f32.mrf.mxu0
  %2766 = vmatprep.mubr.f32.mxu0 0.0
  %2767 = vmatmul.mubr.f32.gmra.mxu0 %v2696
  %v2768 = vpop.f32.mrf.mxu0
  %v2769 = vadd.f32 0.0, %v2768
  %v2770 = vpop.f32.mrf.mxu0
  %2771 = vdwg.mxu0
  %v2772 = vadd.f32 %v2687, %v2764
  %v2773 = vadd.f32 %v2692, %v2769
  %v2774 = vadd.f32 %v2772, %v2537
  %v2775 = vadd.f32 %v2773, %v2537
  %v2776 = vadd.f32 %v2539, %v2540
  %v2777 = vrot.slane %v2776, 4
  %v2778 = vadd.f32 %v2776, %v2777
  %v2779 = vrot.slane %v2778, 2
  %v2780 = vadd.f32 %v2778, %v2779
  %v2781 = vrot.slane %v2780, 1
  %v2782 = vadd.f32 %v2780, %v2781
  %v2783 = vadd.f32 %v2782, 0.0
  %v2784 = vadd.f32 %v2774, %v2775
  %v2785 = vrot.slane %v2784, 4
  %v2786 = vadd.f32 %v2784, %v2785
  %v2787 = vrot.slane %v2786, 2
  %v2788 = vadd.f32 %v2786, %v2787
  %v2789 = vrot.slane %v2788, 1
  %v2790 = vadd.f32 %v2788, %v2789
  %v2791 = vadd.f32 %v2783, %v2790
  %2792 = vmatprep.subr.mxu0 0.0
  %2793 = vmatpush1.msra.mxu0 %v1810
  %2794 = vmatprep.subr.mxu0 0.0
  %2795 = vmatpush1.msra.mxu0 %v1809
  %2796 = vmatprep.subr.mxu0 0.0
  %2797 = vmatpush1.msra.mxu0 %v1808
  %2798 = vmatprep.subr.mxu0 0.0
  %2799 = vmatpush1.msra.mxu0 %v1807
  %2800 = vmatprep.subr.mxu0 0.0
  %2801 = vmatpush1.msra.mxu0 %v1806
  %2802 = vmatprep.subr.mxu0 0.0
  %2803 = vmatpush1.msra.mxu0 %v1805
  %2804 = vmatprep.subr.mxu0 0.0
  %2805 = vmatpush1.msra.mxu0 %v1804
  %2806 = vmatprep.subr.mxu0 0.0
  %2807 = vmatpush1.msra.mxu0 %v1803
  %2808 = vmatprep.subr.mxu0 0.0
  %2809 = vmatpush1.msra.mxu0 %v1802
  %2810 = vmatprep.subr.mxu0 0.0
  %2811 = vmatpush1.msra.mxu0 %v1801
  %2812 = vmatprep.subr.mxu0 0.0
  %2813 = vmatpush1.msra.mxu0 %v1800
  %2814 = vmatprep.subr.mxu0 0.0
  %2815 = vmatpush1.msra.mxu0 %v1799
  %2816 = vmatprep.subr.mxu0 0.0
  %2817 = vmatpush1.msra.mxu0 %v1798
  %2818 = vmatprep.subr.mxu0 0.0
  %2819 = vmatpush1.msra.mxu0 %v1797
  %2820 = vmatprep.subr.mxu0 0.0
  %2821 = vmatpush1.msra.mxu0 %v1796
  %2822 = vmatprep.subr.mxu0 0.0
  %2823 = vmatpush1.msra.mxu0 %v1795
  %2824 = vmatprep.subr.mxu0 0.0
  %2825 = vmatpush2.msra.mxu0 0.0
  %2826 = vmatprep.subr.mxu0 0.0
  %2827 = vmatpush2.msra.mxu0 0.0
  %2828 = vmatprep.subr.mxu0 0.0
  %2829 = vmatpush2.msra.mxu0 0.0
  %2830 = vmatprep.subr.mxu0 0.0
  %2831 = vmatpush2.msra.mxu0 0.0
  %2832 = vmatprep.subr.mxu0 0.0
  %2833 = vmatpush2.msra.mxu0 0.0
  %2834 = vmatprep.subr.mxu0 0.0
  %2835 = vmatpush2.msra.mxu0 0.0
  %2836 = vmatprep.subr.mxu0 0.0
  %2837 = vmatpush2.msra.mxu0 0.0
  %2838 = vmatprep.subr.mxu0 0.0
  %2839 = vmatpush2.msra.mxu0 0.0
  %2840 = vmatprep.subr.mxu0 0.0
  %2841 = vmatpush2.msra.mxu0 0.0
  %2842 = vmatprep.subr.mxu0 0.0
  %2843 = vmatpush2.msra.mxu0 0.0
  %2844 = vmatprep.subr.mxu0 0.0
  %2845 = vmatpush2.msra.mxu0 0.0
  %2846 = vmatprep.subr.mxu0 0.0
  %2847 = vmatpush2.msra.mxu0 0.0
  %2848 = vmatprep.subr.mxu0 0.0
  %2849 = vmatpush2.msra.mxu0 0.0
  %2850 = vmatprep.subr.mxu0 0.0
  %2851 = vmatpush2.msra.mxu0 0.0
  %2852 = vmatprep.subr.mxu0 0.0
  %2853 = vmatpush2.msra.mxu0 0.0
  %2854 = vmatprep.subr.mxu0 0.0
  %2855 = vmatpush2.msra.mxu0 0.0
  %2856 = vmatprep.mubr.f32.mxu0 0.0
  %2857 = vmatmul.mubr.f32.gmra.mxu0 %v2791
  %v2858 = vpop.f32.mrf.mxu0
  %v2859 = vadd.f32 0.0, %v2858
  %v2860 = vpop.f32.mrf.mxu0
  %2861 = vdwg.mxu0
  %v2862 = vmul.f32 %v2859, 0.001953125
  %v2864 = vsel %vm247, %v2862, 0
  %2866 = vmatprep.subr.mxu0 0.0
  %2867 = vmatpush1.msra.mxu0 0.0
  %2868 = vmatprep.subr.mxu0 0.0
  %2869 = vmatpush1.msra.mxu0 0.0
  %2870 = vmatprep.subr.mxu0 0.0
  %2871 = vmatpush1.msra.mxu0 0.0
  %2872 = vmatprep.subr.mxu0 0.0
  %2873 = vmatpush1.msra.mxu0 0.0
  %2874 = vmatprep.subr.mxu0 0.0
  %2875 = vmatpush1.msra.mxu0 0.0
  %2876 = vmatprep.subr.mxu0 0.0
  %2877 = vmatpush1.msra.mxu0 0.0
  %2878 = vmatprep.subr.mxu0 0.0
  %2879 = vmatpush1.msra.mxu0 0.0
  %2880 = vmatprep.subr.mxu0 0.0
  %2881 = vmatpush1.msra.mxu0 0.0
  %2882 = vmatprep.subr.mxu0 0.0
  %2883 = vmatpush1.msra.mxu0 0.0
  %2884 = vmatprep.subr.mxu0 0.0
  %2885 = vmatpush1.msra.mxu0 0.0
  %2886 = vmatprep.subr.mxu0 0.0
  %2887 = vmatpush1.msra.mxu0 0.0
  %2888 = vmatprep.subr.mxu0 0.0
  %2889 = vmatpush1.msra.mxu0 0.0
  %2890 = vmatprep.subr.mxu0 0.0
  %2891 = vmatpush1.msra.mxu0 0.0
  %2892 = vmatprep.subr.mxu0 0.0
  %2893 = vmatpush1.msra.mxu0 0.0
  %2894 = vmatprep.subr.mxu0 0.0
  %2895 = vmatpush1.msra.mxu0 0.0
  %2896 = vmatprep.subr.mxu0 0.0
  %2897 = vmatpush1.msra.mxu0 %v1811
  %2898 = vmatprep.subr.mxu0 0.0
  %2899 = vmatpush2.msra.mxu0 0.0
  %2900 = vmatprep.subr.mxu0 0.0
  %2901 = vmatpush2.msra.mxu0 0.0
  %2902 = vmatprep.subr.mxu0 0.0
  %2903 = vmatpush2.msra.mxu0 0.0
  %2904 = vmatprep.subr.mxu0 0.0
  %2905 = vmatpush2.msra.mxu0 0.0
  %2906 = vmatprep.subr.mxu0 0.0
  %2907 = vmatpush2.msra.mxu0 0.0
  %2908 = vmatprep.subr.mxu0 0.0
  %2909 = vmatpush2.msra.mxu0 0.0
  %2910 = vmatprep.subr.mxu0 0.0
  %2911 = vmatpush2.msra.mxu0 0.0
  %2912 = vmatprep.subr.mxu0 0.0
  %2913 = vmatpush2.msra.mxu0 0.0
  %2914 = vmatprep.subr.mxu0 0.0
  %2915 = vmatpush2.msra.mxu0 0.0
  %2916 = vmatprep.subr.mxu0 0.0
  %2917 = vmatpush2.msra.mxu0 0.0
  %2918 = vmatprep.subr.mxu0 0.0
  %2919 = vmatpush2.msra.mxu0 0.0
  %2920 = vmatprep.subr.mxu0 0.0
  %2921 = vmatpush2.msra.mxu0 0.0
  %2922 = vmatprep.subr.mxu0 0.0
  %2923 = vmatpush2.msra.mxu0 0.0
  %2924 = vmatprep.subr.mxu0 0.0
  %2925 = vmatpush2.msra.mxu0 0.0
  %2926 = vmatprep.subr.mxu0 0.0
  %2927 = vmatpush2.msra.mxu0 0.0
  %2928 = vmatprep.subr.mxu0 0.0
  %2929 = vmatpush2.msra.mxu0 0.0
  %2930 = vmatprep.mubr.f32.mxu0 0.0
  %2931 = vmatmul.mubr.f32.gmra.mxu0 %v2864
  %v2932 = vpop.f32.mrf.mxu0
  %v2933 = vadd.f32 0.0, %v2932
  %v2934 = vpop.f32.mrf.mxu0
  %2935 = vdwg.mxu0
  %v2936 = vlaneseq
  %v2937 = vshrl.u32 %v2936, 7
  %v2938 = vsub.s32 0, %v2937
  %v2939 = vrot.slane %v2933, %v2938
  %v2940 = vsub.f32 %v2539, %v2939
  %v2941 = vsub.f32 %v2540, %v2939
  %v2942 = vmul.f32 %v2940, %v2940
  %v2943 = vmul.f32 %v2941, %v2941
  %v2944 = vadd.f32 %v2942, %v2943
  %v2945 = vrot.slane %v2944, 4
  %v2946 = vadd.f32 %v2944, %v2945
  %v2947 = vrot.slane %v2946, 2
  %v2948 = vadd.f32 %v2946, %v2947
  %v2949 = vrot.slane %v2948, 1
  %v2950 = vadd.f32 %v2948, %v2949
  %v2951 = vadd.f32 %v2950, 0.0
  %v2952 = vsub.f32 %v2774, %v2939
  %v2953 = vsub.f32 %v2775, %v2939
  %v2954 = vmul.f32 %v2952, %v2952
  %v2955 = vmul.f32 %v2953, %v2953
  %v2956 = vadd.f32 %v2954, %v2955
  %v2957 = vrot.slane %v2956, 4
  %v2958 = vadd.f32 %v2956, %v2957
  %v2959 = vrot.slane %v2958, 2
  %v2960 = vadd.f32 %v2958, %v2959
  %v2961 = vrot.slane %v2960, 1
  %v2962 = vadd.f32 %v2960, %v2961
  %v2963 = vadd.f32 %v2951, %v2962
  %2964 = vmatprep.subr.mxu0 0.0
  %2965 = vmatpush1.msra.mxu0 %v1810
  %2966 = vmatprep.subr.mxu0 0.0
  %2967 = vmatpush1.msra.mxu0 %v1809
  %2968 = vmatprep.subr.mxu0 0.0
  %2969 = vmatpush1.msra.mxu0 %v1808
  %2970 = vmatprep.subr.mxu0 0.0
  %2971 = vmatpush1.msra.mxu0 %v1807
  %2972 = vmatprep.subr.mxu0 0.0
  %2973 = vmatpush1.msra.mxu0 %v1806
  %2974 = vmatprep.subr.mxu0 0.0
  %2975 = vmatpush1.msra.mxu0 %v1805
  %2976 = vmatprep.subr.mxu0 0.0
  %2977 = vmatpush1.msra.mxu0 %v1804
  %2978 = vmatprep.subr.mxu0 0.0
  %2979 = vmatpush1.msra.mxu0 %v1803
  %2980 = vmatprep.subr.mxu0 0.0
  %2981 = vmatpush1.msra.mxu0 %v1802
  %2982 = vmatprep.subr.mxu0 0.0
  %2983 = vmatpush1.msra.mxu0 %v1801
  %2984 = vmatprep.subr.mxu0 0.0
  %2985 = vmatpush1.msra.mxu0 %v1800
  %2986 = vmatprep.subr.mxu0 0.0
  %2987 = vmatpush1.msra.mxu0 %v1799
  %2988 = vmatprep.subr.mxu0 0.0
  %2989 = vmatpush1.msra.mxu0 %v1798
  %2990 = vmatprep.subr.mxu0 0.0
  %2991 = vmatpush1.msra.mxu0 %v1797
  %2992 = vmatprep.subr.mxu0 0.0
  %2993 = vmatpush1.msra.mxu0 %v1796
  %2994 = vmatprep.subr.mxu0 0.0
  %2995 = vmatpush1.msra.mxu0 %v1795
  %2996 = vmatprep.subr.mxu0 0.0
  %2997 = vmatpush2.msra.mxu0 0.0
  %2998 = vmatprep.subr.mxu0 0.0
  %2999 = vmatpush2.msra.mxu0 0.0
  %3000 = vmatprep.subr.mxu0 0.0
  %3001 = vmatpush2.msra.mxu0 0.0
  %3002 = vmatprep.subr.mxu0 0.0
  %3003 = vmatpush2.msra.mxu0 0.0
  %3004 = vmatprep.subr.mxu0 0.0
  %3005 = vmatpush2.msra.mxu0 0.0
  %3006 = vmatprep.subr.mxu0 0.0
  %3007 = vmatpush2.msra.mxu0 0.0
  %3008 = vmatprep.subr.mxu0 0.0
  %3009 = vmatpush2.msra.mxu0 0.0
  %3010 = vmatprep.subr.mxu0 0.0
  %3011 = vmatpush2.msra.mxu0 0.0
  %3012 = vmatprep.subr.mxu0 0.0
  %3013 = vmatpush2.msra.mxu0 0.0
  %3014 = vmatprep.subr.mxu0 0.0
  %3015 = vmatpush2.msra.mxu0 0.0
  %3016 = vmatprep.subr.mxu0 0.0
  %3017 = vmatpush2.msra.mxu0 0.0
  %3018 = vmatprep.subr.mxu0 0.0
  %3019 = vmatpush2.msra.mxu0 0.0
  %3020 = vmatprep.subr.mxu0 0.0
  %3021 = vmatpush2.msra.mxu0 0.0
  %3022 = vmatprep.subr.mxu0 0.0
  %3023 = vmatpush2.msra.mxu0 0.0
  %3024 = vmatprep.subr.mxu0 0.0
  %3025 = vmatpush2.msra.mxu0 0.0
  %3026 = vmatprep.subr.mxu0 0.0
  %3027 = vmatpush2.msra.mxu0 0.0
  %3028 = vmatprep.mubr.f32.mxu0 0.0
  %3029 = vmatmul.mubr.f32.gmra.mxu0 %v2963
  %v3030 = vpop.f32.mrf.mxu0
  %v3031 = vadd.f32 0.0, %v3030
  %v3032 = vpop.f32.mrf.mxu0
  %3033 = vdwg.mxu0
  %v3034 = vmul.f32 %v3031, 0.001953125
  %v3035 = vld [vmem:[%s16] sm:$0x1]
  %v3036 = vadd.f32 %v3034, 1e-05
  %v3037 = vrsqrt.pop %v3036
  %v3038 = vmul.f32 %v3035, %v3037
  %v3039 = vld [vmem:[%s17] sm:$0x1]
  %v3040 = vmul.f32 %v2862, %v3038
  %v3041 = vsub.f32 %v3039, %v3040
  %v3043 = vsel %vm247, %v3038, 0
  %3045 = vmatprep.subr.mxu0 0.0
  %3046 = vmatpush1.msra.mxu0 0.0
  %3047 = vmatprep.subr.mxu0 0.0
  %3048 = vmatpush1.msra.mxu0 0.0
  %3049 = vmatprep.subr.mxu0 0.0
  %3050 = vmatpush1.msra.mxu0 0.0
  %3051 = vmatprep.subr.mxu0 0.0
  %3052 = vmatpush1.msra.mxu0 0.0
  %3053 = vmatprep.subr.mxu0 0.0
  %3054 = vmatpush1.msra.mxu0 0.0
  %3055 = vmatprep.subr.mxu0 0.0
  %3056 = vmatpush1.msra.mxu0 0.0
  %3057 = vmatprep.subr.mxu0 0.0
  %3058 = vmatpush1.msra.mxu0 0.0
  %3059 = vmatprep.subr.mxu0 0.0
  %3060 = vmatpush1.msra.mxu0 0.0
  %3061 = vmatprep.subr.mxu0 0.0
  %3062 = vmatpush1.msra.mxu0 0.0
  %3063 = vmatprep.subr.mxu0 0.0
  %3064 = vmatpush1.msra.mxu0 0.0
  %3065 = vmatprep.subr.mxu0 0.0
  %3066 = vmatpush1.msra.mxu0 0.0
  %3067 = vmatprep.subr.mxu0 0.0
  %3068 = vmatpush1.msra.mxu0 0.0
  %3069 = vmatprep.subr.mxu0 0.0
  %3070 = vmatpush1.msra.mxu0 0.0
  %3071 = vmatprep.subr.mxu0 0.0
  %3072 = vmatpush1.msra.mxu0 0.0
  %3073 = vmatprep.subr.mxu0 0.0
  %3074 = vmatpush1.msra.mxu0 0.0
  %3075 = vmatprep.subr.mxu0 0.0
  %3076 = vmatpush1.msra.mxu0 %v1811
  %3077 = vmatprep.subr.mxu0 0.0
  %3078 = vmatpush2.msra.mxu0 0.0
  %3079 = vmatprep.subr.mxu0 0.0
  %3080 = vmatpush2.msra.mxu0 0.0
  %3081 = vmatprep.subr.mxu0 0.0
  %3082 = vmatpush2.msra.mxu0 0.0
  %3083 = vmatprep.subr.mxu0 0.0
  %3084 = vmatpush2.msra.mxu0 0.0
  %3085 = vmatprep.subr.mxu0 0.0
  %3086 = vmatpush2.msra.mxu0 0.0
  %3087 = vmatprep.subr.mxu0 0.0
  %3088 = vmatpush2.msra.mxu0 0.0
  %3089 = vmatprep.subr.mxu0 0.0
  %3090 = vmatpush2.msra.mxu0 0.0
  %3091 = vmatprep.subr.mxu0 0.0
  %3092 = vmatpush2.msra.mxu0 0.0
  %3093 = vmatprep.subr.mxu0 0.0
  %3094 = vmatpush2.msra.mxu0 0.0
  %3095 = vmatprep.subr.mxu0 0.0
  %3096 = vmatpush2.msra.mxu0 0.0
  %3097 = vmatprep.subr.mxu0 0.0
  %3098 = vmatpush2.msra.mxu0 0.0
  %3099 = vmatprep.subr.mxu0 0.0
  %3100 = vmatpush2.msra.mxu0 0.0
  %3101 = vmatprep.subr.mxu0 0.0
  %3102 = vmatpush2.msra.mxu0 0.0
  %3103 = vmatprep.subr.mxu0 0.0
  %3104 = vmatpush2.msra.mxu0 0.0
  %3105 = vmatprep.subr.mxu0 0.0
  %3106 = vmatpush2.msra.mxu0 0.0
  %3107 = vmatprep.subr.mxu0 0.0
  %3108 = vmatpush2.msra.mxu0 0.0
  %3109 = vmatprep.mubr.f32.mxu0 0.0
  %3110 = vmatmul.mubr.f32.gmra.mxu0 %v3043
  %v3111 = vpop.f32.mrf.mxu0
  %v3112 = vadd.f32 0.0, %v3111
  %v3113 = vpop.f32.mrf.mxu0
  %3114 = vdwg.mxu0
  %v3116 = vsel %vm247, %v3041, 0
  %3118 = vmatprep.subr.mxu0 0.0
  %3119 = vmatpush1.msra.mxu0 0.0
  %3120 = vmatprep.subr.mxu0 0.0
  %3121 = vmatpush1.msra.mxu0 0.0
  %3122 = vmatprep.subr.mxu0 0.0
  %3123 = vmatpush1.msra.mxu0 0.0
  %3124 = vmatprep.subr.mxu0 0.0
  %3125 = vmatpush1.msra.mxu0 0.0
  %3126 = vmatprep.subr.mxu0 0.0
  %3127 = vmatpush1.msra.mxu0 0.0
  %3128 = vmatprep.subr.mxu0 0.0
  %3129 = vmatpush1.msra.mxu0 0.0
  %3130 = vmatprep.subr.mxu0 0.0
  %3131 = vmatpush1.msra.mxu0 0.0
  %3132 = vmatprep.subr.mxu0 0.0
  %3133 = vmatpush1.msra.mxu0 0.0
  %3134 = vmatprep.subr.mxu0 0.0
  %3135 = vmatpush1.msra.mxu0 0.0
  %3136 = vmatprep.subr.mxu0 0.0
  %3137 = vmatpush1.msra.mxu0 0.0
  %3138 = vmatprep.subr.mxu0 0.0
  %3139 = vmatpush1.msra.mxu0 0.0
  %3140 = vmatprep.subr.mxu0 0.0
  %3141 = vmatpush1.msra.mxu0 0.0
  %3142 = vmatprep.subr.mxu0 0.0
  %3143 = vmatpush1.msra.mxu0 0.0
  %3144 = vmatprep.subr.mxu0 0.0
  %3145 = vmatpush1.msra.mxu0 0.0
  %3146 = vmatprep.subr.mxu0 0.0
  %3147 = vmatpush1.msra.mxu0 0.0
  %3148 = vmatprep.subr.mxu0 0.0
  %3149 = vmatpush1.msra.mxu0 %v1811
  %3150 = vmatprep.subr.mxu0 0.0
  %3151 = vmatpush2.msra.mxu0 0.0
  %3152 = vmatprep.subr.mxu0 0.0
  %3153 = vmatpush2.msra.mxu0 0.0
  %3154 = vmatprep.subr.mxu0 0.0
  %3155 = vmatpush2.msra.mxu0 0.0
  %3156 = vmatprep.subr.mxu0 0.0
  %3157 = vmatpush2.msra.mxu0 0.0
  %3158 = vmatprep.subr.mxu0 0.0
  %3159 = vmatpush2.msra.mxu0 0.0
  %3160 = vmatprep.subr.mxu0 0.0
  %3161 = vmatpush2.msra.mxu0 0.0
  %3162 = vmatprep.subr.mxu0 0.0
  %3163 = vmatpush2.msra.mxu0 0.0
  %3164 = vmatprep.subr.mxu0 0.0
  %3165 = vmatpush2.msra.mxu0 0.0
  %3166 = vmatprep.subr.mxu0 0.0
  %3167 = vmatpush2.msra.mxu0 0.0
  %3168 = vmatprep.subr.mxu0 0.0
  %3169 = vmatpush2.msra.mxu0 0.0
  %3170 = vmatprep.subr.mxu0 0.0
  %3171 = vmatpush2.msra.mxu0 0.0
  %3172 = vmatprep.subr.mxu0 0.0
  %3173 = vmatpush2.msra.mxu0 0.0
  %3174 = vmatprep.subr.mxu0 0.0
  %3175 = vmatpush2.msra.mxu0 0.0
  %3176 = vmatprep.subr.mxu0 0.0
  %3177 = vmatpush2.msra.mxu0 0.0
  %3178 = vmatprep.subr.mxu0 0.0
  %3179 = vmatpush2.msra.mxu0 0.0
  %3180 = vmatprep.subr.mxu0 0.0
  %3181 = vmatpush2.msra.mxu0 0.0
  %3182 = vmatprep.mubr.f32.mxu0 0.0
  %3183 = vmatmul.mubr.f32.gmra.mxu0 %v3116
  %v3184 = vpop.f32.mrf.mxu0
  %v3185 = vadd.f32 0.0, %v3184
  %v3186 = vpop.f32.mrf.mxu0
  %3187 = vdwg.mxu0
  %v3188 = vlaneseq
  %v3189 = vshrl.u32 %v3188, 7
  %v3190 = vsub.s32 0, %v3189
  %v3191 = vrot.slane %v3112, %v3190
  %v3192 = vmul.f32 %v2539, %v3191
  %v3193 = vmul.f32 %v2540, %v3191
  %v3194 = vlaneseq
  %v3195 = vshrl.u32 %v3194, 7
  %v3196 = vsub.s32 0, %v3195
  %v3197 = vrot.slane %v3185, %v3196
  %v3198 = vadd.f32 %v3192, %v3197
  %v3199 = vadd.f32 %v3193, %v3197
  %3200 = vst [vmem:[%s18] sm:$0xff] %v3198
  %3201 = vst [vmem:[%s18 + $0x8] sm:$0xff] %v3199
  %v3202 = vmul.f32 %v2774, %v3191
  %v3203 = vmul.f32 %v2775, %v3191
  %v3204 = vadd.f32 %v3202, %v3197
  %v3205 = vadd.f32 %v3203, %v3197
  %3206 = vst [vmem:[%s18 + $0x10] sm:$0xff] %v3204
  %3207 = vst [vmem:[%s18 + $0x18] sm:$0xff] %v3205
  // Predicated region
  $region74: #{up_forward.1} parent=0 // pred_check
    _
  $region75: #{up_forward.1} parent=0 // pred_check_branch
    %3209 = sbr.rel (0) target = $region77
  $region76: #{up_forward.1} parent=0 // pred_region
    _
  $region77: #{up_forward.1} parent=0 // pred_fallthru
    _
  // Predicated region
  $region78: #{up_forward.1} parent=0 // pred_check
    _
  $region79: #{up_forward.1} parent=0 // pred_check_branch
    %3211 = sbr.rel (0) target = $region81
  $region80: #{up_forward.1} parent=0 // pred_region
    _
  $region81: #{up_forward.1} parent=0 // pred_fallthru
    _

</llo_original>
